<compile_context>
chip_gen: v6e
topology: v6e:2x2x1
jax: 0.10.0
libtpu: 0.0.40
codegen_flags: <defaults>
</compile_context>

<pallas_src>
import math
from functools import partial

import jax
import jax.numpy as jnp
from jax import lax
from jax.experimental import pallas as pl
from jax.experimental.pallas import tpu as pltpu


def _mha_kernel(x_ref, wqkv_ref, bqkv_ref, wo_ref, bo_ref, o_ref, attn_ref, *,
                num_heads, head_dim):
    # x_ref:    (G, S, E)   G independent (batch*variate) slabs
    # wqkv_ref: (E, 3E)     permuted + Q-scaled wQKV, transposed for x @ W
    # bqkv_ref: (1, 3E)     permuted + Q-scaled bias (f32)
    # wo_ref:   (E, E)      wO transposed for x @ W
    # bo_ref:   (1, E)
    # o_ref:    (G, S, E)
    # attn_ref: (G*S, E)    VMEM scratch: head-major attention output
    G, S, E = x_ref.shape
    D = head_dim
    mm = wqkv_ref.dtype                      # MXU operand dtype (f32 or bf16)

    # --- fused QKV projection over all G slabs at once (M = G*S rows) -----
    x2 = x_ref[...].reshape(G * S, E).astype(mm)
    qkv = jnp.dot(x2, wqkv_ref[...], preferred_element_type=jnp.float32)
    qkv = qkv + bqkv_ref[...]                # (G*S, 3E) f32, head-major cols
    # (1/sqrt(head_dim) is already folded into the Q weights/bias.)

    # Causal mask built ONCE as a 2-D additive bias, broadcast over G & heads.
    row = lax.broadcasted_iota(jnp.int32, (1, S, S), 1)
    col = lax.broadcasted_iota(jnp.int32, (1, S, S), 2)
    bias = jnp.where(col <= row, 0.0, -1e30).astype(jnp.float32)   # (1, S, S)

    # --- per-head attention, batched over the G slabs. Each head's output
    #     is stored into its head-major column range of the VMEM scratch so
    #     the output projection below is a single full-depth K=E matmul. ----
    # TODO(synk): for long sequence lengths this still materializes the full
    # (G, S, S) score matrix per head; flash-style KV tiling with online
    # softmax would remove the S^2 VMEM footprint.
    for h in range(num_heads):               # static unroll, num_heads small
        q = qkv[:, h * D:(h + 1) * D].reshape(G, S, D).astype(mm)
        k = qkv[:, E + h * D:E + (h + 1) * D].reshape(G, S, D).astype(mm)
        v = qkv[:, 2 * E + h * D:2 * E + (h + 1) * D].reshape(G, S, D).astype(mm)

        s = jnp.einsum('gsd,gtd->gst', q, k,
                       preferred_element_type=jnp.float32) + bias   # (G, S, S)
        m = jnp.max(s, axis=-1, keepdims=True)
        p = jnp.exp(s - m)
        denom = jnp.sum(p, axis=-1, keepdims=True)

        o_h = jnp.einsum('gst,gtd->gsd', p.astype(mm), v,
                         preferred_element_type=jnp.float32)        # (G, S, D)
        # Deferred softmax normalization: scale the (G,S,D) PV result instead
        # of the (G,S,S) probabilities (~S/D fewer VALU multiplies per head).
        o_h = o_h * pl.reciprocal(denom, approx=True)               # EUP slot

        attn_ref[:, h * D:(h + 1) * D] = (
            o_h.reshape(G * S, D).astype(attn_ref.dtype))

    # --- single full-depth (K = E) output projection ----------------------
    out = jnp.dot(attn_ref[...], wo_ref[...],
                  preferred_element_type=jnp.float32) + bo_ref[...]
    o_ref[...] = out.reshape(G, S, E).astype(o_ref.dtype)


def prepare_attention_params(wqkv, bqkv, wo, bo, *, num_heads,
                             matmul_dtype=jnp.bfloat16):
    """One-time (parameter-load-time) weight preprocessing.

    Kept out of the per-forward hot path: permutes wQKV so the heads are
    laid out head-major/contiguous in the 3E axis, folds the 1/sqrt(head_dim)
    attention scale into the Q projection, transposes for x @ W, and casts
    matmul operands to `matmul_dtype` (bf16 by default for MXU throughput).
    """
    three_e, E = wqkv.shape
    D = E // num_heads
    # PyTorch get_qkv splits the 3E axis as (qkv, head_dim, n_heads):
    #   original output column o = qkv*E + d*n_heads + h
    # Permute rows so new column o' = qkv*E + h*head_dim + d (head-major).
    idx = jnp.arange(3 * E)
    qkv_id = idx // E
    rem = idx % E
    h_id = rem // D
    d_id = rem % D
    perm = qkv_id * E + d_id * num_heads + h_id
    wqkv_p = wqkv[perm, :]                   # (3E, E)
    bqkv_p = bqkv[perm]                      # (3E,)

    # Fold the attention scale into the Q columns.
    scale = 1.0 / math.sqrt(D)
    col_scale = jnp.where(idx < E, scale, 1.0).astype(wqkv.dtype)
    wqkv_p = wqkv_p * col_scale[:, None]
    bqkv_p = bqkv_p * col_scale

    return {
        'wqkv_t': wqkv_p.T.astype(matmul_dtype),           # (E, 3E)
        'bqkv': bqkv_p.reshape(1, 3 * E).astype(jnp.float32),
        'wo_t': wo.T.astype(matmul_dtype),                 # (E, E)
        'bo': bo.reshape(1, E).astype(jnp.float32),
    }


def _vmem_capacity_bytes():
    """Generation-aware VMEM capacity (128 MiB on v5e/v6e, 64 MiB on v7x)."""
    try:
        info = pltpu.get_tpu_info()
        cap = int(getattr(info, 'vmem_capacity_bytes', 0) or 0)
        if cap > 0:
            return cap
    except Exception:
        pass
    return 64 << 20      # conservative fallback (v7x per-TC VMEM)


def _choose_slab_group(BV, S, per_slab_bytes, budget_bytes, target_rows=512):
    """Pick how many (batch*variate) slabs to process per grid step."""
    G = max(1, min(BV, max(1, target_rows // S)))
    # Keep at least 2 grid steps so both v7x TensorCores get work.
    while G > 1 and -(-BV // G) < 2:
        G -= 1
    # Shrink until the G-dependent VMEM footprint fits the budget.
    while G > 1 and per_slab_bytes * G > budget_bytes:
        G -= 1
    # Prefer a nearby G that divides BV (avoids padded/wasted slabs).
    for g in range(G, max(0, G // 2), -1):
        if BV % g == 0:
            return g
    return G


def multihead_attention_time(inputs, params, *, num_heads, slab_group=None):
    """Forward pass of BaseMultiheadAttention (TIME axis, causal, no rotary/cache)."""
    B, V, S, E = inputs.shape
    head_dim = E // num_heads
    BV = B * V
    x = inputs.reshape(BV, S, E)

    wqkv_t, bqkv2 = params['wqkv_t'], params['bqkv']
    wo_t, bo2 = params['wo_t'], params['bo']
    mm_dtype = wqkv_t.dtype
    w_bytes = jnp.dtype(mm_dtype).itemsize
    in_bytes = jnp.dtype(inputs.dtype).itemsize

    vmem_cap = _vmem_capacity_bytes()
    weight_bytes = (E * 3 * E + E * E) * w_bytes + (4 * E) * 4
    # Per-slab VMEM footprint: x/out blocks (double-buffered), qkv (f32),
    # attention scratch, q/k/v slices, and the live score/prob tiles (~4*S^2).
    per_slab = (4 * S * E * in_bytes + 3 * S * E * 4 + S * E * w_bytes
                + 3 * S * head_dim * w_bytes + 4 * S * S * 4)

    if slab_group is None:
        g_budget = int(0.6 * vmem_cap) - weight_bytes
        G = _choose_slab_group(BV, S, per_slab, max(per_slab, g_budget))
    else:
        G = max(1, min(slab_group, BV))

    BV_pad = -(-BV // G) * G
    if BV_pad != BV:
        x = jnp.concatenate(
            [x, jnp.zeros((BV_pad - BV, S, E), x.dtype)], axis=0)
    steps = BV_pad // G

    est = weight_bytes + per_slab * G + S * S * 4
    vmem_limit = int(min(int(0.85 * vmem_cap), max(32 << 20, 3 * est)))

    H = num_heads
    flops_step = 2 * G * S * E * 3 * E + H * 4 * G * S * S * head_dim \
        + 2 * G * S * E * E
    cost = pl.CostEstimate(
        flops=int(steps * flops_step),
        transcendentals=int(steps * H * G * S * S),
        bytes_accessed=int(2 * BV_pad * S * E * in_bytes + weight_bytes))

    kernel = partial(_mha_kernel, num_heads=num_heads, head_dim=head_dim)
    out_shape = jax.ShapeDtypeStruct((BV_pad, S, E), inputs.dtype)

    def build(single_buffer_weights):
        def const_spec(shape):
            imap = lambda *_: (0,) * len(shape)
            if single_buffer_weights:
                # Grid-invariant operand: single-buffer to halve its VMEM use.
                return pl.BlockSpec(shape, imap, pipeline_mode=pl.Buffered(1))
            return pl.BlockSpec(shape, imap)

        return pl.pallas_call(
            kernel,
            out_shape=out_shape,
            grid_spec=pltpu.PrefetchScalarGridSpec(
                num_scalar_prefetch=0,
                grid=(steps,),
                in_specs=[
                    pl.BlockSpec((G, S, E), lambda i: (i, 0, 0)),
                    const_spec((E, 3 * E)),
                    const_spec((1, 3 * E)),
                    const_spec((E, E)),
                    const_spec((1, E)),
                ],
                out_specs=pl.BlockSpec((G, S, E), lambda i: (i, 0, 0)),
                scratch_shapes=[pltpu.VMEM((G * S, E), mm_dtype)],
            ),
            compiler_params=pltpu.CompilerParams(
                # slab groups are fully independent -> shard across TCs (v7x)
                dimension_semantics=("parallel",),
                vmem_limit_bytes=vmem_limit),
            cost_estimate=cost,
        )

    try:
        out = build(True)(x, wqkv_t, bqkv2, wo_t, bo2)
    except Exception:
        # This jax build rejected pipeline_mode=pl.Buffered(1); fall back to
        # default double-buffering of the grid-invariant weights.
        out = build(False)(x, wqkv_t, bqkv2, wo_t, bo2)

    return out[:BV].reshape(B, V, S, E)


def _reference(inputs, wqkv, bqkv, wo, bo, *, num_heads):
    """Pure-JAX mirror of the PyTorch forward (TIME, non-mem-efficient, causal)."""
    B, V, S, E = inputs.shape
    D = E // num_heads
    x = inputs.reshape(B * V, S, E)
    qkv = x @ wqkv.T + bqkv                                   # (BV, S, 3E)
    qkv = qkv.reshape(B * V, S, 3, D, num_heads)              # (qkv head_dim n_heads)
    qkv = jnp.transpose(qkv, (2, 0, 4, 1, 3))                 # (3, BV, H, S, D)
    q, k, v = qkv[0], qkv[1], qkv[2]
    scale = 1.0 / math.sqrt(D)
    s = jnp.einsum('bhqd,bhkd->bhqk', q, k) * scale
    mask = jnp.tril(jnp.ones((S, S), dtype=bool))
    s = jnp.where(mask, s, -jnp.inf)
    p = jax.nn.softmax(s, axis=-1)
    o = jnp.einsum('bhqk,bhkd->bhqd', p, v)                   # (BV, H, S, D)
    o = jnp.transpose(o, (0, 2, 1, 3)).reshape(B, V, S, E)    # (n_heads head_dim)
    return o @ wo.T + bo


if __name__ == "__main__":
    batch, variate, seq_len = 2, 3, 8
    embed_dim, num_heads = 32, 4

    key = jax.random.PRNGKey(0)
    k_x, k_wqkv, k_bqkv, k_wo, k_bo = jax.random.split(key, 5)

    inputs = jax.random.normal(k_x, (batch, variate, seq_len, embed_dim),
                               dtype=jnp.float32)
    # Deterministic synthetic parameters (PyTorch Linear shapes: W [out, in], b [out]).
    wqkv = jax.random.normal(k_wqkv, (3 * embed_dim, embed_dim),
                             dtype=jnp.float32) * (1.0 / math.sqrt(embed_dim))
    bqkv = jax.random.normal(k_bqkv, (3 * embed_dim,), dtype=jnp.float32) * 0.02
    wo = jax.random.normal(k_wo, (embed_dim, embed_dim),
                           dtype=jnp.float32) * (1.0 / math.sqrt(embed_dim))
    bo = jax.random.normal(k_bo, (embed_dim,), dtype=jnp.float32) * 0.02

    ref = _reference(inputs, wqkv, bqkv, wo, bo, num_heads=num_heads)

    # f32 MXU operands: tight numeric check (approx reciprocal -> ~1e-3 slack).
    params_f32 = prepare_attention_params(wqkv, bqkv, wo, bo,
                                          num_heads=num_heads,
                                          matmul_dtype=jnp.float32)
    out_f32 = multihead_attention_time(inputs, params_f32, num_heads=num_heads)
    out_f32 = jax.block_until_ready(out_f32)
    assert out_f32.shape == (batch, variate, seq_len, embed_dim)
    assert jnp.allclose(out_f32, ref, atol=5e-3, rtol=5e-3), \
        "f32 kernel mismatch vs reference"

    # bf16 MXU operands (default; f32 accumulate + f32 softmax): looser check.
    params_bf16 = prepare_attention_params(wqkv, bqkv, wo, bo,
                                           num_heads=num_heads)
    out_bf16 = multihead_attention_time(inputs, params_bf16, num_heads=num_heads)
    out_bf16 = jax.block_until_ready(out_bf16)
    assert out_bf16.shape == (batch, variate, seq_len, embed_dim)
    assert jnp.allclose(out_bf16, ref, atol=1e-1, rtol=1e-1), \
        "bf16 kernel mismatch vs reference"

    print("KERNEL_OK")
</pallas_src>

<mosaic_0001>
module attributes {stable_mosaic.version = 11 : i64} {
  func.func @_mha_kernel(%arg0: i32, %arg1: memref<3x8x32xf32, #tpu.memory_space<vmem>>, %arg2: memref<32x96xf32, #tpu.memory_space<vmem>>, %arg3: memref<1x96xf32, #tpu.memory_space<vmem>>, %arg4: memref<32x32xf32, #tpu.memory_space<vmem>>, %arg5: memref<1x32xf32, #tpu.memory_space<vmem>>, %arg6: memref<3x8x32xf32, #tpu.memory_space<vmem>>, %arg7: memref<24x32xf32, #tpu.memory_space<vmem>>) attributes {dimension_semantics = [#tpu.dimension_semantics<parallel>], iteration_bounds = array<i64: 2>, scalar_prefetch = 0 : i64, scratch_operands = 1 : i64, tpu.core_type = #tpu.core_type<tc>, window_params = [{transform_indices = @transform_0, window_bounds = array<i64: 3, 8, 32>}, {pipeline_mode = #tpu.pipeline_mode<synchronous>, transform_indices = @transform_1, window_bounds = array<i64: 32, 96>}, {pipeline_mode = #tpu.pipeline_mode<synchronous>, transform_indices = @transform_2, window_bounds = array<i64: 1, 96>}, {pipeline_mode = #tpu.pipeline_mode<synchronous>, transform_indices = @transform_3, window_bounds = array<i64: 32, 32>}, {pipeline_mode = #tpu.pipeline_mode<synchronous>, transform_indices = @transform_4, window_bounds = array<i64: 1, 32>}, {transform_indices = @transform_5, window_bounds = array<i64: 3, 8, 32>}]} {
    %c0 = arith.constant 0 : index
    %c0_0 = arith.constant 0 : index
    %c0_1 = arith.constant 0 : index
    %0 = vector.load %arg1[%c0, %c0_0, %c0_1] : memref<3x8x32xf32, #tpu.memory_space<vmem>>, vector<3x8x32xf32>
    %1 = vector.shape_cast %0 : vector<3x8x32xf32> to vector<24x32xf32>
    %c0_2 = arith.constant 0 : index
    %c0_3 = arith.constant 0 : index
    %2 = vector.load %arg2[%c0_2, %c0_3] : memref<32x96xf32, #tpu.memory_space<vmem>>, vector<32x96xf32>
    %cst = arith.constant dense<0.000000e+00> : vector<24x96xf32>
    %3 = tpu.matmul %1, %2, %cst {dimension_numbers = #tpu.dot_dimension_numbers<[1], [0], [0], [1], [0, 0, 1, 1], [], []>} : vector<24x32xf32>, vector<32x96xf32>, vector<24x96xf32> -> vector<24x96xf32>
    %c0_4 = arith.constant 0 : index
    %c0_5 = arith.constant 0 : index
    %4 = vector.load %arg3[%c0_4, %c0_5] : memref<1x96xf32, #tpu.memory_space<vmem>>, vector<1x96xf32>
    %5 = vector.broadcast %4 : vector<1x96xf32> to vector<24x96xf32>
    %6 = arith.addf %3, %5 : vector<24x96xf32>
    %7 = tpu.iota {dimensions = array<i32: 1>} : vector<1x8x8xi32>
    %8 = tpu.iota {dimensions = array<i32: 2>} : vector<1x8x8xi32>
    %9 = arith.cmpi sle, %8, %7 : vector<1x8x8xi32>
    %cst_6 = arith.constant 0.000000e+00 : f32
    %cst_7 = arith.constant -1.000000e+30 : f32
    %10 = vector.broadcast %cst_6 : f32 to vector<1x8x8xf32>
    %11 = vector.broadcast %cst_7 : f32 to vector<1x8x8xf32>
    %12 = arith.select %9, %10, %11 : vector<1x8x8xi1>, vector<1x8x8xf32>
    %13 = vector.extract_strided_slice %6 {offsets = [0, 0], sizes = [24, 8], strides = [1, 1]} : vector<24x96xf32> to vector<24x8xf32>
    %14 = vector.shape_cast %13 : vector<24x8xf32> to vector<3x8x8xf32>
    %15 = vector.extract_strided_slice %6 {offsets = [0, 32], sizes = [24, 8], strides = [1, 1]} : vector<24x96xf32> to vector<24x8xf32>
    %16 = vector.shape_cast %15 : vector<24x8xf32> to vector<3x8x8xf32>
    %17 = vector.extract_strided_slice %6 {offsets = [0, 64], sizes = [24, 8], strides = [1, 1]} : vector<24x96xf32> to vector<24x8xf32>
    %18 = vector.shape_cast %17 : vector<24x8xf32> to vector<3x8x8xf32>
    "tpu.trace_start"() <{level = 10 : i32, message = "gsd,gtd->gst"}> : () -> ()
    %cst_8 = arith.constant dense<0.000000e+00> : vector<3x8x8xf32>
    %19 = tpu.matmul %14, %16, %cst_8 {dimension_numbers = #tpu.dot_dimension_numbers<[2], [2], [1], [1], [0, 0, 0, 1, 1, 1], [0], [0]>} : vector<3x8x8xf32>, vector<3x8x8xf32>, vector<3x8x8xf32> -> vector<3x8x8xf32>
    "tpu.trace_stop"() : () -> ()
    %20 = vector.broadcast %12 : vector<1x8x8xf32> to vector<3x8x8xf32>
    %21 = arith.addf %19, %20 : vector<3x8x8xf32>
    %cst_9 = arith.constant dense<0xFF800000> : vector<3x8xf32>
    %22 = vector.multi_reduction <maximumf>, %21, %cst_9 [2] : vector<3x8x8xf32> to vector<3x8xf32>
    %23 = vector.shape_cast %22 : vector<3x8xf32> to vector<3x8x1xf32>
    %24 = vector.broadcast %23 : vector<3x8x1xf32> to vector<3x8x8xf32>
    %25 = arith.subf %21, %24 : vector<3x8x8xf32>
    %26 = math.exp %25 : vector<3x8x8xf32>
    %cst_10 = arith.constant dense<0.000000e+00> : vector<3x8xf32>
    %27 = vector.multi_reduction <add>, %26, %cst_10 [2] : vector<3x8x8xf32> to vector<3x8xf32>
    %28 = vector.shape_cast %27 : vector<3x8xf32> to vector<3x8x1xf32>
    "tpu.trace_start"() <{level = 10 : i32, message = "gst,gtd->gsd"}> : () -> ()
    %cst_11 = arith.constant dense<0.000000e+00> : vector<3x8x8xf32>
    %29 = tpu.matmul %26, %18, %cst_11 {dimension_numbers = #tpu.dot_dimension_numbers<[2], [1], [1], [2], [0, 0, 0, 1, 1, 2], [0], [0]>} : vector<3x8x8xf32>, vector<3x8x8xf32>, vector<3x8x8xf32> -> vector<3x8x8xf32>
    "tpu.trace_stop"() : () -> ()
    %30 = tpu.reciprocal %28 {approx = true} : vector<3x8x1xf32> -> vector<3x8x1xf32>
    %31 = vector.broadcast %30 : vector<3x8x1xf32> to vector<3x8x8xf32>
    %32 = arith.mulf %29, %31 : vector<3x8x8xf32>
    %33 = vector.shape_cast %32 : vector<3x8x8xf32> to vector<24x8xf32>
    %c0_12 = arith.constant 0 : index
    %c0_13 = arith.constant 0 : index
    %34 = vector.load %arg7[%c0_12, %c0_13] : memref<24x32xf32, #tpu.memory_space<vmem>>, vector<24x8xf32>
    tpu.vector_store %arg7[%c0_12, %c0_13], %33 {strides = array<i32>} : memref<24x32xf32, #tpu.memory_space<vmem>>, vector<24x8xf32>,
    %35 = vector.extract_strided_slice %6 {offsets = [0, 8], sizes = [24, 8], strides = [1, 1]} : vector<24x96xf32> to vector<24x8xf32>
    %36 = vector.shape_cast %35 : vector<24x8xf32> to vector<3x8x8xf32>
    %37 = vector.extract_strided_slice %6 {offsets = [0, 40], sizes = [24, 8], strides = [1, 1]} : vector<24x96xf32> to vector<24x8xf32>
    %38 = vector.shape_cast %37 : vector<24x8xf32> to vector<3x8x8xf32>
    %39 = vector.extract_strided_slice %6 {offsets = [0, 72], sizes = [24, 8], strides = [1, 1]} : vector<24x96xf32> to vector<24x8xf32>
    %40 = vector.shape_cast %39 : vector<24x8xf32> to vector<3x8x8xf32>
    "tpu.trace_start"() <{level = 10 : i32, message = "gsd,gtd->gst"}> : () -> ()
    %cst_14 = arith.constant dense<0.000000e+00> : vector<3x8x8xf32>
    %41 = tpu.matmul %36, %38, %cst_14 {dimension_numbers = #tpu.dot_dimension_numbers<[2], [2], [1], [1], [0, 0, 0, 1, 1, 1], [0], [0]>} : vector<3x8x8xf32>, vector<3x8x8xf32>, vector<3x8x8xf32> -> vector<3x8x8xf32>
    "tpu.trace_stop"() : () -> ()
    %42 = vector.broadcast %12 : vector<1x8x8xf32> to vector<3x8x8xf32>
    %43 = arith.addf %41, %42 : vector<3x8x8xf32>
    %cst_15 = arith.constant dense<0xFF800000> : vector<3x8xf32>
    %44 = vector.multi_reduction <maximumf>, %43, %cst_15 [2] : vector<3x8x8xf32> to vector<3x8xf32>
    %45 = vector.shape_cast %44 : vector<3x8xf32> to vector<3x8x1xf32>
    %46 = vector.broadcast %45 : vector<3x8x1xf32> to vector<3x8x8xf32>
    %47 = arith.subf %43, %46 : vector<3x8x8xf32>
    %48 = math.exp %47 : vector<3x8x8xf32>
    %cst_16 = arith.constant dense<0.000000e+00> : vector<3x8xf32>
    %49 = vector.multi_reduction <add>, %48, %cst_16 [2] : vector<3x8x8xf32> to vector<3x8xf32>
    %50 = vector.shape_cast %49 : vector<3x8xf32> to vector<3x8x1xf32>
    "tpu.trace_start"() <{level = 10 : i32, message = "gst,gtd->gsd"}> : () -> ()
    %cst_17 = arith.constant dense<0.000000e+00> : vector<3x8x8xf32>
    %51 = tpu.matmul %48, %40, %cst_17 {dimension_numbers = #tpu.dot_dimension_numbers<[2], [1], [1], [2], [0, 0, 0, 1, 1, 2], [0], [0]>} : vector<3x8x8xf32>, vector<3x8x8xf32>, vector<3x8x8xf32> -> vector<3x8x8xf32>
    "tpu.trace_stop"() : () -> ()
    %52 = tpu.reciprocal %50 {approx = true} : vector<3x8x1xf32> -> vector<3x8x1xf32>
    %53 = vector.broadcast %52 : vector<3x8x1xf32> to vector<3x8x8xf32>
    %54 = arith.mulf %51, %53 : vector<3x8x8xf32>
    %55 = vector.shape_cast %54 : vector<3x8x8xf32> to vector<24x8xf32>
    %c0_18 = arith.constant 0 : index
    %c8 = arith.constant 8 : index
    %56 = vector.load %arg7[%c0_18, %c8] : memref<24x32xf32, #tpu.memory_space<vmem>>, vector<24x8xf32>
    tpu.vector_store %arg7[%c0_18, %c8], %55 {strides = array<i32>} : memref<24x32xf32, #tpu.memory_space<vmem>>, vector<24x8xf32>,
    %57 = vector.extract_strided_slice %6 {offsets = [0, 16], sizes = [24, 8], strides = [1, 1]} : vector<24x96xf32> to vector<24x8xf32>
    %58 = vector.shape_cast %57 : vector<24x8xf32> to vector<3x8x8xf32>
    %59 = vector.extract_strided_slice %6 {offsets = [0, 48], sizes = [24, 8], strides = [1, 1]} : vector<24x96xf32> to vector<24x8xf32>
    %60 = vector.shape_cast %59 : vector<24x8xf32> to vector<3x8x8xf32>
    %61 = vector.extract_strided_slice %6 {offsets = [0, 80], sizes = [24, 8], strides = [1, 1]} : vector<24x96xf32> to vector<24x8xf32>
    %62 = vector.shape_cast %61 : vector<24x8xf32> to vector<3x8x8xf32>
    "tpu.trace_start"() <{level = 10 : i32, message = "gsd,gtd->gst"}> : () -> ()
    %cst_19 = arith.constant dense<0.000000e+00> : vector<3x8x8xf32>
    %63 = tpu.matmul %58, %60, %cst_19 {dimension_numbers = #tpu.dot_dimension_numbers<[2], [2], [1], [1], [0, 0, 0, 1, 1, 1], [0], [0]>} : vector<3x8x8xf32>, vector<3x8x8xf32>, vector<3x8x8xf32> -> vector<3x8x8xf32>
    "tpu.trace_stop"() : () -> ()
    %64 = vector.broadcast %12 : vector<1x8x8xf32> to vector<3x8x8xf32>
    %65 = arith.addf %63, %64 : vector<3x8x8xf32>
    %cst_20 = arith.constant dense<0xFF800000> : vector<3x8xf32>
    %66 = vector.multi_reduction <maximumf>, %65, %cst_20 [2] : vector<3x8x8xf32> to vector<3x8xf32>
    %67 = vector.shape_cast %66 : vector<3x8xf32> to vector<3x8x1xf32>
    %68 = vector.broadcast %67 : vector<3x8x1xf32> to vector<3x8x8xf32>
    %69 = arith.subf %65, %68 : vector<3x8x8xf32>
    %70 = math.exp %69 : vector<3x8x8xf32>
    %cst_21 = arith.constant dense<0.000000e+00> : vector<3x8xf32>
    %71 = vector.multi_reduction <add>, %70, %cst_21 [2] : vector<3x8x8xf32> to vector<3x8xf32>
    %72 = vector.shape_cast %71 : vector<3x8xf32> to vector<3x8x1xf32>
    "tpu.trace_start"() <{level = 10 : i32, message = "gst,gtd->gsd"}> : () -> ()
    %cst_22 = arith.constant dense<0.000000e+00> : vector<3x8x8xf32>
    %73 = tpu.matmul %70, %62, %cst_22 {dimension_numbers = #tpu.dot_dimension_numbers<[2], [1], [1], [2], [0, 0, 0, 1, 1, 2], [0], [0]>} : vector<3x8x8xf32>, vector<3x8x8xf32>, vector<3x8x8xf32> -> vector<3x8x8xf32>
    "tpu.trace_stop"() : () -> ()
    %74 = tpu.reciprocal %72 {approx = true} : vector<3x8x1xf32> -> vector<3x8x1xf32>
    %75 = vector.broadcast %74 : vector<3x8x1xf32> to vector<3x8x8xf32>
    %76 = arith.mulf %73, %75 : vector<3x8x8xf32>
    %77 = vector.shape_cast %76 : vector<3x8x8xf32> to vector<24x8xf32>
    %c0_23 = arith.constant 0 : index
    %c16 = arith.constant 16 : index
    %78 = vector.load %arg7[%c0_23, %c16] : memref<24x32xf32, #tpu.memory_space<vmem>>, vector<24x8xf32>
    tpu.vector_store %arg7[%c0_23, %c16], %77 {strides = array<i32>} : memref<24x32xf32, #tpu.memory_space<vmem>>, vector<24x8xf32>,
    %79 = vector.extract_strided_slice %6 {offsets = [0, 24], sizes = [24, 8], strides = [1, 1]} : vector<24x96xf32> to vector<24x8xf32>
    %80 = vector.shape_cast %79 : vector<24x8xf32> to vector<3x8x8xf32>
    %81 = vector.extract_strided_slice %6 {offsets = [0, 56], sizes = [24, 8], strides = [1, 1]} : vector<24x96xf32> to vector<24x8xf32>
    %82 = vector.shape_cast %81 : vector<24x8xf32> to vector<3x8x8xf32>
    %83 = vector.extract_strided_slice %6 {offsets = [0, 88], sizes = [24, 8], strides = [1, 1]} : vector<24x96xf32> to vector<24x8xf32>
    %84 = vector.shape_cast %83 : vector<24x8xf32> to vector<3x8x8xf32>
    "tpu.trace_start"() <{level = 10 : i32, message = "gsd,gtd->gst"}> : () -> ()
    %cst_24 = arith.constant dense<0.000000e+00> : vector<3x8x8xf32>
    %85 = tpu.matmul %80, %82, %cst_24 {dimension_numbers = #tpu.dot_dimension_numbers<[2], [2], [1], [1], [0, 0, 0, 1, 1, 1], [0], [0]>} : vector<3x8x8xf32>, vector<3x8x8xf32>, vector<3x8x8xf32> -> vector<3x8x8xf32>
    "tpu.trace_stop"() : () -> ()
    %86 = vector.broadcast %12 : vector<1x8x8xf32> to vector<3x8x8xf32>
    %87 = arith.addf %85, %86 : vector<3x8x8xf32>
    %cst_25 = arith.constant dense<0xFF800000> : vector<3x8xf32>
    %88 = vector.multi_reduction <maximumf>, %87, %cst_25 [2] : vector<3x8x8xf32> to vector<3x8xf32>
    %89 = vector.shape_cast %88 : vector<3x8xf32> to vector<3x8x1xf32>
    %90 = vector.broadcast %89 : vector<3x8x1xf32> to vector<3x8x8xf32>
    %91 = arith.subf %87, %90 : vector<3x8x8xf32>
    %92 = math.exp %91 : vector<3x8x8xf32>
    %cst_26 = arith.constant dense<0.000000e+00> : vector<3x8xf32>
    %93 = vector.multi_reduction <add>, %92, %cst_26 [2] : vector<3x8x8xf32> to vector<3x8xf32>
    %94 = vector.shape_cast %93 : vector<3x8xf32> to vector<3x8x1xf32>
    "tpu.trace_start"() <{level = 10 : i32, message = "gst,gtd->gsd"}> : () -> ()
    %cst_27 = arith.constant dense<0.000000e+00> : vector<3x8x8xf32>
    %95 = tpu.matmul %92, %84, %cst_27 {dimension_numbers = #tpu.dot_dimension_numbers<[2], [1], [1], [2], [0, 0, 0, 1, 1, 2], [0], [0]>} : vector<3x8x8xf32>, vector<3x8x8xf32>, vector<3x8x8xf32> -> vector<3x8x8xf32>
    "tpu.trace_stop"() : () -> ()
    %96 = tpu.reciprocal %94 {approx = true} : vector<3x8x1xf32> -> vector<3x8x1xf32>
    %97 = vector.broadcast %96 : vector<3x8x1xf32> to vector<3x8x8xf32>
    %98 = arith.mulf %95, %97 : vector<3x8x8xf32>
    %99 = vector.shape_cast %98 : vector<3x8x8xf32> to vector<24x8xf32>
    %c0_28 = arith.constant 0 : index
    %c24 = arith.constant 24 : index
    %100 = vector.load %arg7[%c0_28, %c24] : memref<24x32xf32, #tpu.memory_space<vmem>>, vector<24x8xf32>
    tpu.vector_store %arg7[%c0_28, %c24], %99 {strides = array<i32>} : memref<24x32xf32, #tpu.memory_space<vmem>>, vector<24x8xf32>,
    %c0_29 = arith.constant 0 : index
    %c0_30 = arith.constant 0 : index
    %101 = vector.load %arg7[%c0_29, %c0_30] : memref<24x32xf32, #tpu.memory_space<vmem>>, vector<24x32xf32>
    %c0_31 = arith.constant 0 : index
    %c0_32 = arith.constant 0 : index
    %102 = vector.load %arg4[%c0_31, %c0_32] : memref<32x32xf32, #tpu.memory_space<vmem>>, vector<32x32xf32>
    %cst_33 = arith.constant dense<0.000000e+00> : vector<24x32xf32>
    %103 = tpu.matmul %101, %102, %cst_33 {dimension_numbers = #tpu.dot_dimension_numbers<[1], [0], [0], [1], [0, 0, 1, 1], [], []>} : vector<24x32xf32>, vector<32x32xf32>, vector<24x32xf32> -> vector<24x32xf32>
    %c0_34 = arith.constant 0 : index
    %c0_35 = arith.constant 0 : index
    %104 = vector.load %arg5[%c0_34, %c0_35] : memref<1x32xf32, #tpu.memory_space<vmem>>, vector<1x32xf32>
    %105 = vector.broadcast %104 : vector<1x32xf32> to vector<24x32xf32>
    %106 = arith.addf %103, %105 : vector<24x32xf32>
    %107 = vector.shape_cast %106 : vector<24x32xf32> to vector<3x8x32xf32>
    %c0_36 = arith.constant 0 : index
    %c0_37 = arith.constant 0 : index
    %c0_38 = arith.constant 0 : index
    %108 = vector.load %arg6[%c0_36, %c0_37, %c0_38] : memref<3x8x32xf32, #tpu.memory_space<vmem>>, vector<3x8x32xf32>
    tpu.vector_store %arg6[%c0_36, %c0_37, %c0_38], %107 {strides = array<i32>} : memref<3x8x32xf32, #tpu.memory_space<vmem>>, vector<3x8x32xf32>,
    return
  }
  func.func @transform_0(%arg0: i32) -> (i32, i32, i32) {
    %c0_i32 = arith.constant 0 : i32
    %c0_i32_0 = arith.constant 0 : i32
    %c0_i32_1 = arith.constant 0 : i32
    return %arg0, %c0_i32, %c0_i32_0 : i32, i32, i32
  }
  func.func @transform_1(%arg0: i32) -> (i32, i32) {
    %c0_i32 = arith.constant 0 : i32
    %c0_i32_0 = arith.constant 0 : i32
    %c0_i32_1 = arith.constant 0 : i32
    return %c0_i32, %c0_i32_0 : i32, i32
  }
  func.func @transform_2(%arg0: i32) -> (i32, i32) {
    %c0_i32 = arith.constant 0 : i32
    %c0_i32_0 = arith.constant 0 : i32
    %c0_i32_1 = arith.constant 0 : i32
    return %c0_i32, %c0_i32_0 : i32, i32
  }
  func.func @transform_3(%arg0: i32) -> (i32, i32) {
    %c0_i32 = arith.constant 0 : i32
    %c0_i32_0 = arith.constant 0 : i32
    %c0_i32_1 = arith.constant 0 : i32
    return %c0_i32, %c0_i32_0 : i32, i32
  }
  func.func @transform_4(%arg0: i32) -> (i32, i32) {
    %c0_i32 = arith.constant 0 : i32
    %c0_i32_0 = arith.constant 0 : i32
    %c0_i32_1 = arith.constant 0 : i32
    return %c0_i32, %c0_i32_0 : i32, i32
  }
  func.func @transform_5(%arg0: i32) -> (i32, i32, i32) {
    %c0_i32 = arith.constant 0 : i32
    %c0_i32_0 = arith.constant 0 : i32
    %c0_i32_1 = arith.constant 0 : i32
    return %arg0, %c0_i32, %c0_i32_0 : i32, i32, i32
  }
}

module attributes {stable_mosaic.version = 11 : i64} {
  func.func @_mha_kernel(%arg0: i32, %arg1: memref<3x8x32xf32, #tpu.memory_space<vmem>>, %arg2: memref<32x96xf32, #tpu.memory_space<vmem>>, %arg3: memref<1x96xf32, #tpu.memory_space<vmem>>, %arg4: memref<32x32xf32, #tpu.memory_space<vmem>>, %arg5: memref<1x32xf32, #tpu.memory_space<vmem>>, %arg6: memref<3x8x32xf32, #tpu.memory_space<vmem>>, %arg7: memref<24x32xf32, #tpu.memory_space<vmem>>) attributes {dimension_semantics = [#tpu.dimension_semantics<parallel>], iteration_bounds = array<i64: 2>, scalar_prefetch = 0 : i64, scratch_operands = 1 : i64, tpu.core_type = #tpu.core_type<tc>, window_params = [{transform_indices = @transform_0, window_bounds = array<i64: 3, 8, 32>}, {pipeline_mode = #tpu.pipeline_mode<synchronous>, transform_indices = @transform_1, window_bounds = array<i64: 32, 96>}, {pipeline_mode = #tpu.pipeline_mode<synchronous>, transform_indices = @transform_2, window_bounds = array<i64: 1, 96>}, {pipeline_mode = #tpu.pipeline_mode<synchronous>, transform_indices = @transform_3, window_bounds = array<i64: 32, 32>}, {pipeline_mode = #tpu.pipeline_mode<synchronous>, transform_indices = @transform_4, window_bounds = array<i64: 1, 32>}, {transform_indices = @transform_5, window_bounds = array<i64: 3, 8, 32>}]} {
    %c0 = arith.constant 0 : index
    %c0_0 = arith.constant 0 : index
    %c0_1 = arith.constant 0 : index
    %0 = vector.load %arg1[%c0, %c0_0, %c0_1] : memref<3x8x32xf32, #tpu.memory_space<vmem>>, vector<3x8x32xf32>
    %1 = vector.shape_cast %0 : vector<3x8x32xf32> to vector<24x32xf32>
    %c0_2 = arith.constant 0 : index
    %c0_3 = arith.constant 0 : index
    %2 = vector.load %arg2[%c0_2, %c0_3] : memref<32x96xf32, #tpu.memory_space<vmem>>, vector<32x96xf32>
    %cst = arith.constant dense<0.000000e+00> : vector<24x96xf32>
    %3 = tpu.matmul %1, %2, %cst {dimension_numbers = #tpu.dot_dimension_numbers<[1], [0], [0], [1], [0, 0, 1, 1], [], []>} : vector<24x32xf32>, vector<32x96xf32>, vector<24x96xf32> -> vector<24x96xf32>
    %c0_4 = arith.constant 0 : index
    %c0_5 = arith.constant 0 : index
    %4 = vector.load %arg3[%c0_4, %c0_5] : memref<1x96xf32, #tpu.memory_space<vmem>>, vector<1x96xf32>
    %5 = vector.broadcast %4 : vector<1x96xf32> to vector<24x96xf32>
    %6 = arith.addf %3, %5 : vector<24x96xf32>
    %7 = tpu.iota {dimensions = array<i32: 1>} : vector<1x8x8xi32>
    %8 = tpu.iota {dimensions = array<i32: 2>} : vector<1x8x8xi32>
    %9 = arith.cmpi sle, %8, %7 : vector<1x8x8xi32>
    %cst_6 = arith.constant 0.000000e+00 : f32
    %cst_7 = arith.constant -1.000000e+30 : f32
    %10 = vector.broadcast %cst_6 : f32 to vector<1x8x8xf32>
    %11 = vector.broadcast %cst_7 : f32 to vector<1x8x8xf32>
    %12 = arith.select %9, %10, %11 : vector<1x8x8xi1>, vector<1x8x8xf32>
    %13 = vector.extract_strided_slice %6 {offsets = [0, 0], sizes = [24, 8], strides = [1, 1]} : vector<24x96xf32> to vector<24x8xf32>
    %14 = vector.shape_cast %13 : vector<24x8xf32> to vector<3x8x8xf32>
    %15 = vector.extract_strided_slice %6 {offsets = [0, 32], sizes = [24, 8], strides = [1, 1]} : vector<24x96xf32> to vector<24x8xf32>
    %16 = vector.shape_cast %15 : vector<24x8xf32> to vector<3x8x8xf32>
    %17 = vector.extract_strided_slice %6 {offsets = [0, 64], sizes = [24, 8], strides = [1, 1]} : vector<24x96xf32> to vector<24x8xf32>
    %18 = vector.shape_cast %17 : vector<24x8xf32> to vector<3x8x8xf32>
    "tpu.trace_start"() <{level = 10 : i32, message = "gsd,gtd->gst"}> : () -> ()
    %cst_8 = arith.constant dense<0.000000e+00> : vector<3x8x8xf32>
    %19 = tpu.matmul %14, %16, %cst_8 {dimension_numbers = #tpu.dot_dimension_numbers<[2], [2], [1], [1], [0, 0, 0, 1, 1, 1], [0], [0]>} : vector<3x8x8xf32>, vector<3x8x8xf32>, vector<3x8x8xf32> -> vector<3x8x8xf32>
    "tpu.trace_stop"() : () -> ()
    %20 = vector.broadcast %12 : vector<1x8x8xf32> to vector<3x8x8xf32>
    %21 = arith.addf %19, %20 : vector<3x8x8xf32>
    %cst_9 = arith.constant dense<0xFF800000> : vector<3x8xf32>
    %22 = vector.multi_reduction <maximumf>, %21, %cst_9 [2] : vector<3x8x8xf32> to vector<3x8xf32>
    %23 = vector.shape_cast %22 : vector<3x8xf32> to vector<3x8x1xf32>
    %24 = vector.broadcast %23 : vector<3x8x1xf32> to vector<3x8x8xf32>
    %25 = arith.subf %21, %24 : vector<3x8x8xf32>
    %26 = math.exp %25 : vector<3x8x8xf32>
    %cst_10 = arith.constant dense<0.000000e+00> : vector<3x8xf32>
    %27 = vector.multi_reduction <add>, %26, %cst_10 [2] : vector<3x8x8xf32> to vector<3x8xf32>
    %28 = vector.shape_cast %27 : vector<3x8xf32> to vector<3x8x1xf32>
    "tpu.trace_start"() <{level = 10 : i32, message = "gst,gtd->gsd"}> : () -> ()
    %cst_11 = arith.constant dense<0.000000e+00> : vector<3x8x8xf32>
    %29 = tpu.matmul %26, %18, %cst_11 {dimension_numbers = #tpu.dot_dimension_numbers<[2], [1], [1], [2], [0, 0, 0, 1, 1, 2], [0], [0]>} : vector<3x8x8xf32>, vector<3x8x8xf32>, vector<3x8x8xf32> -> vector<3x8x8xf32>
    "tpu.trace_stop"() : () -> ()
    %30 = tpu.reciprocal %28 {approx = true} : vector<3x8x1xf32> -> vector<3x8x1xf32>
    %31 = vector.broadcast %30 : vector<3x8x1xf32> to vector<3x8x8xf32>
    %32 = arith.mulf %29, %31 : vector<3x8x8xf32>
    %33 = vector.shape_cast %32 : vector<3x8x8xf32> to vector<24x8xf32>
    %c0_12 = arith.constant 0 : index
    %c0_13 = arith.constant 0 : index
    %34 = vector.load %arg7[%c0_12, %c0_13] : memref<24x32xf32, #tpu.memory_space<vmem>>, vector<24x8xf32>
    tpu.vector_store %arg7[%c0_12, %c0_13], %33 {strides = array<i32>} : memref<24x32xf32, #tpu.memory_space<vmem>>, vector<24x8xf32>,
    %35 = vector.extract_strided_slice %6 {offsets = [0, 8], sizes = [24, 8], strides = [1, 1]} : vector<24x96xf32> to vector<24x8xf32>
    %36 = vector.shape_cast %35 : vector<24x8xf32> to vector<3x8x8xf32>
    %37 = vector.extract_strided_slice %6 {offsets = [0, 40], sizes = [24, 8], strides = [1, 1]} : vector<24x96xf32> to vector<24x8xf32>
    %38 = vector.shape_cast %37 : vector<24x8xf32> to vector<3x8x8xf32>
    %39 = vector.extract_strided_slice %6 {offsets = [0, 72], sizes = [24, 8], strides = [1, 1]} : vector<24x96xf32> to vector<24x8xf32>
    %40 = vector.shape_cast %39 : vector<24x8xf32> to vector<3x8x8xf32>
    "tpu.trace_start"() <{level = 10 : i32, message = "gsd,gtd->gst"}> : () -> ()
    %cst_14 = arith.constant dense<0.000000e+00> : vector<3x8x8xf32>
    %41 = tpu.matmul %36, %38, %cst_14 {dimension_numbers = #tpu.dot_dimension_numbers<[2], [2], [1], [1], [0, 0, 0, 1, 1, 1], [0], [0]>} : vector<3x8x8xf32>, vector<3x8x8xf32>, vector<3x8x8xf32> -> vector<3x8x8xf32>
    "tpu.trace_stop"() : () -> ()
    %42 = vector.broadcast %12 : vector<1x8x8xf32> to vector<3x8x8xf32>
    %43 = arith.addf %41, %42 : vector<3x8x8xf32>
    %cst_15 = arith.constant dense<0xFF800000> : vector<3x8xf32>
    %44 = vector.multi_reduction <maximumf>, %43, %cst_15 [2] : vector<3x8x8xf32> to vector<3x8xf32>
    %45 = vector.shape_cast %44 : vector<3x8xf32> to vector<3x8x1xf32>
    %46 = vector.broadcast %45 : vector<3x8x1xf32> to vector<3x8x8xf32>
    %47 = arith.subf %43, %46 : vector<3x8x8xf32>
    %48 = math.exp %47 : vector<3x8x8xf32>
    %cst_16 = arith.constant dense<0.000000e+00> : vector<3x8xf32>
    %49 = vector.multi_reduction <add>, %48, %cst_16 [2] : vector<3x8x8xf32> to vector<3x8xf32>
    %50 = vector.shape_cast %49 : vector<3x8xf32> to vector<3x8x1xf32>
    "tpu.trace_start"() <{level = 10 : i32, message = "gst,gtd->gsd"}> : () -> ()
    %cst_17 = arith.constant dense<0.000000e+00> : vector<3x8x8xf32>
    %51 = tpu.matmul %48, %40, %cst_17 {dimension_numbers = #tpu.dot_dimension_numbers<[2], [1], [1], [2], [0, 0, 0, 1, 1, 2], [0], [0]>} : vector<3x8x8xf32>, vector<3x8x8xf32>, vector<3x8x8xf32> -> vector<3x8x8xf32>
    "tpu.trace_stop"() : () -> ()
    %52 = tpu.reciprocal %50 {approx = true} : vector<3x8x1xf32> -> vector<3x8x1xf32>
    %53 = vector.broadcast %52 : vector<3x8x1xf32> to vector<3x8x8xf32>
    %54 = arith.mulf %51, %53 : vector<3x8x8xf32>
    %55 = vector.shape_cast %54 : vector<3x8x8xf32> to vector<24x8xf32>
    %c0_18 = arith.constant 0 : index
    %c8 = arith.constant 8 : index
    %56 = vector.load %arg7[%c0_18, %c8] : memref<24x32xf32, #tpu.memory_space<vmem>>, vector<24x8xf32>
    tpu.vector_store %arg7[%c0_18, %c8], %55 {strides = array<i32>} : memref<24x32xf32, #tpu.memory_space<vmem>>, vector<24x8xf32>,
    %57 = vector.extract_strided_slice %6 {offsets = [0, 16], sizes = [24, 8], strides = [1, 1]} : vector<24x96xf32> to vector<24x8xf32>
    %58 = vector.shape_cast %57 : vector<24x8xf32> to vector<3x8x8xf32>
    %59 = vector.extract_strided_slice %6 {offsets = [0, 48], sizes = [24, 8], strides = [1, 1]} : vector<24x96xf32> to vector<24x8xf32>
    %60 = vector.shape_cast %59 : vector<24x8xf32> to vector<3x8x8xf32>
    %61 = vector.extract_strided_slice %6 {offsets = [0, 80], sizes = [24, 8], strides = [1, 1]} : vector<24x96xf32> to vector<24x8xf32>
    %62 = vector.shape_cast %61 : vector<24x8xf32> to vector<3x8x8xf32>
    "tpu.trace_start"() <{level = 10 : i32, message = "gsd,gtd->gst"}> : () -> ()
    %cst_19 = arith.constant dense<0.000000e+00> : vector<3x8x8xf32>
    %63 = tpu.matmul %58, %60, %cst_19 {dimension_numbers = #tpu.dot_dimension_numbers<[2], [2], [1], [1], [0, 0, 0, 1, 1, 1], [0], [0]>} : vector<3x8x8xf32>, vector<3x8x8xf32>, vector<3x8x8xf32> -> vector<3x8x8xf32>
    "tpu.trace_stop"() : () -> ()
    %64 = vector.broadcast %12 : vector<1x8x8xf32> to vector<3x8x8xf32>
    %65 = arith.addf %63, %64 : vector<3x8x8xf32>
    %cst_20 = arith.constant dense<0xFF800000> : vector<3x8xf32>
    %66 = vector.multi_reduction <maximumf>, %65, %cst_20 [2] : vector<3x8x8xf32> to vector<3x8xf32>
    %67 = vector.shape_cast %66 : vector<3x8xf32> to vector<3x8x1xf32>
    %68 = vector.broadcast %67 : vector<3x8x1xf32> to vector<3x8x8xf32>
    %69 = arith.subf %65, %68 : vector<3x8x8xf32>
    %70 = math.exp %69 : vector<3x8x8xf32>
    %cst_21 = arith.constant dense<0.000000e+00> : vector<3x8xf32>
    %71 = vector.multi_reduction <add>, %70, %cst_21 [2] : vector<3x8x8xf32> to vector<3x8xf32>
    %72 = vector.shape_cast %71 : vector<3x8xf32> to vector<3x8x1xf32>
    "tpu.trace_start"() <{level = 10 : i32, message = "gst,gtd->gsd"}> : () -> ()
    %cst_22 = arith.constant dense<0.000000e+00> : vector<3x8x8xf32>
    %73 = tpu.matmul %70, %62, %cst_22 {dimension_numbers = #tpu.dot_dimension_numbers<[2], [1], [1], [2], [0, 0, 0, 1, 1, 2], [0], [0]>} : vector<3x8x8xf32>, vector<3x8x8xf32>, vector<3x8x8xf32> -> vector<3x8x8xf32>
    "tpu.trace_stop"() : () -> ()
    %74 = tpu.reciprocal %72 {approx = true} : vector<3x8x1xf32> -> vector<3x8x1xf32>
    %75 = vector.broadcast %74 : vector<3x8x1xf32> to vector<3x8x8xf32>
    %76 = arith.mulf %73, %75 : vector<3x8x8xf32>
    %77 = vector.shape_cast %76 : vector<3x8x8xf32> to vector<24x8xf32>
    %c0_23 = arith.constant 0 : index
    %c16 = arith.constant 16 : index
    %78 = vector.load %arg7[%c0_23, %c16] : memref<24x32xf32, #tpu.memory_space<vmem>>, vector<24x8xf32>
    tpu.vector_store %arg7[%c0_23, %c16], %77 {strides = array<i32>} : memref<24x32xf32, #tpu.memory_space<vmem>>, vector<24x8xf32>,
    %79 = vector.extract_strided_slice %6 {offsets = [0, 24], sizes = [24, 8], strides = [1, 1]} : vector<24x96xf32> to vector<24x8xf32>
    %80 = vector.shape_cast %79 : vector<24x8xf32> to vector<3x8x8xf32>
    %81 = vector.extract_strided_slice %6 {offsets = [0, 56], sizes = [24, 8], strides = [1, 1]} : vector<24x96xf32> to vector<24x8xf32>
    %82 = vector.shape_cast %81 : vector<24x8xf32> to vector<3x8x8xf32>
    %83 = vector.extract_strided_slice %6 {offsets = [0, 88], sizes = [24, 8], strides = [1, 1]} : vector<24x96xf32> to vector<24x8xf32>
    %84 = vector.shape_cast %83 : vector<24x8xf32> to vector<3x8x8xf32>
    "tpu.trace_start"() <{level = 10 : i32, message = "gsd,gtd->gst"}> : () -> ()
    %cst_24 = arith.constant dense<0.000000e+00> : vector<3x8x8xf32>
    %85 = tpu.matmul %80, %82, %cst_24 {dimension_numbers = #tpu.dot_dimension_numbers<[2], [2], [1], [1], [0, 0, 0, 1, 1, 1], [0], [0]>} : vector<3x8x8xf32>, vector<3x8x8xf32>, vector<3x8x8xf32> -> vector<3x8x8xf32>
    "tpu.trace_stop"() : () -> ()
    %86 = vector.broadcast %12 : vector<1x8x8xf32> to vector<3x8x8xf32>
    %87 = arith.addf %85, %86 : vector<3x8x8xf32>
    %cst_25 = arith.constant dense<0xFF800000> : vector<3x8xf32>
    %88 = vector.multi_reduction <maximumf>, %87, %cst_25 [2] : vector<3x8x8xf32> to vector<3x8xf32>
    %89 = vector.shape_cast %88 : vector<3x8xf32> to vector<3x8x1xf32>
    %90 = vector.broadcast %89 : vector<3x8x1xf32> to vector<3x8x8xf32>
    %91 = arith.subf %87, %90 : vector<3x8x8xf32>
    %92 = math.exp %91 : vector<3x8x8xf32>
    %cst_26 = arith.constant dense<0.000000e+00> : vector<3x8xf32>
    %93 = vector.multi_reduction <add>, %92, %cst_26 [2] : vector<3x8x8xf32> to vector<3x8xf32>
    %94 = vector.shape_cast %93 : vector<3x8xf32> to vector<3x8x1xf32>
    "tpu.trace_start"() <{level = 10 : i32, message = "gst,gtd->gsd"}> : () -> ()
    %cst_27 = arith.constant dense<0.000000e+00> : vector<3x8x8xf32>
    %95 = tpu.matmul %92, %84, %cst_27 {dimension_numbers = #tpu.dot_dimension_numbers<[2], [1], [1], [2], [0, 0, 0, 1, 1, 2], [0], [0]>} : vector<3x8x8xf32>, vector<3x8x8xf32>, vector<3x8x8xf32> -> vector<3x8x8xf32>
    "tpu.trace_stop"() : () -> ()
    %96 = tpu.reciprocal %94 {approx = true} : vector<3x8x1xf32> -> vector<3x8x1xf32>
    %97 = vector.broadcast %96 : vector<3x8x1xf32> to vector<3x8x8xf32>
    %98 = arith.mulf %95, %97 : vector<3x8x8xf32>
    %99 = vector.shape_cast %98 : vector<3x8x8xf32> to vector<24x8xf32>
    %c0_28 = arith.constant 0 : index
    %c24 = arith.constant 24 : index
    %100 = vector.load %arg7[%c0_28, %c24] : memref<24x32xf32, #tpu.memory_space<vmem>>, vector<24x8xf32>
    tpu.vector_store %arg7[%c0_28, %c24], %99 {strides = array<i32>} : memref<24x32xf32, #tpu.memory_space<vmem>>, vector<24x8xf32>,
    %c0_29 = arith.constant 0 : index
    %c0_30 = arith.constant 0 : index
    %101 = vector.load %arg7[%c0_29, %c0_30] : memref<24x32xf32, #tpu.memory_space<vmem>>, vector<24x32xf32>
    %c0_31 = arith.constant 0 : index
    %c0_32 = arith.constant 0 : index
    %102 = vector.load %arg4[%c0_31, %c0_32] : memref<32x32xf32, #tpu.memory_space<vmem>>, vector<32x32xf32>
    %cst_33 = arith.constant dense<0.000000e+00> : vector<24x32xf32>
    %103 = tpu.matmul %101, %102, %cst_33 {dimension_numbers = #tpu.dot_dimension_numbers<[1], [0], [0], [1], [0, 0, 1, 1], [], []>} : vector<24x32xf32>, vector<32x32xf32>, vector<24x32xf32> -> vector<24x32xf32>
    %c0_34 = arith.constant 0 : index
    %c0_35 = arith.constant 0 : index
    %104 = vector.load %arg5[%c0_34, %c0_35] : memref<1x32xf32, #tpu.memory_space<vmem>>, vector<1x32xf32>
    %105 = vector.broadcast %104 : vector<1x32xf32> to vector<24x32xf32>
    %106 = arith.addf %103, %105 : vector<24x32xf32>
    %107 = vector.shape_cast %106 : vector<24x32xf32> to vector<3x8x32xf32>
    %c0_36 = arith.constant 0 : index
    %c0_37 = arith.constant 0 : index
    %c0_38 = arith.constant 0 : index
    %108 = vector.load %arg6[%c0_36, %c0_37, %c0_38] : memref<3x8x32xf32, #tpu.memory_space<vmem>>, vector<3x8x32xf32>
    tpu.vector_store %arg6[%c0_36, %c0_37, %c0_38], %107 {strides = array<i32>} : memref<3x8x32xf32, #tpu.memory_space<vmem>>, vector<3x8x32xf32>,
    return
  }
  func.func @transform_0(%arg0: i32) -> (i32, i32, i32) {
    %c0_i32 = arith.constant 0 : i32
    %c0_i32_0 = arith.constant 0 : i32
    %c0_i32_1 = arith.constant 0 : i32
    return %arg0, %c0_i32, %c0_i32_0 : i32, i32, i32
  }
  func.func @transform_1(%arg0: i32) -> (i32, i32) {
    %c0_i32 = arith.constant 0 : i32
    %c0_i32_0 = arith.constant 0 : i32
    %c0_i32_1 = arith.constant 0 : i32
    return %c0_i32, %c0_i32_0 : i32, i32
  }
  func.func @transform_2(%arg0: i32) -> (i32, i32) {
    %c0_i32 = arith.constant 0 : i32
    %c0_i32_0 = arith.constant 0 : i32
    %c0_i32_1 = arith.constant 0 : i32
    return %c0_i32, %c0_i32_0 : i32, i32
  }
  func.func @transform_3(%arg0: i32) -> (i32, i32) {
    %c0_i32 = arith.constant 0 : i32
    %c0_i32_0 = arith.constant 0 : i32
    %c0_i32_1 = arith.constant 0 : i32
    return %c0_i32, %c0_i32_0 : i32, i32
  }
  func.func @transform_4(%arg0: i32) -> (i32, i32) {
    %c0_i32 = arith.constant 0 : i32
    %c0_i32_0 = arith.constant 0 : i32
    %c0_i32_1 = arith.constant 0 : i32
    return %c0_i32, %c0_i32_0 : i32, i32
  }
  func.func @transform_5(%arg0: i32) -> (i32, i32, i32) {
    %c0_i32 = arith.constant 0 : i32
    %c0_i32_0 = arith.constant 0 : i32
    %c0_i32_1 = arith.constant 0 : i32
    return %arg0, %c0_i32, %c0_i32_0 : i32, i32, i32
  }
}

</mosaic_0001>

<llo_original>
// kernel: tpu_custom_call.1
$region0: #{tpu_custom_call.1}
  #allocation0 [shape = 'u32[]', space=smem, size = 0x4, offset = 0x4, fixed_abs, tag = 'smem constant byte address 0x4 - core index']
  #allocation1 [shape = 'u32[144,128]{1,0:T(1,128)}', space=vmem, size = 0x12000, scoped, tag = 'internal scratch']
  #allocation2 [shape = 'f32[24,32]{1,0:T(8,128)}', space=vmem, size = 0x3000, scoped, tag = 'scratch operand']
  %s0 = inlined_call_operand.hbm [shape: f32[6,8,32], index: 0, kind: input, shape index: {}]
  %s1 = inlined_call_operand.hbm [shape: f32[32,96], index: 1, kind: input, shape index: {}]
  %s2 = inlined_call_operand.vmem [shape: f32[1,96], index: 2, kind: input, shape index: {}]
  %s3 = inlined_call_operand.hbm [shape: f32[32,32], index: 3, kind: input, shape index: {}]
  %s4 = inlined_call_operand.vmem [shape: f32[1,32], index: 4, kind: input, shape index: {}]
  %s5 = inlined_call_operand.hbm [shape: f32[6,8,32], index: 5, kind: output, shape index: {}]
  %s6 = sld [smem:[#allocation0]]
  $region65: #{tpu_custom_call.1} parent=0
    _
  %s8 = ssub.s32 1, %s6
  %s9 = scalar_select 0, %s8, %s6
  $region1: #{tpu_custom_call.1} parent=0
    #allocation3 [shape = 'u8[24576]{0}', space=vmem, size = 0x6000, scoped, tag = 'input window, operand 0']
    #allocation4 [shape = 's32[2]{0}', space=sflag, size = 0x8, scoped, tag = 'scoped memory for tpu_custom_call.1']
    #allocation5 [shape = 's32[2]{0}', space=sflag, size = 0x8, scoped, tag = 'scoped memory for tpu_custom_call.1']
    #allocation6 [shape = 'u8[16384]{0}', space=vmem, size = 0x4000, scoped, tag = 'input window, operand 1, single buffered']
    #allocation7 [shape = 's32[1]{0}', space=sflag, size = 0x4, scoped, tag = 'scoped memory for tpu_custom_call.1']
    #allocation8 [shape = 'u8[16384]{0}', space=vmem, size = 0x4000, scoped, tag = 'input window, operand 3, single buffered']
    #allocation9 [shape = 'u8[24576]{0}', space=vmem, size = 0x6000, scoped, tag = 'output window, operand 0']
    %10 = vsyncpa [#allocation4], 0
    %s11 = scalar_lea.sflag [#allocation4], 1
    %12 = vsyncpa %s11, 0
    %13 = vsyncpa [#allocation7], 0
    %14 = vsyncpa [#allocation5], 0
    %s15 = scalar_lea.sflag [#allocation5], 1
    %16 = vsyncpa %s15, 0
    loop: start=0, step=1, limit=4
    $region2: #{tpu_custom_call.1} parent=1 // loop_pre_header
      _
    $region3: #{tpu_custom_call.1} parent=1 // loop_header
      %s18 = sphi 0, %s22
      %p19 = scmp.ge.s32.totalorder %s18, 4
      %s28 = sphi 0, %s30
      %s31 = sphi 0, %s28
      %s32 = sphi 0, %s31
      %s48 = sphi 0, %s32
      %s52 = sphi 0, %s52
      %s54 = sphi 0, %s52
      %s55 = sphi 0, %s54
      %s69 = sphi 0, %s55
      %s73 = sphi 0, %s73
      %s75 = sphi 0, %s73
      %s76 = sphi 0, %s75
      %s90 = sphi 0, %s76
      %s94 = sphi 0, %s94
      %s96 = sphi 0, %s94
      %s97 = sphi 0, %s96
      %s111 = sphi 0, %s97
      %s115 = sphi 0, %s115
      %s117 = sphi 0, %s115
      %s118 = sphi 0, %s117
      %s132 = sphi 0, %s118
      %s138 = sphi 0, %s140
      %s141 = sphi 0, %s138
      %s142 = sphi 0, %s141
      %s158 = sphi 0, %s142
    $region4: #{tpu_custom_call.1} parent=1 // loop_header_branch
      %21 = sbr.rel (%p19) target = $region8
    $region5: #{tpu_custom_call.1} parent=1 // loop_body
      %s23 = ssub.s32 %s18, 1
      %s24 = ssub.s32 %s18, 2
      %s25 = sadd.s32 %s18, 1
      %s26 = ssub.s32 %s18, %s25
      %p27 = scmp.eq.s32.totalorder %s26, 0
      %s29 = sadd.s32 %s28, 1
      %s30 = scalar_select %p27, %s28, %s29
      %p33 = pneg %p27
      %p34 = scmp.eq.s32.totalorder %s18, 1
      %p35 = por %p33, %p34
      %p36 = scmp.ne.s32.totalorder %s28, %s31
      %p37 = scmp.eq.s32.totalorder %s18, 0
      %p38 = por %p36, %p37
      %p39 = scmp.ne.s32.totalorder %s28, %s31
      %p40 = scmp.eq.s32.totalorder %s23, 1
      %p41 = por %p39, %p40
      %p42 = scmp.ne.s32.totalorder %s31, %s32
      %p43 = scmp.eq.s32.totalorder %s23, 0
      %p44 = por %p42, %p43
      %p45 = scmp.ne.s32.totalorder %s31, %s32
      %p46 = scmp.eq.s32.totalorder %s24, 1
      %p47 = por %p45, %p46
      %p49 = scmp.ne.s32.totalorder %s32, %s48
      %p50 = scmp.eq.s32.totalorder %s24, 0
      %p51 = por %p49, %p50
      %s53 = sadd.s32 %s52, 1
      %p56 = scmp.eq.s32.totalorder %s18, 1
      %p57 = scmp.ne.s32.totalorder %s52, %s54
      %p58 = scmp.eq.s32.totalorder %s18, 0
      %p59 = por %p57, %p58
      %p60 = scmp.ne.s32.totalorder %s52, %s54
      %p61 = scmp.eq.s32.totalorder %s23, 1
      %p62 = por %p60, %p61
      %p63 = scmp.ne.s32.totalorder %s54, %s55
      %p64 = scmp.eq.s32.totalorder %s23, 0
      %p65 = por %p63, %p64
      %p66 = scmp.ne.s32.totalorder %s54, %s55
      %p67 = scmp.eq.s32.totalorder %s24, 1
      %p68 = por %p66, %p67
      %p70 = scmp.ne.s32.totalorder %s55, %s69
      %p71 = scmp.eq.s32.totalorder %s24, 0
      %p72 = por %p70, %p71
      %s74 = sadd.s32 %s73, 1
      %p77 = scmp.eq.s32.totalorder %s18, 1
      %p78 = scmp.ne.s32.totalorder %s73, %s75
      %p79 = scmp.eq.s32.totalorder %s18, 0
      %p80 = por %p78, %p79
      %p81 = scmp.ne.s32.totalorder %s73, %s75
      %p82 = scmp.eq.s32.totalorder %s23, 1
      %p83 = por %p81, %p82
      %p84 = scmp.ne.s32.totalorder %s75, %s76
      %p85 = scmp.eq.s32.totalorder %s23, 0
      %p86 = por %p84, %p85
      %p87 = scmp.ne.s32.totalorder %s75, %s76
      %p88 = scmp.eq.s32.totalorder %s24, 1
      %p89 = por %p87, %p88
      %p91 = scmp.ne.s32.totalorder %s76, %s90
      %p92 = scmp.eq.s32.totalorder %s24, 0
      %p93 = por %p91, %p92
      %s95 = sadd.s32 %s94, 1
      %p98 = scmp.eq.s32.totalorder %s18, 1
      %p99 = scmp.ne.s32.totalorder %s94, %s96
      %p100 = scmp.eq.s32.totalorder %s18, 0
      %p101 = por %p99, %p100
      %p102 = scmp.ne.s32.totalorder %s94, %s96
      %p103 = scmp.eq.s32.totalorder %s23, 1
      %p104 = por %p102, %p103
      %p105 = scmp.ne.s32.totalorder %s96, %s97
      %p106 = scmp.eq.s32.totalorder %s23, 0
      %p107 = por %p105, %p106
      %p108 = scmp.ne.s32.totalorder %s96, %s97
      %p109 = scmp.eq.s32.totalorder %s24, 1
      %p110 = por %p108, %p109
      %p112 = scmp.ne.s32.totalorder %s97, %s111
      %p113 = scmp.eq.s32.totalorder %s24, 0
      %p114 = por %p112, %p113
      %s116 = sadd.s32 %s115, 1
      %p119 = scmp.eq.s32.totalorder %s18, 1
      %p120 = scmp.ne.s32.totalorder %s115, %s117
      %p121 = scmp.eq.s32.totalorder %s18, 0
      %p122 = por %p120, %p121
      %p123 = scmp.ne.s32.totalorder %s115, %s117
      %p124 = scmp.eq.s32.totalorder %s23, 1
      %p125 = por %p123, %p124
      %p126 = scmp.ne.s32.totalorder %s117, %s118
      %p127 = scmp.eq.s32.totalorder %s23, 0
      %p128 = por %p126, %p127
      %p129 = scmp.ne.s32.totalorder %s117, %s118
      %p130 = scmp.eq.s32.totalorder %s24, 1
      %p131 = por %p129, %p130
      %p133 = scmp.ne.s32.totalorder %s118, %s132
      %p134 = scmp.eq.s32.totalorder %s24, 0
      %p135 = por %p133, %p134
      %s136 = ssub.s32 %s18, %s25
      %p137 = scmp.eq.s32.totalorder %s136, 0
      %s139 = sadd.s32 %s138, 1
      %s140 = scalar_select %p137, %s138, %s139
      %p143 = pneg %p137
      %p144 = scmp.eq.s32.totalorder %s18, 1
      %p145 = por %p143, %p144
      %p146 = scmp.ne.s32.totalorder %s138, %s141
      %p147 = scmp.eq.s32.totalorder %s18, 0
      %p148 = por %p146, %p147
      %p149 = scmp.ne.s32.totalorder %s138, %s141
      %p150 = scmp.eq.s32.totalorder %s23, 1
      %p151 = por %p149, %p150
      %p152 = scmp.ne.s32.totalorder %s141, %s142
      %p153 = scmp.eq.s32.totalorder %s23, 0
      %p154 = por %p152, %p153
      %p155 = scmp.ne.s32.totalorder %s141, %s142
      %p156 = scmp.eq.s32.totalorder %s24, 1
      %p157 = por %p155, %p156
      %p159 = scmp.ne.s32.totalorder %s142, %s158
      %p160 = scmp.eq.s32.totalorder %s24, 0
      %p161 = por %p159, %p160
      %p162 = scmp.le.s32.totalorder 1, %s18
      %p163 = scmp.lt.s32.totalorder %s18, 3
      %p164 = pnand %p162, %p163
      %p165 = pneg %p164
      // Predicated region
      $region9: #{tpu_custom_call.1} parent=5 // pred_check
        _
      $region10: #{tpu_custom_call.1} parent=5 // pred_check_branch
        %167 = sbr.rel (%p164) target = $region12
      $region11: #{tpu_custom_call.1} parent=5 // pred_region
        %s168 = ssub.s32 %s18, 1
        // Predicated region
        $region13: #{tpu_custom_call.1} parent=11 // pred_check
          %p169 = pneg %p65
        $region14: #{tpu_custom_call.1} parent=11 // pred_check_branch
          %171 = sbr.rel (%p169) target = $region16
        $region15: #{tpu_custom_call.1} parent=11 // pred_region
          %s173 = ssub.s32 512, 512
          %174 = vsyncadd [#allocation7], %s173
          %s175 = sshll.u32 [#allocation6], 4
          %s176 = int_to_ptr.vmem [resolvable:$true] %s175
          %181 = dma.hbm_to_vmem [thread:$0]  %s1, 512, %s176, [#allocation7], 128, 128, 8
        $region16: #{tpu_custom_call.1} parent=11 // pred_fallthru
          _
        // Predicated region
        $region17: #{tpu_custom_call.1} parent=11 // pred_check
          %p182 = pneg %p86
        $region18: #{tpu_custom_call.1} parent=11 // pred_check_branch
          %184 = sbr.rel (%p182) target = $region20
        $region19: #{tpu_custom_call.1} parent=11 // pred_region
          _
        $region20: #{tpu_custom_call.1} parent=11 // pred_fallthru
          _
        // Predicated region
        $region21: #{tpu_custom_call.1} parent=11 // pred_check
          %p185 = pneg %p107
        $region22: #{tpu_custom_call.1} parent=11 // pred_check_branch
          %187 = sbr.rel (%p185) target = $region24
        $region23: #{tpu_custom_call.1} parent=11 // pred_region
          %s189 = ssub.s32 512, 512
          %190 = vsyncadd [#allocation7], %s189
          %s191 = sshll.u32 [#allocation8], 4
          %s192 = int_to_ptr.vmem [resolvable:$true] %s191
          %197 = dma.hbm_to_vmem [thread:$0]  %s3, 512, %s192, [#allocation7], 128, 128, 8
        $region24: #{tpu_custom_call.1} parent=11 // pred_fallthru
          _
        // Predicated region
        $region25: #{tpu_custom_call.1} parent=11 // pred_check
          %p198 = pneg %p128
        $region26: #{tpu_custom_call.1} parent=11 // pred_check_branch
          %200 = sbr.rel (%p198) target = $region28
        $region27: #{tpu_custom_call.1} parent=11 // pred_region
          _
        $region28: #{tpu_custom_call.1} parent=11 // pred_fallthru
          _
      $region12: #{tpu_custom_call.1} parent=5 // pred_fallthru
        _
      %p201 = scmp.lt.s32.totalorder %s18, 2
      // Predicated region
      $region29: #{tpu_custom_call.1} parent=5 // pred_check
        %p202 = pneg %p201
      $region30: #{tpu_custom_call.1} parent=5 // pred_check_branch
        %204 = sbr.rel (%p202) target = $region32
      $region31: #{tpu_custom_call.1} parent=5 // pred_region
        // Predicated region
        $region33: #{tpu_custom_call.1} parent=31 // pred_check
          %p205 = pneg %p38
        $region34: #{tpu_custom_call.1} parent=31 // pred_check_branch
          %207 = sbr.rel (%p205) target = $region36
        $region35: #{tpu_custom_call.1} parent=31 // pred_region
          %s208 = sand.u32 %s28, 1
          %s209 = scalar_lea.sflag [#allocation4], %s208
          %s210 = sand.u32 %s28, 1
          %s211 = smul.addr %s210, 24
          %s212 = scalar_lea.vmem [#allocation3], %s211
          %s213 = smul.u32 3, %s18
          %s215 = ssub.s32 384, 384
          %216 = vsyncadd %s209, %s215
          %s217 = smul.addr %s213, 128
          %s218 = scalar_lea.hbm %s0, %s217
          %s219 = sshll.u32 %s212, 4
          %s220 = int_to_ptr.vmem [resolvable:$true] %s219
          %225 = dma.hbm_to_vmem [thread:$0]  %s218, 384, %s220, %s209, 128, 128, 8
        $region36: #{tpu_custom_call.1} parent=31 // pred_fallthru
          _
      $region32: #{tpu_custom_call.1} parent=5 // pred_fallthru
        _
      %p226 = scmp.le.s32.totalorder 1, %s18
      %p227 = scmp.lt.s32.totalorder %s18, 3
      %p228 = pnand %p226, %p227
      %p229 = pneg %p228
      // Predicated region
      $region37: #{tpu_custom_call.1} parent=5 // pred_check
        _
      $region38: #{tpu_custom_call.1} parent=5 // pred_check_branch
        %231 = sbr.rel (%p228) target = $region40
      $region39: #{tpu_custom_call.1} parent=5 // pred_region
        %s232 = ssub.s32 %s18, 1
        %s233 = sand.u32 %s31, 1
        %s234 = scalar_lea.sflag [#allocation4], %s233
        %s235 = sand.u32 %s31, 1
        %s236 = smul.addr %s235, 24
        %s237 = scalar_lea.vmem [#allocation3], %s236
        // Predicated region
        $region41: #{tpu_custom_call.1} parent=39 // pred_check
          %p238 = pneg %p44
        $region42: #{tpu_custom_call.1} parent=39 // pred_check_branch
          %240 = sbr.rel (%p238) target = $region44
        $region43: #{tpu_custom_call.1} parent=39 // pred_region
          %241 = dma.done %s234, 384
        $region44: #{tpu_custom_call.1} parent=39 // pred_fallthru
          _
        // Predicated region
        $region45: #{tpu_custom_call.1} parent=39 // pred_check
          %p242 = pneg %p65
        $region46: #{tpu_custom_call.1} parent=39 // pred_check_branch
          %244 = sbr.rel (%p242) target = $region48
        $region47: #{tpu_custom_call.1} parent=39 // pred_region
          %245 = dma.done [#allocation7], 512
        $region48: #{tpu_custom_call.1} parent=39 // pred_fallthru
          _
        // Predicated region
        $region49: #{tpu_custom_call.1} parent=39 // pred_check
          %p246 = pneg %p107
        $region50: #{tpu_custom_call.1} parent=39 // pred_check_branch
          %248 = sbr.rel (%p246) target = $region52
        $region51: #{tpu_custom_call.1} parent=39 // pred_region
          %249 = dma.done [#allocation7], 512
        $region52: #{tpu_custom_call.1} parent=39 // pred_fallthru
          _
        %s250 = sand.u32 %s31, 1
        %s251 = scalar_lea.sflag [#allocation4], %s250
        %s252 = sand.u32 %s31, 1
        %s253 = smul.addr %s252, 24
        %s254 = scalar_lea.vmem [#allocation3], %s253
        %p255 = pneg %p44
        %p256 = pneg %p41
        %p257 = pneg %p65
        %p258 = pneg %p62
        %p259 = pneg %p86
        %p260 = pneg %p83
        %p261 = pneg %p107
        %p262 = pneg %p104
        %p263 = pneg %p128
        %p264 = pneg %p125
        %p265 = pneg %p154
        %p266 = pneg %p151
        %s267 = sand.u32 %s141, 1
        %s268 = scalar_lea.sflag [#allocation5], %s267
        %s269 = sand.u32 %s141, 1
        %s270 = smul.addr %s269, 24
        %s271 = scalar_lea.vmem [#allocation9], %s270
        %s272 = smul.u32 3, %s23
        %s273 = smul.u32 3, %s23
        %v274 = vld [vmem:[%s237] sm:$0xff]
        %v275 = vld [vmem:[%s237 + $0x8] sm:$0xff]
        %v276 = vld [vmem:[%s237 + $0x10] sm:$0xff]
        %v277 = vld [vmem:[#allocation6] sm:$0xff]
        %v278 = vld [vmem:[#allocation6 + $0x8] sm:$0xff]
        %v279 = vld [vmem:[#allocation6 + $0x10] sm:$0xff]
        %v280 = vld [vmem:[#allocation6 + $0x18] sm:$0xff]
        %v281 = vld [vmem:[%s2] sm:$0x1]
        %v283 = vlaneseq
        %v284 = vshrl.u32 %v283, 7
        %v285 = vsub.s32 0, %v284
        %v286 = vrot.slane %v281, %v285
        %vm288 = vcmask 261120
        %v290 = vsel %vm288, %v274, 0
        %v293 = vsel %vm288, %v275, 0
        %v296 = vsel %vm288, %v276, 0
        %298 = vmatprep.subr.mxu0 0.0
        %299 = vmatpush1.msra.mxu0 0.0
        %300 = vmatprep.subr.mxu0 0.0
        %301 = vmatpush1.msra.mxu0 0.0
        %302 = vmatprep.subr.mxu0 0.0
        %303 = vmatpush1.msra.mxu0 0.0
        %304 = vmatprep.subr.mxu0 0.0
        %305 = vmatpush1.msra.mxu0 0.0
        %306 = vmatprep.subr.mxu0 0.0
        %307 = vmatpush1.msra.mxu0 0.0
        %308 = vmatprep.subr.mxu0 0.0
        %309 = vmatpush1.msra.mxu0 0.0
        %310 = vmatprep.subr.mxu0 0.0
        %311 = vmatpush1.msra.mxu0 0.0
        %312 = vmatprep.subr.mxu0 0.0
        %313 = vmatpush1.msra.mxu0 0.0
        %314 = vmatprep.subr.mxu0 0.0
        %315 = vmatpush1.msra.mxu0 0.0
        %316 = vmatprep.subr.mxu0 0.0
        %317 = vmatpush1.msra.mxu0 0.0
        %318 = vmatprep.subr.mxu0 0.0
        %319 = vmatpush1.msra.mxu0 0.0
        %320 = vmatprep.subr.mxu0 0.0
        %321 = vmatpush1.msra.mxu0 0.0
        %322 = vmatprep.subr.mxu0 0.0
        %323 = vmatpush1.msra.mxu0 %v280
        %324 = vmatprep.subr.mxu0 0.0
        %325 = vmatpush1.msra.mxu0 %v279
        %326 = vmatprep.subr.mxu0 0.0
        %327 = vmatpush1.msra.mxu0 %v278
        %328 = vmatprep.subr.mxu0 0.0
        %329 = vmatpush1.msra.mxu0 %v277
        %330 = vmatprep.subr.mxu0 0.0
        %331 = vmatpush2.msra.mxu0 0.0
        %332 = vmatprep.subr.mxu0 0.0
        %333 = vmatpush2.msra.mxu0 0.0
        %334 = vmatprep.subr.mxu0 0.0
        %335 = vmatpush2.msra.mxu0 0.0
        %336 = vmatprep.subr.mxu0 0.0
        %337 = vmatpush2.msra.mxu0 0.0
        %338 = vmatprep.subr.mxu0 0.0
        %339 = vmatpush2.msra.mxu0 0.0
        %340 = vmatprep.subr.mxu0 0.0
        %341 = vmatpush2.msra.mxu0 0.0
        %342 = vmatprep.subr.mxu0 0.0
        %343 = vmatpush2.msra.mxu0 0.0
        %344 = vmatprep.subr.mxu0 0.0
        %345 = vmatpush2.msra.mxu0 0.0
        %346 = vmatprep.subr.mxu0 0.0
        %347 = vmatpush2.msra.mxu0 0.0
        %348 = vmatprep.subr.mxu0 0.0
        %349 = vmatpush2.msra.mxu0 0.0
        %350 = vmatprep.subr.mxu0 0.0
        %351 = vmatpush2.msra.mxu0 0.0
        %352 = vmatprep.subr.mxu0 0.0
        %353 = vmatpush2.msra.mxu0 0.0
        %354 = vmatprep.subr.mxu0 0.0
        %355 = vmatpush2.msra.mxu0 0.0
        %356 = vmatprep.subr.mxu0 0.0
        %357 = vmatpush2.msra.mxu0 0.0
        %358 = vmatprep.subr.mxu0 0.0
        %359 = vmatpush2.msra.mxu0 0.0
        %360 = vmatprep.subr.mxu0 0.0
        %361 = vmatpush2.msra.mxu0 0.0
        %362 = vmatprep.mubr.f32.mxu0 0.0
        %363 = vmatmul.mubr.f32.gmra.mxu0 %v290
        %v364 = vpop.f32.mrf.mxu0
        %v365 = vadd.f32 %v286, %v364
        %v366 = vpop.f32.mrf.mxu0
        %367 = vmatprep.mubr.f32.mxu0 0.0
        %368 = vmatmul.mubr.f32.gmra.mxu0 %v293
        %v369 = vpop.f32.mrf.mxu0
        %v370 = vadd.f32 %v286, %v369
        %v371 = vpop.f32.mrf.mxu0
        %372 = vmatprep.mubr.f32.mxu0 0.0
        %373 = vmatmul.mubr.f32.gmra.mxu0 %v296
        %v374 = vpop.f32.mrf.mxu0
        %v375 = vadd.f32 %v286, %v374
        %v376 = vpop.f32.mrf.mxu0
        %377 = vdwg.mxu0
        %v378 = vlaneseq
        %v379 = vshrl.u32 %v378, 7
        %v380 = vlaneseq
        %v381 = vand.u32 %v380, 127
        %vm382 = vcmp.le.s32.totalorder %v381, %v379
        %v383 = vsel %vm382, 0.0, -1e+30
        %385 = vrot.lane.b32.xlu0 %v365, 96
        %v386 = vpop.permute.xlu0 %385
        %vm387 = vcmask 64512
        %v388 = vsel %vm387, %v365, 0
        %v390 = vsel %vm387, %v386, 0
        %392 = vmatprep.subr.mxu0 0.0
        %393 = vmatpush1.xpose.msra.mxu0 0.0
        %394 = vmatprep.subr.mxu0 0.0
        %395 = vmatpush1.xpose.msra.mxu0 0.0
        %396 = vmatprep.subr.mxu0 0.0
        %397 = vmatpush1.xpose.msra.mxu0 0.0
        %398 = vmatprep.subr.mxu0 0.0
        %399 = vmatpush1.xpose.msra.mxu0 0.0
        %400 = vmatprep.subr.mxu0 0.0
        %401 = vmatpush1.xpose.msra.mxu0 0.0
        %402 = vmatprep.subr.mxu0 0.0
        %403 = vmatpush1.xpose.msra.mxu0 0.0
        %404 = vmatprep.subr.mxu0 0.0
        %405 = vmatpush1.xpose.msra.mxu0 0.0
        %406 = vmatprep.subr.mxu0 0.0
        %407 = vmatpush1.xpose.msra.mxu0 0.0
        %408 = vmatprep.subr.mxu0 0.0
        %409 = vmatpush1.xpose.msra.mxu0 0.0
        %410 = vmatprep.subr.mxu0 0.0
        %411 = vmatpush1.xpose.msra.mxu0 0.0
        %412 = vmatprep.subr.mxu0 0.0
        %413 = vmatpush1.xpose.msra.mxu0 0.0
        %414 = vmatprep.subr.mxu0 0.0
        %415 = vmatpush1.xpose.msra.mxu0 0.0
        %416 = vmatprep.subr.mxu0 0.0
        %417 = vmatpush1.xpose.msra.mxu0 0.0
        %418 = vmatprep.subr.mxu0 0.0
        %419 = vmatpush1.xpose.msra.mxu0 0.0
        %420 = vmatprep.subr.mxu0 0.0
        %421 = vmatpush1.xpose.msra.mxu0 0.0
        %422 = vmatprep.subr.mxu0 0.0
        %423 = vmatpush1.xpose.msra.mxu0 %v390
        %424 = vmatprep.subr.mxu0 0.0
        %425 = vmatpush2.xpose.msra.mxu0 0.0
        %426 = vmatprep.subr.mxu0 0.0
        %427 = vmatpush2.xpose.msra.mxu0 0.0
        %428 = vmatprep.subr.mxu0 0.0
        %429 = vmatpush2.xpose.msra.mxu0 0.0
        %430 = vmatprep.subr.mxu0 0.0
        %431 = vmatpush2.xpose.msra.mxu0 0.0
        %432 = vmatprep.subr.mxu0 0.0
        %433 = vmatpush2.xpose.msra.mxu0 0.0
        %434 = vmatprep.subr.mxu0 0.0
        %435 = vmatpush2.xpose.msra.mxu0 0.0
        %436 = vmatprep.subr.mxu0 0.0
        %437 = vmatpush2.xpose.msra.mxu0 0.0
        %438 = vmatprep.subr.mxu0 0.0
        %439 = vmatpush2.xpose.msra.mxu0 0.0
        %440 = vmatprep.subr.mxu0 0.0
        %441 = vmatpush2.xpose.msra.mxu0 0.0
        %442 = vmatprep.subr.mxu0 0.0
        %443 = vmatpush2.xpose.msra.mxu0 0.0
        %444 = vmatprep.subr.mxu0 0.0
        %445 = vmatpush2.xpose.msra.mxu0 0.0
        %446 = vmatprep.subr.mxu0 0.0
        %447 = vmatpush2.xpose.msra.mxu0 0.0
        %448 = vmatprep.subr.mxu0 0.0
        %449 = vmatpush2.xpose.msra.mxu0 0.0
        %450 = vmatprep.subr.mxu0 0.0
        %451 = vmatpush2.xpose.msra.mxu0 0.0
        %452 = vmatprep.subr.mxu0 0.0
        %453 = vmatpush2.xpose.msra.mxu0 0.0
        %454 = vmatprep.subr.mxu0 0.0
        %455 = vmatpush2.xpose.msra.mxu0 0.0
        %456 = vmatprep.mubr.f32.mxu0 0.0
        %457 = vmatmul.mubr.f32.gmra.mxu0 %v388
        %v458 = vpop.f32.mrf.mxu0
        %v459 = vadd.f32 %v383, %v458
        %v460 = vpop.f32.mrf.mxu0
        %461 = vdwg.mxu0
        %463 = vrot.lane.b32.xlu0 %v370, 96
        %v464 = vpop.permute.xlu0 %463
        %v465 = vsel %vm387, %v370, 0
        %v467 = vsel %vm387, %v464, 0
        %469 = vmatprep.subr.mxu0 0.0
        %470 = vmatpush1.xpose.msra.mxu0 0.0
        %471 = vmatprep.subr.mxu0 0.0
        %472 = vmatpush1.xpose.msra.mxu0 0.0
        %473 = vmatprep.subr.mxu0 0.0
        %474 = vmatpush1.xpose.msra.mxu0 0.0
        %475 = vmatprep.subr.mxu0 0.0
        %476 = vmatpush1.xpose.msra.mxu0 0.0
        %477 = vmatprep.subr.mxu0 0.0
        %478 = vmatpush1.xpose.msra.mxu0 0.0
        %479 = vmatprep.subr.mxu0 0.0
        %480 = vmatpush1.xpose.msra.mxu0 0.0
        %481 = vmatprep.subr.mxu0 0.0
        %482 = vmatpush1.xpose.msra.mxu0 0.0
        %483 = vmatprep.subr.mxu0 0.0
        %484 = vmatpush1.xpose.msra.mxu0 0.0
        %485 = vmatprep.subr.mxu0 0.0
        %486 = vmatpush1.xpose.msra.mxu0 0.0
        %487 = vmatprep.subr.mxu0 0.0
        %488 = vmatpush1.xpose.msra.mxu0 0.0
        %489 = vmatprep.subr.mxu0 0.0
        %490 = vmatpush1.xpose.msra.mxu0 0.0
        %491 = vmatprep.subr.mxu0 0.0
        %492 = vmatpush1.xpose.msra.mxu0 0.0
        %493 = vmatprep.subr.mxu0 0.0
        %494 = vmatpush1.xpose.msra.mxu0 0.0
        %495 = vmatprep.subr.mxu0 0.0
        %496 = vmatpush1.xpose.msra.mxu0 0.0
        %497 = vmatprep.subr.mxu0 0.0
        %498 = vmatpush1.xpose.msra.mxu0 0.0
        %499 = vmatprep.subr.mxu0 0.0
        %500 = vmatpush1.xpose.msra.mxu0 %v467
        %501 = vmatprep.subr.mxu0 0.0
        %502 = vmatpush2.xpose.msra.mxu0 0.0
        %503 = vmatprep.subr.mxu0 0.0
        %504 = vmatpush2.xpose.msra.mxu0 0.0
        %505 = vmatprep.subr.mxu0 0.0
        %506 = vmatpush2.xpose.msra.mxu0 0.0
        %507 = vmatprep.subr.mxu0 0.0
        %508 = vmatpush2.xpose.msra.mxu0 0.0
        %509 = vmatprep.subr.mxu0 0.0
        %510 = vmatpush2.xpose.msra.mxu0 0.0
        %511 = vmatprep.subr.mxu0 0.0
        %512 = vmatpush2.xpose.msra.mxu0 0.0
        %513 = vmatprep.subr.mxu0 0.0
        %514 = vmatpush2.xpose.msra.mxu0 0.0
        %515 = vmatprep.subr.mxu0 0.0
        %516 = vmatpush2.xpose.msra.mxu0 0.0
        %517 = vmatprep.subr.mxu0 0.0
        %518 = vmatpush2.xpose.msra.mxu0 0.0
        %519 = vmatprep.subr.mxu0 0.0
        %520 = vmatpush2.xpose.msra.mxu0 0.0
        %521 = vmatprep.subr.mxu0 0.0
        %522 = vmatpush2.xpose.msra.mxu0 0.0
        %523 = vmatprep.subr.mxu0 0.0
        %524 = vmatpush2.xpose.msra.mxu0 0.0
        %525 = vmatprep.subr.mxu0 0.0
        %526 = vmatpush2.xpose.msra.mxu0 0.0
        %527 = vmatprep.subr.mxu0 0.0
        %528 = vmatpush2.xpose.msra.mxu0 0.0
        %529 = vmatprep.subr.mxu0 0.0
        %530 = vmatpush2.xpose.msra.mxu0 0.0
        %531 = vmatprep.subr.mxu0 0.0
        %532 = vmatpush2.xpose.msra.mxu0 0.0
        %533 = vmatprep.mubr.f32.mxu0 0.0
        %534 = vmatmul.mubr.f32.gmra.mxu0 %v465
        %v535 = vpop.f32.mrf.mxu0
        %v536 = vadd.f32 %v383, %v535
        %v537 = vpop.f32.mrf.mxu0
        %538 = vdwg.mxu0
        %540 = vrot.lane.b32.xlu0 %v375, 96
        %v541 = vpop.permute.xlu0 %540
        %v542 = vsel %vm387, %v375, 0
        %v544 = vsel %vm387, %v541, 0
        %546 = vmatprep.subr.mxu0 0.0
        %547 = vmatpush1.xpose.msra.mxu0 0.0
        %548 = vmatprep.subr.mxu0 0.0
        %549 = vmatpush1.xpose.msra.mxu0 0.0
        %550 = vmatprep.subr.mxu0 0.0
        %551 = vmatpush1.xpose.msra.mxu0 0.0
        %552 = vmatprep.subr.mxu0 0.0
        %553 = vmatpush1.xpose.msra.mxu0 0.0
        %554 = vmatprep.subr.mxu0 0.0
        %555 = vmatpush1.xpose.msra.mxu0 0.0
        %556 = vmatprep.subr.mxu0 0.0
        %557 = vmatpush1.xpose.msra.mxu0 0.0
        %558 = vmatprep.subr.mxu0 0.0
        %559 = vmatpush1.xpose.msra.mxu0 0.0
        %560 = vmatprep.subr.mxu0 0.0
        %561 = vmatpush1.xpose.msra.mxu0 0.0
        %562 = vmatprep.subr.mxu0 0.0
        %563 = vmatpush1.xpose.msra.mxu0 0.0
        %564 = vmatprep.subr.mxu0 0.0
        %565 = vmatpush1.xpose.msra.mxu0 0.0
        %566 = vmatprep.subr.mxu0 0.0
        %567 = vmatpush1.xpose.msra.mxu0 0.0
        %568 = vmatprep.subr.mxu0 0.0
        %569 = vmatpush1.xpose.msra.mxu0 0.0
        %570 = vmatprep.subr.mxu0 0.0
        %571 = vmatpush1.xpose.msra.mxu0 0.0
        %572 = vmatprep.subr.mxu0 0.0
        %573 = vmatpush1.xpose.msra.mxu0 0.0
        %574 = vmatprep.subr.mxu0 0.0
        %575 = vmatpush1.xpose.msra.mxu0 0.0
        %576 = vmatprep.subr.mxu0 0.0
        %577 = vmatpush1.xpose.msra.mxu0 %v544
        %578 = vmatprep.subr.mxu0 0.0
        %579 = vmatpush2.xpose.msra.mxu0 0.0
        %580 = vmatprep.subr.mxu0 0.0
        %581 = vmatpush2.xpose.msra.mxu0 0.0
        %582 = vmatprep.subr.mxu0 0.0
        %583 = vmatpush2.xpose.msra.mxu0 0.0
        %584 = vmatprep.subr.mxu0 0.0
        %585 = vmatpush2.xpose.msra.mxu0 0.0
        %586 = vmatprep.subr.mxu0 0.0
        %587 = vmatpush2.xpose.msra.mxu0 0.0
        %588 = vmatprep.subr.mxu0 0.0
        %589 = vmatpush2.xpose.msra.mxu0 0.0
        %590 = vmatprep.subr.mxu0 0.0
        %591 = vmatpush2.xpose.msra.mxu0 0.0
        %592 = vmatprep.subr.mxu0 0.0
        %593 = vmatpush2.xpose.msra.mxu0 0.0
        %594 = vmatprep.subr.mxu0 0.0
        %595 = vmatpush2.xpose.msra.mxu0 0.0
        %596 = vmatprep.subr.mxu0 0.0
        %597 = vmatpush2.xpose.msra.mxu0 0.0
        %598 = vmatprep.subr.mxu0 0.0
        %599 = vmatpush2.xpose.msra.mxu0 0.0
        %600 = vmatprep.subr.mxu0 0.0
        %601 = vmatpush2.xpose.msra.mxu0 0.0
        %602 = vmatprep.subr.mxu0 0.0
        %603 = vmatpush2.xpose.msra.mxu0 0.0
        %604 = vmatprep.subr.mxu0 0.0
        %605 = vmatpush2.xpose.msra.mxu0 0.0
        %606 = vmatprep.subr.mxu0 0.0
        %607 = vmatpush2.xpose.msra.mxu0 0.0
        %608 = vmatprep.subr.mxu0 0.0
        %609 = vmatpush2.xpose.msra.mxu0 0.0
        %610 = vmatprep.mubr.f32.mxu0 0.0
        %611 = vmatmul.mubr.f32.gmra.mxu0 %v542
        %v612 = vpop.f32.mrf.mxu0
        %v613 = vadd.f32 %v383, %v612
        %v614 = vpop.f32.mrf.mxu0
        %615 = vdwg.mxu0
        %v616 = vsel %vm387, %v459, -inf
        %617 = vmax.xlane.f32.xlu0 %v616
        %v618 = vpop.xlane.xlu0 %617
        %v619 = vsel %vm387, %v536, -inf
        %620 = vmax.xlane.f32.xlu0 %v619
        %v621 = vpop.xlane.xlu0 %620
        %v622 = vsel %vm387, %v613, -inf
        %623 = vmax.xlane.f32.xlu0 %v622
        %v624 = vpop.xlane.xlu0 %623
        %v625 = vsub.f32 %v459, %v618
        %v626 = vsub.f32 %v536, %v621
        %v627 = vsub.f32 %v613, %v624
        %v628 = vmul.f32 %v625, 1.442695
        %v629 = vpow.pop %v628
        %v630 = vmul.f32 %v626, 1.442695
        %v631 = vpow.pop %v630
        %v632 = vmul.f32 %v627, 1.442695
        %v633 = vpow.pop %v632
        %v634 = vsel %vm387, %v629, 0.0
        %635 = vadd.xlane.f32.xlu0 %v634
        %v636 = vpop.xlane.xlu0 %635
        %v637 = vsel %vm387, %v631, 0.0
        %638 = vadd.xlane.f32.xlu0 %v637
        %v639 = vpop.xlane.xlu0 %638
        %v640 = vsel %vm387, %v633, 0.0
        %641 = vadd.xlane.f32.xlu0 %v640
        %v642 = vpop.xlane.xlu0 %641
        %643 = vrot.lane.b32.xlu0 %v365, 64
        %v644 = vpop.permute.xlu0 %643
        %v647 = vsel %vm387, %v629, 0
        %649 = vmatprep.subr.mxu0 0.0
        %650 = vmatpush1.msra.mxu0 0.0
        %651 = vmatprep.subr.mxu0 0.0
        %652 = vmatpush1.msra.mxu0 0.0
        %653 = vmatprep.subr.mxu0 0.0
        %654 = vmatpush1.msra.mxu0 0.0
        %655 = vmatprep.subr.mxu0 0.0
        %656 = vmatpush1.msra.mxu0 0.0
        %657 = vmatprep.subr.mxu0 0.0
        %658 = vmatpush1.msra.mxu0 0.0
        %659 = vmatprep.subr.mxu0 0.0
        %660 = vmatpush1.msra.mxu0 0.0
        %661 = vmatprep.subr.mxu0 0.0
        %662 = vmatpush1.msra.mxu0 0.0
        %663 = vmatprep.subr.mxu0 0.0
        %664 = vmatpush1.msra.mxu0 0.0
        %665 = vmatprep.subr.mxu0 0.0
        %666 = vmatpush1.msra.mxu0 0.0
        %667 = vmatprep.subr.mxu0 0.0
        %668 = vmatpush1.msra.mxu0 0.0
        %669 = vmatprep.subr.mxu0 0.0
        %670 = vmatpush1.msra.mxu0 0.0
        %671 = vmatprep.subr.mxu0 0.0
        %672 = vmatpush1.msra.mxu0 0.0
        %673 = vmatprep.subr.mxu0 0.0
        %674 = vmatpush1.msra.mxu0 0.0
        %675 = vmatprep.subr.mxu0 0.0
        %676 = vmatpush1.msra.mxu0 0.0
        %677 = vmatprep.subr.mxu0 0.0
        %678 = vmatpush1.msra.mxu0 0.0
        %679 = vmatprep.subr.mxu0 0.0
        %680 = vmatpush1.msra.mxu0 %v644
        %681 = vmatprep.subr.mxu0 0.0
        %682 = vmatpush2.msra.mxu0 0.0
        %683 = vmatprep.subr.mxu0 0.0
        %684 = vmatpush2.msra.mxu0 0.0
        %685 = vmatprep.subr.mxu0 0.0
        %686 = vmatpush2.msra.mxu0 0.0
        %687 = vmatprep.subr.mxu0 0.0
        %688 = vmatpush2.msra.mxu0 0.0
        %689 = vmatprep.subr.mxu0 0.0
        %690 = vmatpush2.msra.mxu0 0.0
        %691 = vmatprep.subr.mxu0 0.0
        %692 = vmatpush2.msra.mxu0 0.0
        %693 = vmatprep.subr.mxu0 0.0
        %694 = vmatpush2.msra.mxu0 0.0
        %695 = vmatprep.subr.mxu0 0.0
        %696 = vmatpush2.msra.mxu0 0.0
        %697 = vmatprep.subr.mxu0 0.0
        %698 = vmatpush2.msra.mxu0 0.0
        %699 = vmatprep.subr.mxu0 0.0
        %700 = vmatpush2.msra.mxu0 0.0
        %701 = vmatprep.subr.mxu0 0.0
        %702 = vmatpush2.msra.mxu0 0.0
        %703 = vmatprep.subr.mxu0 0.0
        %704 = vmatpush2.msra.mxu0 0.0
        %705 = vmatprep.subr.mxu0 0.0
        %706 = vmatpush2.msra.mxu0 0.0
        %707 = vmatprep.subr.mxu0 0.0
        %708 = vmatpush2.msra.mxu0 0.0
        %709 = vmatprep.subr.mxu0 0.0
        %710 = vmatpush2.msra.mxu0 0.0
        %711 = vmatprep.subr.mxu0 0.0
        %712 = vmatpush2.msra.mxu0 0.0
        %713 = vmatprep.mubr.f32.mxu0 0.0
        %714 = vmatmul.mubr.f32.gmra.mxu0 %v647
        %v715 = vpop.f32.mrf.mxu0
        %v716 = vadd.f32 0.0, %v715
        %v717 = vpop.f32.mrf.mxu0
        %718 = vdwg.mxu0
        %719 = vrot.lane.b32.xlu0 %v370, 64
        %v720 = vpop.permute.xlu0 %719
        %v723 = vsel %vm387, %v631, 0
        %725 = vmatprep.subr.mxu0 0.0
        %726 = vmatpush1.msra.mxu0 0.0
        %727 = vmatprep.subr.mxu0 0.0
        %728 = vmatpush1.msra.mxu0 0.0
        %729 = vmatprep.subr.mxu0 0.0
        %730 = vmatpush1.msra.mxu0 0.0
        %731 = vmatprep.subr.mxu0 0.0
        %732 = vmatpush1.msra.mxu0 0.0
        %733 = vmatprep.subr.mxu0 0.0
        %734 = vmatpush1.msra.mxu0 0.0
        %735 = vmatprep.subr.mxu0 0.0
        %736 = vmatpush1.msra.mxu0 0.0
        %737 = vmatprep.subr.mxu0 0.0
        %738 = vmatpush1.msra.mxu0 0.0
        %739 = vmatprep.subr.mxu0 0.0
        %740 = vmatpush1.msra.mxu0 0.0
        %741 = vmatprep.subr.mxu0 0.0
        %742 = vmatpush1.msra.mxu0 0.0
        %743 = vmatprep.subr.mxu0 0.0
        %744 = vmatpush1.msra.mxu0 0.0
        %745 = vmatprep.subr.mxu0 0.0
        %746 = vmatpush1.msra.mxu0 0.0
        %747 = vmatprep.subr.mxu0 0.0
        %748 = vmatpush1.msra.mxu0 0.0
        %749 = vmatprep.subr.mxu0 0.0
        %750 = vmatpush1.msra.mxu0 0.0
        %751 = vmatprep.subr.mxu0 0.0
        %752 = vmatpush1.msra.mxu0 0.0
        %753 = vmatprep.subr.mxu0 0.0
        %754 = vmatpush1.msra.mxu0 0.0
        %755 = vmatprep.subr.mxu0 0.0
        %756 = vmatpush1.msra.mxu0 %v720
        %757 = vmatprep.subr.mxu0 0.0
        %758 = vmatpush2.msra.mxu0 0.0
        %759 = vmatprep.subr.mxu0 0.0
        %760 = vmatpush2.msra.mxu0 0.0
        %761 = vmatprep.subr.mxu0 0.0
        %762 = vmatpush2.msra.mxu0 0.0
        %763 = vmatprep.subr.mxu0 0.0
        %764 = vmatpush2.msra.mxu0 0.0
        %765 = vmatprep.subr.mxu0 0.0
        %766 = vmatpush2.msra.mxu0 0.0
        %767 = vmatprep.subr.mxu0 0.0
        %768 = vmatpush2.msra.mxu0 0.0
        %769 = vmatprep.subr.mxu0 0.0
        %770 = vmatpush2.msra.mxu0 0.0
        %771 = vmatprep.subr.mxu0 0.0
        %772 = vmatpush2.msra.mxu0 0.0
        %773 = vmatprep.subr.mxu0 0.0
        %774 = vmatpush2.msra.mxu0 0.0
        %775 = vmatprep.subr.mxu0 0.0
        %776 = vmatpush2.msra.mxu0 0.0
        %777 = vmatprep.subr.mxu0 0.0
        %778 = vmatpush2.msra.mxu0 0.0
        %779 = vmatprep.subr.mxu0 0.0
        %780 = vmatpush2.msra.mxu0 0.0
        %781 = vmatprep.subr.mxu0 0.0
        %782 = vmatpush2.msra.mxu0 0.0
        %783 = vmatprep.subr.mxu0 0.0
        %784 = vmatpush2.msra.mxu0 0.0
        %785 = vmatprep.subr.mxu0 0.0
        %786 = vmatpush2.msra.mxu0 0.0
        %787 = vmatprep.subr.mxu0 0.0
        %788 = vmatpush2.msra.mxu0 0.0
        %789 = vmatprep.mubr.f32.mxu0 0.0
        %790 = vmatmul.mubr.f32.gmra.mxu0 %v723
        %v791 = vpop.f32.mrf.mxu0
        %v792 = vadd.f32 0.0, %v791
        %v793 = vpop.f32.mrf.mxu0
        %794 = vdwg.mxu0
        %795 = vrot.lane.b32.xlu0 %v375, 64
        %v796 = vpop.permute.xlu0 %795
        %v799 = vsel %vm387, %v633, 0
        %801 = vmatprep.subr.mxu0 0.0
        %802 = vmatpush1.msra.mxu0 0.0
        %803 = vmatprep.subr.mxu0 0.0
        %804 = vmatpush1.msra.mxu0 0.0
        %805 = vmatprep.subr.mxu0 0.0
        %806 = vmatpush1.msra.mxu0 0.0
        %807 = vmatprep.subr.mxu0 0.0
        %808 = vmatpush1.msra.mxu0 0.0
        %809 = vmatprep.subr.mxu0 0.0
        %810 = vmatpush1.msra.mxu0 0.0
        %811 = vmatprep.subr.mxu0 0.0
        %812 = vmatpush1.msra.mxu0 0.0
        %813 = vmatprep.subr.mxu0 0.0
        %814 = vmatpush1.msra.mxu0 0.0
        %815 = vmatprep.subr.mxu0 0.0
        %816 = vmatpush1.msra.mxu0 0.0
        %817 = vmatprep.subr.mxu0 0.0
        %818 = vmatpush1.msra.mxu0 0.0
        %819 = vmatprep.subr.mxu0 0.0
        %820 = vmatpush1.msra.mxu0 0.0
        %821 = vmatprep.subr.mxu0 0.0
        %822 = vmatpush1.msra.mxu0 0.0
        %823 = vmatprep.subr.mxu0 0.0
        %824 = vmatpush1.msra.mxu0 0.0
        %825 = vmatprep.subr.mxu0 0.0
        %826 = vmatpush1.msra.mxu0 0.0
        %827 = vmatprep.subr.mxu0 0.0
        %828 = vmatpush1.msra.mxu0 0.0
        %829 = vmatprep.subr.mxu0 0.0
        %830 = vmatpush1.msra.mxu0 0.0
        %831 = vmatprep.subr.mxu0 0.0
        %832 = vmatpush1.msra.mxu0 %v796
        %833 = vmatprep.subr.mxu0 0.0
        %834 = vmatpush2.msra.mxu0 0.0
        %835 = vmatprep.subr.mxu0 0.0
        %836 = vmatpush2.msra.mxu0 0.0
        %837 = vmatprep.subr.mxu0 0.0
        %838 = vmatpush2.msra.mxu0 0.0
        %839 = vmatprep.subr.mxu0 0.0
        %840 = vmatpush2.msra.mxu0 0.0
        %841 = vmatprep.subr.mxu0 0.0
        %842 = vmatpush2.msra.mxu0 0.0
        %843 = vmatprep.subr.mxu0 0.0
        %844 = vmatpush2.msra.mxu0 0.0
        %845 = vmatprep.subr.mxu0 0.0
        %846 = vmatpush2.msra.mxu0 0.0
        %847 = vmatprep.subr.mxu0 0.0
        %848 = vmatpush2.msra.mxu0 0.0
        %849 = vmatprep.subr.mxu0 0.0
        %850 = vmatpush2.msra.mxu0 0.0
        %851 = vmatprep.subr.mxu0 0.0
        %852 = vmatpush2.msra.mxu0 0.0
        %853 = vmatprep.subr.mxu0 0.0
        %854 = vmatpush2.msra.mxu0 0.0
        %855 = vmatprep.subr.mxu0 0.0
        %856 = vmatpush2.msra.mxu0 0.0
        %857 = vmatprep.subr.mxu0 0.0
        %858 = vmatpush2.msra.mxu0 0.0
        %859 = vmatprep.subr.mxu0 0.0
        %860 = vmatpush2.msra.mxu0 0.0
        %861 = vmatprep.subr.mxu0 0.0
        %862 = vmatpush2.msra.mxu0 0.0
        %863 = vmatprep.subr.mxu0 0.0
        %864 = vmatpush2.msra.mxu0 0.0
        %865 = vmatprep.mubr.f32.mxu0 0.0
        %866 = vmatmul.mubr.f32.gmra.mxu0 %v799
        %v867 = vpop.f32.mrf.mxu0
        %v868 = vadd.f32 0.0, %v867
        %v869 = vpop.f32.mrf.mxu0
        %870 = vdwg.mxu0
        %v871 = vrcp.pop %v636
        %v872 = vrcp.pop %v639
        %v873 = vrcp.pop %v642
        %v874 = vmul.f32 %v716, %v871
        %v875 = vmul.f32 %v792, %v872
        %v876 = vmul.f32 %v868, %v873
        %877 = vst.msk [vmem:[#allocation2] sm:$0xff] %vm387, %v874
        %878 = vst.msk [vmem:[#allocation2 + $0x8] sm:$0xff] %vm387, %v875
        %879 = vst.msk [vmem:[#allocation2 + $0x10] sm:$0xff] %vm387, %v876
        %880 = vrot.lane.b32.xlu0 %v365, 120
        %v881 = vpop.permute.xlu0 %880
        %882 = vrot.lane.b32.xlu0 %v365, 88
        %v883 = vpop.permute.xlu0 %882
        %v884 = vsel %vm387, %v881, 0
        %v886 = vsel %vm387, %v883, 0
        %888 = vmatprep.subr.mxu0 0.0
        %889 = vmatpush1.xpose.msra.mxu0 0.0
        %890 = vmatprep.subr.mxu0 0.0
        %891 = vmatpush1.xpose.msra.mxu0 0.0
        %892 = vmatprep.subr.mxu0 0.0
        %893 = vmatpush1.xpose.msra.mxu0 0.0
        %894 = vmatprep.subr.mxu0 0.0
        %895 = vmatpush1.xpose.msra.mxu0 0.0
        %896 = vmatprep.subr.mxu0 0.0
        %897 = vmatpush1.xpose.msra.mxu0 0.0
        %898 = vmatprep.subr.mxu0 0.0
        %899 = vmatpush1.xpose.msra.mxu0 0.0
        %900 = vmatprep.subr.mxu0 0.0
        %901 = vmatpush1.xpose.msra.mxu0 0.0
        %902 = vmatprep.subr.mxu0 0.0
        %903 = vmatpush1.xpose.msra.mxu0 0.0
        %904 = vmatprep.subr.mxu0 0.0
        %905 = vmatpush1.xpose.msra.mxu0 0.0
        %906 = vmatprep.subr.mxu0 0.0
        %907 = vmatpush1.xpose.msra.mxu0 0.0
        %908 = vmatprep.subr.mxu0 0.0
        %909 = vmatpush1.xpose.msra.mxu0 0.0
        %910 = vmatprep.subr.mxu0 0.0
        %911 = vmatpush1.xpose.msra.mxu0 0.0
        %912 = vmatprep.subr.mxu0 0.0
        %913 = vmatpush1.xpose.msra.mxu0 0.0
        %914 = vmatprep.subr.mxu0 0.0
        %915 = vmatpush1.xpose.msra.mxu0 0.0
        %916 = vmatprep.subr.mxu0 0.0
        %917 = vmatpush1.xpose.msra.mxu0 0.0
        %918 = vmatprep.subr.mxu0 0.0
        %919 = vmatpush1.xpose.msra.mxu0 %v886
        %920 = vmatprep.subr.mxu0 0.0
        %921 = vmatpush2.xpose.msra.mxu0 0.0
        %922 = vmatprep.subr.mxu0 0.0
        %923 = vmatpush2.xpose.msra.mxu0 0.0
        %924 = vmatprep.subr.mxu0 0.0
        %925 = vmatpush2.xpose.msra.mxu0 0.0
        %926 = vmatprep.subr.mxu0 0.0
        %927 = vmatpush2.xpose.msra.mxu0 0.0
        %928 = vmatprep.subr.mxu0 0.0
        %929 = vmatpush2.xpose.msra.mxu0 0.0
        %930 = vmatprep.subr.mxu0 0.0
        %931 = vmatpush2.xpose.msra.mxu0 0.0
        %932 = vmatprep.subr.mxu0 0.0
        %933 = vmatpush2.xpose.msra.mxu0 0.0
        %934 = vmatprep.subr.mxu0 0.0
        %935 = vmatpush2.xpose.msra.mxu0 0.0
        %936 = vmatprep.subr.mxu0 0.0
        %937 = vmatpush2.xpose.msra.mxu0 0.0
        %938 = vmatprep.subr.mxu0 0.0
        %939 = vmatpush2.xpose.msra.mxu0 0.0
        %940 = vmatprep.subr.mxu0 0.0
        %941 = vmatpush2.xpose.msra.mxu0 0.0
        %942 = vmatprep.subr.mxu0 0.0
        %943 = vmatpush2.xpose.msra.mxu0 0.0
        %944 = vmatprep.subr.mxu0 0.0
        %945 = vmatpush2.xpose.msra.mxu0 0.0
        %946 = vmatprep.subr.mxu0 0.0
        %947 = vmatpush2.xpose.msra.mxu0 0.0
        %948 = vmatprep.subr.mxu0 0.0
        %949 = vmatpush2.xpose.msra.mxu0 0.0
        %950 = vmatprep.subr.mxu0 0.0
        %951 = vmatpush2.xpose.msra.mxu0 0.0
        %952 = vmatprep.mubr.f32.mxu0 0.0
        %953 = vmatmul.mubr.f32.gmra.mxu0 %v884
        %v954 = vpop.f32.mrf.mxu0
        %v955 = vadd.f32 %v383, %v954
        %v956 = vpop.f32.mrf.mxu0
        %957 = vdwg.mxu0
        %958 = vrot.lane.b32.xlu0 %v370, 120
        %v959 = vpop.permute.xlu0 %958
        %960 = vrot.lane.b32.xlu0 %v370, 88
        %v961 = vpop.permute.xlu0 %960
        %v962 = vsel %vm387, %v959, 0
        %v964 = vsel %vm387, %v961, 0
        %966 = vmatprep.subr.mxu0 0.0
        %967 = vmatpush1.xpose.msra.mxu0 0.0
        %968 = vmatprep.subr.mxu0 0.0
        %969 = vmatpush1.xpose.msra.mxu0 0.0
        %970 = vmatprep.subr.mxu0 0.0
        %971 = vmatpush1.xpose.msra.mxu0 0.0
        %972 = vmatprep.subr.mxu0 0.0
        %973 = vmatpush1.xpose.msra.mxu0 0.0
        %974 = vmatprep.subr.mxu0 0.0
        %975 = vmatpush1.xpose.msra.mxu0 0.0
        %976 = vmatprep.subr.mxu0 0.0
        %977 = vmatpush1.xpose.msra.mxu0 0.0
        %978 = vmatprep.subr.mxu0 0.0
        %979 = vmatpush1.xpose.msra.mxu0 0.0
        %980 = vmatprep.subr.mxu0 0.0
        %981 = vmatpush1.xpose.msra.mxu0 0.0
        %982 = vmatprep.subr.mxu0 0.0
        %983 = vmatpush1.xpose.msra.mxu0 0.0
        %984 = vmatprep.subr.mxu0 0.0
        %985 = vmatpush1.xpose.msra.mxu0 0.0
        %986 = vmatprep.subr.mxu0 0.0
        %987 = vmatpush1.xpose.msra.mxu0 0.0
        %988 = vmatprep.subr.mxu0 0.0
        %989 = vmatpush1.xpose.msra.mxu0 0.0
        %990 = vmatprep.subr.mxu0 0.0
        %991 = vmatpush1.xpose.msra.mxu0 0.0
        %992 = vmatprep.subr.mxu0 0.0
        %993 = vmatpush1.xpose.msra.mxu0 0.0
        %994 = vmatprep.subr.mxu0 0.0
        %995 = vmatpush1.xpose.msra.mxu0 0.0
        %996 = vmatprep.subr.mxu0 0.0
        %997 = vmatpush1.xpose.msra.mxu0 %v964
        %998 = vmatprep.subr.mxu0 0.0
        %999 = vmatpush2.xpose.msra.mxu0 0.0
        %1000 = vmatprep.subr.mxu0 0.0
        %1001 = vmatpush2.xpose.msra.mxu0 0.0
        %1002 = vmatprep.subr.mxu0 0.0
        %1003 = vmatpush2.xpose.msra.mxu0 0.0
        %1004 = vmatprep.subr.mxu0 0.0
        %1005 = vmatpush2.xpose.msra.mxu0 0.0
        %1006 = vmatprep.subr.mxu0 0.0
        %1007 = vmatpush2.xpose.msra.mxu0 0.0
        %1008 = vmatprep.subr.mxu0 0.0
        %1009 = vmatpush2.xpose.msra.mxu0 0.0
        %1010 = vmatprep.subr.mxu0 0.0
        %1011 = vmatpush2.xpose.msra.mxu0 0.0
        %1012 = vmatprep.subr.mxu0 0.0
        %1013 = vmatpush2.xpose.msra.mxu0 0.0
        %1014 = vmatprep.subr.mxu0 0.0
        %1015 = vmatpush2.xpose.msra.mxu0 0.0
        %1016 = vmatprep.subr.mxu0 0.0
        %1017 = vmatpush2.xpose.msra.mxu0 0.0
        %1018 = vmatprep.subr.mxu0 0.0
        %1019 = vmatpush2.xpose.msra.mxu0 0.0
        %1020 = vmatprep.subr.mxu0 0.0
        %1021 = vmatpush2.xpose.msra.mxu0 0.0
        %1022 = vmatprep.subr.mxu0 0.0
        %1023 = vmatpush2.xpose.msra.mxu0 0.0
        %1024 = vmatprep.subr.mxu0 0.0
        %1025 = vmatpush2.xpose.msra.mxu0 0.0
        %1026 = vmatprep.subr.mxu0 0.0
        %1027 = vmatpush2.xpose.msra.mxu0 0.0
        %1028 = vmatprep.subr.mxu0 0.0
        %1029 = vmatpush2.xpose.msra.mxu0 0.0
        %1030 = vmatprep.mubr.f32.mxu0 0.0
        %1031 = vmatmul.mubr.f32.gmra.mxu0 %v962
        %v1032 = vpop.f32.mrf.mxu0
        %v1033 = vadd.f32 %v383, %v1032
        %v1034 = vpop.f32.mrf.mxu0
        %1035 = vdwg.mxu0
        %1036 = vrot.lane.b32.xlu0 %v375, 120
        %v1037 = vpop.permute.xlu0 %1036
        %1038 = vrot.lane.b32.xlu0 %v375, 88
        %v1039 = vpop.permute.xlu0 %1038
        %v1040 = vsel %vm387, %v1037, 0
        %v1042 = vsel %vm387, %v1039, 0
        %1044 = vmatprep.subr.mxu0 0.0
        %1045 = vmatpush1.xpose.msra.mxu0 0.0
        %1046 = vmatprep.subr.mxu0 0.0
        %1047 = vmatpush1.xpose.msra.mxu0 0.0
        %1048 = vmatprep.subr.mxu0 0.0
        %1049 = vmatpush1.xpose.msra.mxu0 0.0
        %1050 = vmatprep.subr.mxu0 0.0
        %1051 = vmatpush1.xpose.msra.mxu0 0.0
        %1052 = vmatprep.subr.mxu0 0.0
        %1053 = vmatpush1.xpose.msra.mxu0 0.0
        %1054 = vmatprep.subr.mxu0 0.0
        %1055 = vmatpush1.xpose.msra.mxu0 0.0
        %1056 = vmatprep.subr.mxu0 0.0
        %1057 = vmatpush1.xpose.msra.mxu0 0.0
        %1058 = vmatprep.subr.mxu0 0.0
        %1059 = vmatpush1.xpose.msra.mxu0 0.0
        %1060 = vmatprep.subr.mxu0 0.0
        %1061 = vmatpush1.xpose.msra.mxu0 0.0
        %1062 = vmatprep.subr.mxu0 0.0
        %1063 = vmatpush1.xpose.msra.mxu0 0.0
        %1064 = vmatprep.subr.mxu0 0.0
        %1065 = vmatpush1.xpose.msra.mxu0 0.0
        %1066 = vmatprep.subr.mxu0 0.0
        %1067 = vmatpush1.xpose.msra.mxu0 0.0
        %1068 = vmatprep.subr.mxu0 0.0
        %1069 = vmatpush1.xpose.msra.mxu0 0.0
        %1070 = vmatprep.subr.mxu0 0.0
        %1071 = vmatpush1.xpose.msra.mxu0 0.0
        %1072 = vmatprep.subr.mxu0 0.0
        %1073 = vmatpush1.xpose.msra.mxu0 0.0
        %1074 = vmatprep.subr.mxu0 0.0
        %1075 = vmatpush1.xpose.msra.mxu0 %v1042
        %1076 = vmatprep.subr.mxu0 0.0
        %1077 = vmatpush2.xpose.msra.mxu0 0.0
        %1078 = vmatprep.subr.mxu0 0.0
        %1079 = vmatpush2.xpose.msra.mxu0 0.0
        %1080 = vmatprep.subr.mxu0 0.0
        %1081 = vmatpush2.xpose.msra.mxu0 0.0
        %1082 = vmatprep.subr.mxu0 0.0
        %1083 = vmatpush2.xpose.msra.mxu0 0.0
        %1084 = vmatprep.subr.mxu0 0.0
        %1085 = vmatpush2.xpose.msra.mxu0 0.0
        %1086 = vmatprep.subr.mxu0 0.0
        %1087 = vmatpush2.xpose.msra.mxu0 0.0
        %1088 = vmatprep.subr.mxu0 0.0
        %1089 = vmatpush2.xpose.msra.mxu0 0.0
        %1090 = vmatprep.subr.mxu0 0.0
        %1091 = vmatpush2.xpose.msra.mxu0 0.0
        %1092 = vmatprep.subr.mxu0 0.0
        %1093 = vmatpush2.xpose.msra.mxu0 0.0
        %1094 = vmatprep.subr.mxu0 0.0
        %1095 = vmatpush2.xpose.msra.mxu0 0.0
        %1096 = vmatprep.subr.mxu0 0.0
        %1097 = vmatpush2.xpose.msra.mxu0 0.0
        %1098 = vmatprep.subr.mxu0 0.0
        %1099 = vmatpush2.xpose.msra.mxu0 0.0
        %1100 = vmatprep.subr.mxu0 0.0
        %1101 = vmatpush2.xpose.msra.mxu0 0.0
        %1102 = vmatprep.subr.mxu0 0.0
        %1103 = vmatpush2.xpose.msra.mxu0 0.0
        %1104 = vmatprep.subr.mxu0 0.0
        %1105 = vmatpush2.xpose.msra.mxu0 0.0
        %1106 = vmatprep.subr.mxu0 0.0
        %1107 = vmatpush2.xpose.msra.mxu0 0.0
        %1108 = vmatprep.mubr.f32.mxu0 0.0
        %1109 = vmatmul.mubr.f32.gmra.mxu0 %v1040
        %v1110 = vpop.f32.mrf.mxu0
        %v1111 = vadd.f32 %v383, %v1110
        %v1112 = vpop.f32.mrf.mxu0
        %1113 = vdwg.mxu0
        %v1114 = vsel %vm387, %v955, -inf
        %1115 = vmax.xlane.f32.xlu0 %v1114
        %v1116 = vpop.xlane.xlu0 %1115
        %v1117 = vsel %vm387, %v1033, -inf
        %1118 = vmax.xlane.f32.xlu0 %v1117
        %v1119 = vpop.xlane.xlu0 %1118
        %v1120 = vsel %vm387, %v1111, -inf
        %1121 = vmax.xlane.f32.xlu0 %v1120
        %v1122 = vpop.xlane.xlu0 %1121
        %v1123 = vsub.f32 %v955, %v1116
        %v1124 = vsub.f32 %v1033, %v1119
        %v1125 = vsub.f32 %v1111, %v1122
        %v1126 = vmul.f32 %v1123, 1.442695
        %v1127 = vpow.pop %v1126
        %v1128 = vmul.f32 %v1124, 1.442695
        %v1129 = vpow.pop %v1128
        %v1130 = vmul.f32 %v1125, 1.442695
        %v1131 = vpow.pop %v1130
        %v1132 = vsel %vm387, %v1127, 0.0
        %1133 = vadd.xlane.f32.xlu0 %v1132
        %v1134 = vpop.xlane.xlu0 %1133
        %v1135 = vsel %vm387, %v1129, 0.0
        %1136 = vadd.xlane.f32.xlu0 %v1135
        %v1137 = vpop.xlane.xlu0 %1136
        %v1138 = vsel %vm387, %v1131, 0.0
        %1139 = vadd.xlane.f32.xlu0 %v1138
        %v1140 = vpop.xlane.xlu0 %1139
        %1141 = vrot.lane.b32.xlu0 %v365, 56
        %v1142 = vpop.permute.xlu0 %1141
        %v1145 = vsel %vm387, %v1127, 0
        %1147 = vmatprep.subr.mxu0 0.0
        %1148 = vmatpush1.msra.mxu0 0.0
        %1149 = vmatprep.subr.mxu0 0.0
        %1150 = vmatpush1.msra.mxu0 0.0
        %1151 = vmatprep.subr.mxu0 0.0
        %1152 = vmatpush1.msra.mxu0 0.0
        %1153 = vmatprep.subr.mxu0 0.0
        %1154 = vmatpush1.msra.mxu0 0.0
        %1155 = vmatprep.subr.mxu0 0.0
        %1156 = vmatpush1.msra.mxu0 0.0
        %1157 = vmatprep.subr.mxu0 0.0
        %1158 = vmatpush1.msra.mxu0 0.0
        %1159 = vmatprep.subr.mxu0 0.0
        %1160 = vmatpush1.msra.mxu0 0.0
        %1161 = vmatprep.subr.mxu0 0.0
        %1162 = vmatpush1.msra.mxu0 0.0
        %1163 = vmatprep.subr.mxu0 0.0
        %1164 = vmatpush1.msra.mxu0 0.0
        %1165 = vmatprep.subr.mxu0 0.0
        %1166 = vmatpush1.msra.mxu0 0.0
        %1167 = vmatprep.subr.mxu0 0.0
        %1168 = vmatpush1.msra.mxu0 0.0
        %1169 = vmatprep.subr.mxu0 0.0
        %1170 = vmatpush1.msra.mxu0 0.0
        %1171 = vmatprep.subr.mxu0 0.0
        %1172 = vmatpush1.msra.mxu0 0.0
        %1173 = vmatprep.subr.mxu0 0.0
        %1174 = vmatpush1.msra.mxu0 0.0
        %1175 = vmatprep.subr.mxu0 0.0
        %1176 = vmatpush1.msra.mxu0 0.0
        %1177 = vmatprep.subr.mxu0 0.0
        %1178 = vmatpush1.msra.mxu0 %v1142
        %1179 = vmatprep.subr.mxu0 0.0
        %1180 = vmatpush2.msra.mxu0 0.0
        %1181 = vmatprep.subr.mxu0 0.0
        %1182 = vmatpush2.msra.mxu0 0.0
        %1183 = vmatprep.subr.mxu0 0.0
        %1184 = vmatpush2.msra.mxu0 0.0
        %1185 = vmatprep.subr.mxu0 0.0
        %1186 = vmatpush2.msra.mxu0 0.0
        %1187 = vmatprep.subr.mxu0 0.0
        %1188 = vmatpush2.msra.mxu0 0.0
        %1189 = vmatprep.subr.mxu0 0.0
        %1190 = vmatpush2.msra.mxu0 0.0
        %1191 = vmatprep.subr.mxu0 0.0
        %1192 = vmatpush2.msra.mxu0 0.0
        %1193 = vmatprep.subr.mxu0 0.0
        %1194 = vmatpush2.msra.mxu0 0.0
        %1195 = vmatprep.subr.mxu0 0.0
        %1196 = vmatpush2.msra.mxu0 0.0
        %1197 = vmatprep.subr.mxu0 0.0
        %1198 = vmatpush2.msra.mxu0 0.0
        %1199 = vmatprep.subr.mxu0 0.0
        %1200 = vmatpush2.msra.mxu0 0.0
        %1201 = vmatprep.subr.mxu0 0.0
        %1202 = vmatpush2.msra.mxu0 0.0
        %1203 = vmatprep.subr.mxu0 0.0
        %1204 = vmatpush2.msra.mxu0 0.0
        %1205 = vmatprep.subr.mxu0 0.0
        %1206 = vmatpush2.msra.mxu0 0.0
        %1207 = vmatprep.subr.mxu0 0.0
        %1208 = vmatpush2.msra.mxu0 0.0
        %1209 = vmatprep.subr.mxu0 0.0
        %1210 = vmatpush2.msra.mxu0 0.0
        %1211 = vmatprep.mubr.f32.mxu0 0.0
        %1212 = vmatmul.mubr.f32.gmra.mxu0 %v1145
        %v1213 = vpop.f32.mrf.mxu0
        %v1214 = vadd.f32 0.0, %v1213
        %v1215 = vpop.f32.mrf.mxu0
        %1216 = vdwg.mxu0
        %1217 = vrot.lane.b32.xlu0 %v370, 56
        %v1218 = vpop.permute.xlu0 %1217
        %v1221 = vsel %vm387, %v1129, 0
        %1223 = vmatprep.subr.mxu0 0.0
        %1224 = vmatpush1.msra.mxu0 0.0
        %1225 = vmatprep.subr.mxu0 0.0
        %1226 = vmatpush1.msra.mxu0 0.0
        %1227 = vmatprep.subr.mxu0 0.0
        %1228 = vmatpush1.msra.mxu0 0.0
        %1229 = vmatprep.subr.mxu0 0.0
        %1230 = vmatpush1.msra.mxu0 0.0
        %1231 = vmatprep.subr.mxu0 0.0
        %1232 = vmatpush1.msra.mxu0 0.0
        %1233 = vmatprep.subr.mxu0 0.0
        %1234 = vmatpush1.msra.mxu0 0.0
        %1235 = vmatprep.subr.mxu0 0.0
        %1236 = vmatpush1.msra.mxu0 0.0
        %1237 = vmatprep.subr.mxu0 0.0
        %1238 = vmatpush1.msra.mxu0 0.0
        %1239 = vmatprep.subr.mxu0 0.0
        %1240 = vmatpush1.msra.mxu0 0.0
        %1241 = vmatprep.subr.mxu0 0.0
        %1242 = vmatpush1.msra.mxu0 0.0
        %1243 = vmatprep.subr.mxu0 0.0
        %1244 = vmatpush1.msra.mxu0 0.0
        %1245 = vmatprep.subr.mxu0 0.0
        %1246 = vmatpush1.msra.mxu0 0.0
        %1247 = vmatprep.subr.mxu0 0.0
        %1248 = vmatpush1.msra.mxu0 0.0
        %1249 = vmatprep.subr.mxu0 0.0
        %1250 = vmatpush1.msra.mxu0 0.0
        %1251 = vmatprep.subr.mxu0 0.0
        %1252 = vmatpush1.msra.mxu0 0.0
        %1253 = vmatprep.subr.mxu0 0.0
        %1254 = vmatpush1.msra.mxu0 %v1218
        %1255 = vmatprep.subr.mxu0 0.0
        %1256 = vmatpush2.msra.mxu0 0.0
        %1257 = vmatprep.subr.mxu0 0.0
        %1258 = vmatpush2.msra.mxu0 0.0
        %1259 = vmatprep.subr.mxu0 0.0
        %1260 = vmatpush2.msra.mxu0 0.0
        %1261 = vmatprep.subr.mxu0 0.0
        %1262 = vmatpush2.msra.mxu0 0.0
        %1263 = vmatprep.subr.mxu0 0.0
        %1264 = vmatpush2.msra.mxu0 0.0
        %1265 = vmatprep.subr.mxu0 0.0
        %1266 = vmatpush2.msra.mxu0 0.0
        %1267 = vmatprep.subr.mxu0 0.0
        %1268 = vmatpush2.msra.mxu0 0.0
        %1269 = vmatprep.subr.mxu0 0.0
        %1270 = vmatpush2.msra.mxu0 0.0
        %1271 = vmatprep.subr.mxu0 0.0
        %1272 = vmatpush2.msra.mxu0 0.0
        %1273 = vmatprep.subr.mxu0 0.0
        %1274 = vmatpush2.msra.mxu0 0.0
        %1275 = vmatprep.subr.mxu0 0.0
        %1276 = vmatpush2.msra.mxu0 0.0
        %1277 = vmatprep.subr.mxu0 0.0
        %1278 = vmatpush2.msra.mxu0 0.0
        %1279 = vmatprep.subr.mxu0 0.0
        %1280 = vmatpush2.msra.mxu0 0.0
        %1281 = vmatprep.subr.mxu0 0.0
        %1282 = vmatpush2.msra.mxu0 0.0
        %1283 = vmatprep.subr.mxu0 0.0
        %1284 = vmatpush2.msra.mxu0 0.0
        %1285 = vmatprep.subr.mxu0 0.0
        %1286 = vmatpush2.msra.mxu0 0.0
        %1287 = vmatprep.mubr.f32.mxu0 0.0
        %1288 = vmatmul.mubr.f32.gmra.mxu0 %v1221
        %v1289 = vpop.f32.mrf.mxu0
        %v1290 = vadd.f32 0.0, %v1289
        %v1291 = vpop.f32.mrf.mxu0
        %1292 = vdwg.mxu0
        %1293 = vrot.lane.b32.xlu0 %v375, 56
        %v1294 = vpop.permute.xlu0 %1293
        %v1297 = vsel %vm387, %v1131, 0
        %1299 = vmatprep.subr.mxu0 0.0
        %1300 = vmatpush1.msra.mxu0 0.0
        %1301 = vmatprep.subr.mxu0 0.0
        %1302 = vmatpush1.msra.mxu0 0.0
        %1303 = vmatprep.subr.mxu0 0.0
        %1304 = vmatpush1.msra.mxu0 0.0
        %1305 = vmatprep.subr.mxu0 0.0
        %1306 = vmatpush1.msra.mxu0 0.0
        %1307 = vmatprep.subr.mxu0 0.0
        %1308 = vmatpush1.msra.mxu0 0.0
        %1309 = vmatprep.subr.mxu0 0.0
        %1310 = vmatpush1.msra.mxu0 0.0
        %1311 = vmatprep.subr.mxu0 0.0
        %1312 = vmatpush1.msra.mxu0 0.0
        %1313 = vmatprep.subr.mxu0 0.0
        %1314 = vmatpush1.msra.mxu0 0.0
        %1315 = vmatprep.subr.mxu0 0.0
        %1316 = vmatpush1.msra.mxu0 0.0
        %1317 = vmatprep.subr.mxu0 0.0
        %1318 = vmatpush1.msra.mxu0 0.0
        %1319 = vmatprep.subr.mxu0 0.0
        %1320 = vmatpush1.msra.mxu0 0.0
        %1321 = vmatprep.subr.mxu0 0.0
        %1322 = vmatpush1.msra.mxu0 0.0
        %1323 = vmatprep.subr.mxu0 0.0
        %1324 = vmatpush1.msra.mxu0 0.0
        %1325 = vmatprep.subr.mxu0 0.0
        %1326 = vmatpush1.msra.mxu0 0.0
        %1327 = vmatprep.subr.mxu0 0.0
        %1328 = vmatpush1.msra.mxu0 0.0
        %1329 = vmatprep.subr.mxu0 0.0
        %1330 = vmatpush1.msra.mxu0 %v1294
        %1331 = vmatprep.subr.mxu0 0.0
        %1332 = vmatpush2.msra.mxu0 0.0
        %1333 = vmatprep.subr.mxu0 0.0
        %1334 = vmatpush2.msra.mxu0 0.0
        %1335 = vmatprep.subr.mxu0 0.0
        %1336 = vmatpush2.msra.mxu0 0.0
        %1337 = vmatprep.subr.mxu0 0.0
        %1338 = vmatpush2.msra.mxu0 0.0
        %1339 = vmatprep.subr.mxu0 0.0
        %1340 = vmatpush2.msra.mxu0 0.0
        %1341 = vmatprep.subr.mxu0 0.0
        %1342 = vmatpush2.msra.mxu0 0.0
        %1343 = vmatprep.subr.mxu0 0.0
        %1344 = vmatpush2.msra.mxu0 0.0
        %1345 = vmatprep.subr.mxu0 0.0
        %1346 = vmatpush2.msra.mxu0 0.0
        %1347 = vmatprep.subr.mxu0 0.0
        %1348 = vmatpush2.msra.mxu0 0.0
        %1349 = vmatprep.subr.mxu0 0.0
        %1350 = vmatpush2.msra.mxu0 0.0
        %1351 = vmatprep.subr.mxu0 0.0
        %1352 = vmatpush2.msra.mxu0 0.0
        %1353 = vmatprep.subr.mxu0 0.0
        %1354 = vmatpush2.msra.mxu0 0.0
        %1355 = vmatprep.subr.mxu0 0.0
        %1356 = vmatpush2.msra.mxu0 0.0
        %1357 = vmatprep.subr.mxu0 0.0
        %1358 = vmatpush2.msra.mxu0 0.0
        %1359 = vmatprep.subr.mxu0 0.0
        %1360 = vmatpush2.msra.mxu0 0.0
        %1361 = vmatprep.subr.mxu0 0.0
        %1362 = vmatpush2.msra.mxu0 0.0
        %1363 = vmatprep.mubr.f32.mxu0 0.0
        %1364 = vmatmul.mubr.f32.gmra.mxu0 %v1297
        %v1365 = vpop.f32.mrf.mxu0
        %v1366 = vadd.f32 0.0, %v1365
        %v1367 = vpop.f32.mrf.mxu0
        %1368 = vdwg.mxu0
        %v1369 = vrcp.pop %v1134
        %v1370 = vrcp.pop %v1137
        %v1371 = vrcp.pop %v1140
        %v1372 = vmul.f32 %v1214, %v1369
        %v1373 = vmul.f32 %v1290, %v1370
        %v1374 = vmul.f32 %v1366, %v1371
        %1378 = vrot.lane.b32.xlu0 %v1372, 8
        %v1379 = vpop.permute.xlu0 %1378
        %1380 = vrot.lane.b32.xlu0 %v1373, 8
        %v1381 = vpop.permute.xlu0 %1380
        %1382 = vrot.lane.b32.xlu0 %v1374, 8
        %v1383 = vpop.permute.xlu0 %1382
        %vm1387 = vcmask 130112
        %1388 = vst.msk [vmem:[#allocation2] sm:$0xff] %vm1387, %v1379
        %1389 = vst.msk [vmem:[#allocation2 + $0x8] sm:$0xff] %vm1387, %v1381
        %1390 = vst.msk [vmem:[#allocation2 + $0x10] sm:$0xff] %vm1387, %v1383
        %1391 = vrot.lane.b32.xlu0 %v365, 112
        %v1392 = vpop.permute.xlu0 %1391
        %1393 = vrot.lane.b32.xlu0 %v365, 80
        %v1394 = vpop.permute.xlu0 %1393
        %v1395 = vsel %vm387, %v1392, 0
        %v1397 = vsel %vm387, %v1394, 0
        %1399 = vmatprep.subr.mxu0 0.0
        %1400 = vmatpush1.xpose.msra.mxu0 0.0
        %1401 = vmatprep.subr.mxu0 0.0
        %1402 = vmatpush1.xpose.msra.mxu0 0.0
        %1403 = vmatprep.subr.mxu0 0.0
        %1404 = vmatpush1.xpose.msra.mxu0 0.0
        %1405 = vmatprep.subr.mxu0 0.0
        %1406 = vmatpush1.xpose.msra.mxu0 0.0
        %1407 = vmatprep.subr.mxu0 0.0
        %1408 = vmatpush1.xpose.msra.mxu0 0.0
        %1409 = vmatprep.subr.mxu0 0.0
        %1410 = vmatpush1.xpose.msra.mxu0 0.0
        %1411 = vmatprep.subr.mxu0 0.0
        %1412 = vmatpush1.xpose.msra.mxu0 0.0
        %1413 = vmatprep.subr.mxu0 0.0
        %1414 = vmatpush1.xpose.msra.mxu0 0.0
        %1415 = vmatprep.subr.mxu0 0.0
        %1416 = vmatpush1.xpose.msra.mxu0 0.0
        %1417 = vmatprep.subr.mxu0 0.0
        %1418 = vmatpush1.xpose.msra.mxu0 0.0
        %1419 = vmatprep.subr.mxu0 0.0
        %1420 = vmatpush1.xpose.msra.mxu0 0.0
        %1421 = vmatprep.subr.mxu0 0.0
        %1422 = vmatpush1.xpose.msra.mxu0 0.0
        %1423 = vmatprep.subr.mxu0 0.0
        %1424 = vmatpush1.xpose.msra.mxu0 0.0
        %1425 = vmatprep.subr.mxu0 0.0
        %1426 = vmatpush1.xpose.msra.mxu0 0.0
        %1427 = vmatprep.subr.mxu0 0.0
        %1428 = vmatpush1.xpose.msra.mxu0 0.0
        %1429 = vmatprep.subr.mxu0 0.0
        %1430 = vmatpush1.xpose.msra.mxu0 %v1397
        %1431 = vmatprep.subr.mxu0 0.0
        %1432 = vmatpush2.xpose.msra.mxu0 0.0
        %1433 = vmatprep.subr.mxu0 0.0
        %1434 = vmatpush2.xpose.msra.mxu0 0.0
        %1435 = vmatprep.subr.mxu0 0.0
        %1436 = vmatpush2.xpose.msra.mxu0 0.0
        %1437 = vmatprep.subr.mxu0 0.0
        %1438 = vmatpush2.xpose.msra.mxu0 0.0
        %1439 = vmatprep.subr.mxu0 0.0
        %1440 = vmatpush2.xpose.msra.mxu0 0.0
        %1441 = vmatprep.subr.mxu0 0.0
        %1442 = vmatpush2.xpose.msra.mxu0 0.0
        %1443 = vmatprep.subr.mxu0 0.0
        %1444 = vmatpush2.xpose.msra.mxu0 0.0
        %1445 = vmatprep.subr.mxu0 0.0
        %1446 = vmatpush2.xpose.msra.mxu0 0.0
        %1447 = vmatprep.subr.mxu0 0.0
        %1448 = vmatpush2.xpose.msra.mxu0 0.0
        %1449 = vmatprep.subr.mxu0 0.0
        %1450 = vmatpush2.xpose.msra.mxu0 0.0
        %1451 = vmatprep.subr.mxu0 0.0
        %1452 = vmatpush2.xpose.msra.mxu0 0.0
        %1453 = vmatprep.subr.mxu0 0.0
        %1454 = vmatpush2.xpose.msra.mxu0 0.0
        %1455 = vmatprep.subr.mxu0 0.0
        %1456 = vmatpush2.xpose.msra.mxu0 0.0
        %1457 = vmatprep.subr.mxu0 0.0
        %1458 = vmatpush2.xpose.msra.mxu0 0.0
        %1459 = vmatprep.subr.mxu0 0.0
        %1460 = vmatpush2.xpose.msra.mxu0 0.0
        %1461 = vmatprep.subr.mxu0 0.0
        %1462 = vmatpush2.xpose.msra.mxu0 0.0
        %1463 = vmatprep.mubr.f32.mxu0 0.0
        %1464 = vmatmul.mubr.f32.gmra.mxu0 %v1395
        %v1465 = vpop.f32.mrf.mxu0
        %v1466 = vadd.f32 %v383, %v1465
        %v1467 = vpop.f32.mrf.mxu0
        %1468 = vdwg.mxu0
        %1469 = vrot.lane.b32.xlu0 %v370, 112
        %v1470 = vpop.permute.xlu0 %1469
        %1471 = vrot.lane.b32.xlu0 %v370, 80
        %v1472 = vpop.permute.xlu0 %1471
        %v1473 = vsel %vm387, %v1470, 0
        %v1475 = vsel %vm387, %v1472, 0
        %1477 = vmatprep.subr.mxu0 0.0
        %1478 = vmatpush1.xpose.msra.mxu0 0.0
        %1479 = vmatprep.subr.mxu0 0.0
        %1480 = vmatpush1.xpose.msra.mxu0 0.0
        %1481 = vmatprep.subr.mxu0 0.0
        %1482 = vmatpush1.xpose.msra.mxu0 0.0
        %1483 = vmatprep.subr.mxu0 0.0
        %1484 = vmatpush1.xpose.msra.mxu0 0.0
        %1485 = vmatprep.subr.mxu0 0.0
        %1486 = vmatpush1.xpose.msra.mxu0 0.0
        %1487 = vmatprep.subr.mxu0 0.0
        %1488 = vmatpush1.xpose.msra.mxu0 0.0
        %1489 = vmatprep.subr.mxu0 0.0
        %1490 = vmatpush1.xpose.msra.mxu0 0.0
        %1491 = vmatprep.subr.mxu0 0.0
        %1492 = vmatpush1.xpose.msra.mxu0 0.0
        %1493 = vmatprep.subr.mxu0 0.0
        %1494 = vmatpush1.xpose.msra.mxu0 0.0
        %1495 = vmatprep.subr.mxu0 0.0
        %1496 = vmatpush1.xpose.msra.mxu0 0.0
        %1497 = vmatprep.subr.mxu0 0.0
        %1498 = vmatpush1.xpose.msra.mxu0 0.0
        %1499 = vmatprep.subr.mxu0 0.0
        %1500 = vmatpush1.xpose.msra.mxu0 0.0
        %1501 = vmatprep.subr.mxu0 0.0
        %1502 = vmatpush1.xpose.msra.mxu0 0.0
        %1503 = vmatprep.subr.mxu0 0.0
        %1504 = vmatpush1.xpose.msra.mxu0 0.0
        %1505 = vmatprep.subr.mxu0 0.0
        %1506 = vmatpush1.xpose.msra.mxu0 0.0
        %1507 = vmatprep.subr.mxu0 0.0
        %1508 = vmatpush1.xpose.msra.mxu0 %v1475
        %1509 = vmatprep.subr.mxu0 0.0
        %1510 = vmatpush2.xpose.msra.mxu0 0.0
        %1511 = vmatprep.subr.mxu0 0.0
        %1512 = vmatpush2.xpose.msra.mxu0 0.0
        %1513 = vmatprep.subr.mxu0 0.0
        %1514 = vmatpush2.xpose.msra.mxu0 0.0
        %1515 = vmatprep.subr.mxu0 0.0
        %1516 = vmatpush2.xpose.msra.mxu0 0.0
        %1517 = vmatprep.subr.mxu0 0.0
        %1518 = vmatpush2.xpose.msra.mxu0 0.0
        %1519 = vmatprep.subr.mxu0 0.0
        %1520 = vmatpush2.xpose.msra.mxu0 0.0
        %1521 = vmatprep.subr.mxu0 0.0
        %1522 = vmatpush2.xpose.msra.mxu0 0.0
        %1523 = vmatprep.subr.mxu0 0.0
        %1524 = vmatpush2.xpose.msra.mxu0 0.0
        %1525 = vmatprep.subr.mxu0 0.0
        %1526 = vmatpush2.xpose.msra.mxu0 0.0
        %1527 = vmatprep.subr.mxu0 0.0
        %1528 = vmatpush2.xpose.msra.mxu0 0.0
        %1529 = vmatprep.subr.mxu0 0.0
        %1530 = vmatpush2.xpose.msra.mxu0 0.0
        %1531 = vmatprep.subr.mxu0 0.0
        %1532 = vmatpush2.xpose.msra.mxu0 0.0
        %1533 = vmatprep.subr.mxu0 0.0
        %1534 = vmatpush2.xpose.msra.mxu0 0.0
        %1535 = vmatprep.subr.mxu0 0.0
        %1536 = vmatpush2.xpose.msra.mxu0 0.0
        %1537 = vmatprep.subr.mxu0 0.0
        %1538 = vmatpush2.xpose.msra.mxu0 0.0
        %1539 = vmatprep.subr.mxu0 0.0
        %1540 = vmatpush2.xpose.msra.mxu0 0.0
        %1541 = vmatprep.mubr.f32.mxu0 0.0
        %1542 = vmatmul.mubr.f32.gmra.mxu0 %v1473
        %v1543 = vpop.f32.mrf.mxu0
        %v1544 = vadd.f32 %v383, %v1543
        %v1545 = vpop.f32.mrf.mxu0
        %1546 = vdwg.mxu0
        %1547 = vrot.lane.b32.xlu0 %v375, 112
        %v1548 = vpop.permute.xlu0 %1547
        %1549 = vrot.lane.b32.xlu0 %v375, 80
        %v1550 = vpop.permute.xlu0 %1549
        %v1551 = vsel %vm387, %v1548, 0
        %v1553 = vsel %vm387, %v1550, 0
        %1555 = vmatprep.subr.mxu0 0.0
        %1556 = vmatpush1.xpose.msra.mxu0 0.0
        %1557 = vmatprep.subr.mxu0 0.0
        %1558 = vmatpush1.xpose.msra.mxu0 0.0
        %1559 = vmatprep.subr.mxu0 0.0
        %1560 = vmatpush1.xpose.msra.mxu0 0.0
        %1561 = vmatprep.subr.mxu0 0.0
        %1562 = vmatpush1.xpose.msra.mxu0 0.0
        %1563 = vmatprep.subr.mxu0 0.0
        %1564 = vmatpush1.xpose.msra.mxu0 0.0
        %1565 = vmatprep.subr.mxu0 0.0
        %1566 = vmatpush1.xpose.msra.mxu0 0.0
        %1567 = vmatprep.subr.mxu0 0.0
        %1568 = vmatpush1.xpose.msra.mxu0 0.0
        %1569 = vmatprep.subr.mxu0 0.0
        %1570 = vmatpush1.xpose.msra.mxu0 0.0
        %1571 = vmatprep.subr.mxu0 0.0
        %1572 = vmatpush1.xpose.msra.mxu0 0.0
        %1573 = vmatprep.subr.mxu0 0.0
        %1574 = vmatpush1.xpose.msra.mxu0 0.0
        %1575 = vmatprep.subr.mxu0 0.0
        %1576 = vmatpush1.xpose.msra.mxu0 0.0
        %1577 = vmatprep.subr.mxu0 0.0
        %1578 = vmatpush1.xpose.msra.mxu0 0.0
        %1579 = vmatprep.subr.mxu0 0.0
        %1580 = vmatpush1.xpose.msra.mxu0 0.0
        %1581 = vmatprep.subr.mxu0 0.0
        %1582 = vmatpush1.xpose.msra.mxu0 0.0
        %1583 = vmatprep.subr.mxu0 0.0
        %1584 = vmatpush1.xpose.msra.mxu0 0.0
        %1585 = vmatprep.subr.mxu0 0.0
        %1586 = vmatpush1.xpose.msra.mxu0 %v1553
        %1587 = vmatprep.subr.mxu0 0.0
        %1588 = vmatpush2.xpose.msra.mxu0 0.0
        %1589 = vmatprep.subr.mxu0 0.0
        %1590 = vmatpush2.xpose.msra.mxu0 0.0
        %1591 = vmatprep.subr.mxu0 0.0
        %1592 = vmatpush2.xpose.msra.mxu0 0.0
        %1593 = vmatprep.subr.mxu0 0.0
        %1594 = vmatpush2.xpose.msra.mxu0 0.0
        %1595 = vmatprep.subr.mxu0 0.0
        %1596 = vmatpush2.xpose.msra.mxu0 0.0
        %1597 = vmatprep.subr.mxu0 0.0
        %1598 = vmatpush2.xpose.msra.mxu0 0.0
        %1599 = vmatprep.subr.mxu0 0.0
        %1600 = vmatpush2.xpose.msra.mxu0 0.0
        %1601 = vmatprep.subr.mxu0 0.0
        %1602 = vmatpush2.xpose.msra.mxu0 0.0
        %1603 = vmatprep.subr.mxu0 0.0
        %1604 = vmatpush2.xpose.msra.mxu0 0.0
        %1605 = vmatprep.subr.mxu0 0.0
        %1606 = vmatpush2.xpose.msra.mxu0 0.0
        %1607 = vmatprep.subr.mxu0 0.0
        %1608 = vmatpush2.xpose.msra.mxu0 0.0
        %1609 = vmatprep.subr.mxu0 0.0
        %1610 = vmatpush2.xpose.msra.mxu0 0.0
        %1611 = vmatprep.subr.mxu0 0.0
        %1612 = vmatpush2.xpose.msra.mxu0 0.0
        %1613 = vmatprep.subr.mxu0 0.0
        %1614 = vmatpush2.xpose.msra.mxu0 0.0
        %1615 = vmatprep.subr.mxu0 0.0
        %1616 = vmatpush2.xpose.msra.mxu0 0.0
        %1617 = vmatprep.subr.mxu0 0.0
        %1618 = vmatpush2.xpose.msra.mxu0 0.0
        %1619 = vmatprep.mubr.f32.mxu0 0.0
        %1620 = vmatmul.mubr.f32.gmra.mxu0 %v1551
        %v1621 = vpop.f32.mrf.mxu0
        %v1622 = vadd.f32 %v383, %v1621
        %v1623 = vpop.f32.mrf.mxu0
        %1624 = vdwg.mxu0
        %v1625 = vsel %vm387, %v1466, -inf
        %1626 = vmax.xlane.f32.xlu0 %v1625
        %v1627 = vpop.xlane.xlu0 %1626
        %v1628 = vsel %vm387, %v1544, -inf
        %1629 = vmax.xlane.f32.xlu0 %v1628
        %v1630 = vpop.xlane.xlu0 %1629
        %v1631 = vsel %vm387, %v1622, -inf
        %1632 = vmax.xlane.f32.xlu0 %v1631
        %v1633 = vpop.xlane.xlu0 %1632
        %v1634 = vsub.f32 %v1466, %v1627
        %v1635 = vsub.f32 %v1544, %v1630
        %v1636 = vsub.f32 %v1622, %v1633
        %v1637 = vmul.f32 %v1634, 1.442695
        %v1638 = vpow.pop %v1637
        %v1639 = vmul.f32 %v1635, 1.442695
        %v1640 = vpow.pop %v1639
        %v1641 = vmul.f32 %v1636, 1.442695
        %v1642 = vpow.pop %v1641
        %v1643 = vsel %vm387, %v1638, 0.0
        %1644 = vadd.xlane.f32.xlu0 %v1643
        %v1645 = vpop.xlane.xlu0 %1644
        %v1646 = vsel %vm387, %v1640, 0.0
        %1647 = vadd.xlane.f32.xlu0 %v1646
        %v1648 = vpop.xlane.xlu0 %1647
        %v1649 = vsel %vm387, %v1642, 0.0
        %1650 = vadd.xlane.f32.xlu0 %v1649
        %v1651 = vpop.xlane.xlu0 %1650
        %1652 = vrot.lane.b32.xlu0 %v365, 48
        %v1653 = vpop.permute.xlu0 %1652
        %v1656 = vsel %vm387, %v1638, 0
        %1658 = vmatprep.subr.mxu0 0.0
        %1659 = vmatpush1.msra.mxu0 0.0
        %1660 = vmatprep.subr.mxu0 0.0
        %1661 = vmatpush1.msra.mxu0 0.0
        %1662 = vmatprep.subr.mxu0 0.0
        %1663 = vmatpush1.msra.mxu0 0.0
        %1664 = vmatprep.subr.mxu0 0.0
        %1665 = vmatpush1.msra.mxu0 0.0
        %1666 = vmatprep.subr.mxu0 0.0
        %1667 = vmatpush1.msra.mxu0 0.0
        %1668 = vmatprep.subr.mxu0 0.0
        %1669 = vmatpush1.msra.mxu0 0.0
        %1670 = vmatprep.subr.mxu0 0.0
        %1671 = vmatpush1.msra.mxu0 0.0
        %1672 = vmatprep.subr.mxu0 0.0
        %1673 = vmatpush1.msra.mxu0 0.0
        %1674 = vmatprep.subr.mxu0 0.0
        %1675 = vmatpush1.msra.mxu0 0.0
        %1676 = vmatprep.subr.mxu0 0.0
        %1677 = vmatpush1.msra.mxu0 0.0
        %1678 = vmatprep.subr.mxu0 0.0
        %1679 = vmatpush1.msra.mxu0 0.0
        %1680 = vmatprep.subr.mxu0 0.0
        %1681 = vmatpush1.msra.mxu0 0.0
        %1682 = vmatprep.subr.mxu0 0.0
        %1683 = vmatpush1.msra.mxu0 0.0
        %1684 = vmatprep.subr.mxu0 0.0
        %1685 = vmatpush1.msra.mxu0 0.0
        %1686 = vmatprep.subr.mxu0 0.0
        %1687 = vmatpush1.msra.mxu0 0.0
        %1688 = vmatprep.subr.mxu0 0.0
        %1689 = vmatpush1.msra.mxu0 %v1653
        %1690 = vmatprep.subr.mxu0 0.0
        %1691 = vmatpush2.msra.mxu0 0.0
        %1692 = vmatprep.subr.mxu0 0.0
        %1693 = vmatpush2.msra.mxu0 0.0
        %1694 = vmatprep.subr.mxu0 0.0
        %1695 = vmatpush2.msra.mxu0 0.0
        %1696 = vmatprep.subr.mxu0 0.0
        %1697 = vmatpush2.msra.mxu0 0.0
        %1698 = vmatprep.subr.mxu0 0.0
        %1699 = vmatpush2.msra.mxu0 0.0
        %1700 = vmatprep.subr.mxu0 0.0
        %1701 = vmatpush2.msra.mxu0 0.0
        %1702 = vmatprep.subr.mxu0 0.0
        %1703 = vmatpush2.msra.mxu0 0.0
        %1704 = vmatprep.subr.mxu0 0.0
        %1705 = vmatpush2.msra.mxu0 0.0
        %1706 = vmatprep.subr.mxu0 0.0
        %1707 = vmatpush2.msra.mxu0 0.0
        %1708 = vmatprep.subr.mxu0 0.0
        %1709 = vmatpush2.msra.mxu0 0.0
        %1710 = vmatprep.subr.mxu0 0.0
        %1711 = vmatpush2.msra.mxu0 0.0
        %1712 = vmatprep.subr.mxu0 0.0
        %1713 = vmatpush2.msra.mxu0 0.0
        %1714 = vmatprep.subr.mxu0 0.0
        %1715 = vmatpush2.msra.mxu0 0.0
        %1716 = vmatprep.subr.mxu0 0.0
        %1717 = vmatpush2.msra.mxu0 0.0
        %1718 = vmatprep.subr.mxu0 0.0
        %1719 = vmatpush2.msra.mxu0 0.0
        %1720 = vmatprep.subr.mxu0 0.0
        %1721 = vmatpush2.msra.mxu0 0.0
        %1722 = vmatprep.mubr.f32.mxu0 0.0
        %1723 = vmatmul.mubr.f32.gmra.mxu0 %v1656
        %v1724 = vpop.f32.mrf.mxu0
        %v1725 = vadd.f32 0.0, %v1724
        %v1726 = vpop.f32.mrf.mxu0
        %1727 = vdwg.mxu0
        %1728 = vrot.lane.b32.xlu0 %v370, 48
        %v1729 = vpop.permute.xlu0 %1728
        %v1732 = vsel %vm387, %v1640, 0
        %1734 = vmatprep.subr.mxu0 0.0
        %1735 = vmatpush1.msra.mxu0 0.0
        %1736 = vmatprep.subr.mxu0 0.0
        %1737 = vmatpush1.msra.mxu0 0.0
        %1738 = vmatprep.subr.mxu0 0.0
        %1739 = vmatpush1.msra.mxu0 0.0
        %1740 = vmatprep.subr.mxu0 0.0
        %1741 = vmatpush1.msra.mxu0 0.0
        %1742 = vmatprep.subr.mxu0 0.0
        %1743 = vmatpush1.msra.mxu0 0.0
        %1744 = vmatprep.subr.mxu0 0.0
        %1745 = vmatpush1.msra.mxu0 0.0
        %1746 = vmatprep.subr.mxu0 0.0
        %1747 = vmatpush1.msra.mxu0 0.0
        %1748 = vmatprep.subr.mxu0 0.0
        %1749 = vmatpush1.msra.mxu0 0.0
        %1750 = vmatprep.subr.mxu0 0.0
        %1751 = vmatpush1.msra.mxu0 0.0
        %1752 = vmatprep.subr.mxu0 0.0
        %1753 = vmatpush1.msra.mxu0 0.0
        %1754 = vmatprep.subr.mxu0 0.0
        %1755 = vmatpush1.msra.mxu0 0.0
        %1756 = vmatprep.subr.mxu0 0.0
        %1757 = vmatpush1.msra.mxu0 0.0
        %1758 = vmatprep.subr.mxu0 0.0
        %1759 = vmatpush1.msra.mxu0 0.0
        %1760 = vmatprep.subr.mxu0 0.0
        %1761 = vmatpush1.msra.mxu0 0.0
        %1762 = vmatprep.subr.mxu0 0.0
        %1763 = vmatpush1.msra.mxu0 0.0
        %1764 = vmatprep.subr.mxu0 0.0
        %1765 = vmatpush1.msra.mxu0 %v1729
        %1766 = vmatprep.subr.mxu0 0.0
        %1767 = vmatpush2.msra.mxu0 0.0
        %1768 = vmatprep.subr.mxu0 0.0
        %1769 = vmatpush2.msra.mxu0 0.0
        %1770 = vmatprep.subr.mxu0 0.0
        %1771 = vmatpush2.msra.mxu0 0.0
        %1772 = vmatprep.subr.mxu0 0.0
        %1773 = vmatpush2.msra.mxu0 0.0
        %1774 = vmatprep.subr.mxu0 0.0
        %1775 = vmatpush2.msra.mxu0 0.0
        %1776 = vmatprep.subr.mxu0 0.0
        %1777 = vmatpush2.msra.mxu0 0.0
        %1778 = vmatprep.subr.mxu0 0.0
        %1779 = vmatpush2.msra.mxu0 0.0
        %1780 = vmatprep.subr.mxu0 0.0
        %1781 = vmatpush2.msra.mxu0 0.0
        %1782 = vmatprep.subr.mxu0 0.0
        %1783 = vmatpush2.msra.mxu0 0.0
        %1784 = vmatprep.subr.mxu0 0.0
        %1785 = vmatpush2.msra.mxu0 0.0
        %1786 = vmatprep.subr.mxu0 0.0
        %1787 = vmatpush2.msra.mxu0 0.0
        %1788 = vmatprep.subr.mxu0 0.0
        %1789 = vmatpush2.msra.mxu0 0.0
        %1790 = vmatprep.subr.mxu0 0.0
        %1791 = vmatpush2.msra.mxu0 0.0
        %1792 = vmatprep.subr.mxu0 0.0
        %1793 = vmatpush2.msra.mxu0 0.0
        %1794 = vmatprep.subr.mxu0 0.0
        %1795 = vmatpush2.msra.mxu0 0.0
        %1796 = vmatprep.subr.mxu0 0.0
        %1797 = vmatpush2.msra.mxu0 0.0
        %1798 = vmatprep.mubr.f32.mxu0 0.0
        %1799 = vmatmul.mubr.f32.gmra.mxu0 %v1732
        %v1800 = vpop.f32.mrf.mxu0
        %v1801 = vadd.f32 0.0, %v1800
        %v1802 = vpop.f32.mrf.mxu0
        %1803 = vdwg.mxu0
        %1804 = vrot.lane.b32.xlu0 %v375, 48
        %v1805 = vpop.permute.xlu0 %1804
        %v1808 = vsel %vm387, %v1642, 0
        %1810 = vmatprep.subr.mxu0 0.0
        %1811 = vmatpush1.msra.mxu0 0.0
        %1812 = vmatprep.subr.mxu0 0.0
        %1813 = vmatpush1.msra.mxu0 0.0
        %1814 = vmatprep.subr.mxu0 0.0
        %1815 = vmatpush1.msra.mxu0 0.0
        %1816 = vmatprep.subr.mxu0 0.0
        %1817 = vmatpush1.msra.mxu0 0.0
        %1818 = vmatprep.subr.mxu0 0.0
        %1819 = vmatpush1.msra.mxu0 0.0
        %1820 = vmatprep.subr.mxu0 0.0
        %1821 = vmatpush1.msra.mxu0 0.0
        %1822 = vmatprep.subr.mxu0 0.0
        %1823 = vmatpush1.msra.mxu0 0.0
        %1824 = vmatprep.subr.mxu0 0.0
        %1825 = vmatpush1.msra.mxu0 0.0
        %1826 = vmatprep.subr.mxu0 0.0
        %1827 = vmatpush1.msra.mxu0 0.0
        %1828 = vmatprep.subr.mxu0 0.0
        %1829 = vmatpush1.msra.mxu0 0.0
        %1830 = vmatprep.subr.mxu0 0.0
        %1831 = vmatpush1.msra.mxu0 0.0
        %1832 = vmatprep.subr.mxu0 0.0
        %1833 = vmatpush1.msra.mxu0 0.0
        %1834 = vmatprep.subr.mxu0 0.0
        %1835 = vmatpush1.msra.mxu0 0.0
        %1836 = vmatprep.subr.mxu0 0.0
        %1837 = vmatpush1.msra.mxu0 0.0
        %1838 = vmatprep.subr.mxu0 0.0
        %1839 = vmatpush1.msra.mxu0 0.0
        %1840 = vmatprep.subr.mxu0 0.0
        %1841 = vmatpush1.msra.mxu0 %v1805
        %1842 = vmatprep.subr.mxu0 0.0
        %1843 = vmatpush2.msra.mxu0 0.0
        %1844 = vmatprep.subr.mxu0 0.0
        %1845 = vmatpush2.msra.mxu0 0.0
        %1846 = vmatprep.subr.mxu0 0.0
        %1847 = vmatpush2.msra.mxu0 0.0
        %1848 = vmatprep.subr.mxu0 0.0
        %1849 = vmatpush2.msra.mxu0 0.0
        %1850 = vmatprep.subr.mxu0 0.0
        %1851 = vmatpush2.msra.mxu0 0.0
        %1852 = vmatprep.subr.mxu0 0.0
        %1853 = vmatpush2.msra.mxu0 0.0
        %1854 = vmatprep.subr.mxu0 0.0
        %1855 = vmatpush2.msra.mxu0 0.0
        %1856 = vmatprep.subr.mxu0 0.0
        %1857 = vmatpush2.msra.mxu0 0.0
        %1858 = vmatprep.subr.mxu0 0.0
        %1859 = vmatpush2.msra.mxu0 0.0
        %1860 = vmatprep.subr.mxu0 0.0
        %1861 = vmatpush2.msra.mxu0 0.0
        %1862 = vmatprep.subr.mxu0 0.0
        %1863 = vmatpush2.msra.mxu0 0.0
        %1864 = vmatprep.subr.mxu0 0.0
        %1865 = vmatpush2.msra.mxu0 0.0
        %1866 = vmatprep.subr.mxu0 0.0
        %1867 = vmatpush2.msra.mxu0 0.0
        %1868 = vmatprep.subr.mxu0 0.0
        %1869 = vmatpush2.msra.mxu0 0.0
        %1870 = vmatprep.subr.mxu0 0.0
        %1871 = vmatpush2.msra.mxu0 0.0
        %1872 = vmatprep.subr.mxu0 0.0
        %1873 = vmatpush2.msra.mxu0 0.0
        %1874 = vmatprep.mubr.f32.mxu0 0.0
        %1875 = vmatmul.mubr.f32.gmra.mxu0 %v1808
        %v1876 = vpop.f32.mrf.mxu0
        %v1877 = vadd.f32 0.0, %v1876
        %v1878 = vpop.f32.mrf.mxu0
        %1879 = vdwg.mxu0
        %v1880 = vrcp.pop %v1645
        %v1881 = vrcp.pop %v1648
        %v1882 = vrcp.pop %v1651
        %v1883 = vmul.f32 %v1725, %v1880
        %v1884 = vmul.f32 %v1801, %v1881
        %v1885 = vmul.f32 %v1877, %v1882
        %1889 = vrot.lane.b32.xlu0 %v1883, 16
        %v1890 = vpop.permute.xlu0 %1889
        %1891 = vrot.lane.b32.xlu0 %v1884, 16
        %v1892 = vpop.permute.xlu0 %1891
        %1893 = vrot.lane.b32.xlu0 %v1885, 16
        %v1894 = vpop.permute.xlu0 %1893
        %vm1898 = vcmask 195712
        %1899 = vst.msk [vmem:[#allocation2] sm:$0xff] %vm1898, %v1890
        %1900 = vst.msk [vmem:[#allocation2 + $0x8] sm:$0xff] %vm1898, %v1892
        %1901 = vst.msk [vmem:[#allocation2 + $0x10] sm:$0xff] %vm1898, %v1894
        %1902 = vrot.lane.b32.xlu0 %v365, 104
        %v1903 = vpop.permute.xlu0 %1902
        %1904 = vrot.lane.b32.xlu0 %v365, 72
        %v1905 = vpop.permute.xlu0 %1904
        %v1906 = vsel %vm387, %v1903, 0
        %v1908 = vsel %vm387, %v1905, 0
        %1910 = vmatprep.subr.mxu0 0.0
        %1911 = vmatpush1.xpose.msra.mxu0 0.0
        %1912 = vmatprep.subr.mxu0 0.0
        %1913 = vmatpush1.xpose.msra.mxu0 0.0
        %1914 = vmatprep.subr.mxu0 0.0
        %1915 = vmatpush1.xpose.msra.mxu0 0.0
        %1916 = vmatprep.subr.mxu0 0.0
        %1917 = vmatpush1.xpose.msra.mxu0 0.0
        %1918 = vmatprep.subr.mxu0 0.0
        %1919 = vmatpush1.xpose.msra.mxu0 0.0
        %1920 = vmatprep.subr.mxu0 0.0
        %1921 = vmatpush1.xpose.msra.mxu0 0.0
        %1922 = vmatprep.subr.mxu0 0.0
        %1923 = vmatpush1.xpose.msra.mxu0 0.0
        %1924 = vmatprep.subr.mxu0 0.0
        %1925 = vmatpush1.xpose.msra.mxu0 0.0
        %1926 = vmatprep.subr.mxu0 0.0
        %1927 = vmatpush1.xpose.msra.mxu0 0.0
        %1928 = vmatprep.subr.mxu0 0.0
        %1929 = vmatpush1.xpose.msra.mxu0 0.0
        %1930 = vmatprep.subr.mxu0 0.0
        %1931 = vmatpush1.xpose.msra.mxu0 0.0
        %1932 = vmatprep.subr.mxu0 0.0
        %1933 = vmatpush1.xpose.msra.mxu0 0.0
        %1934 = vmatprep.subr.mxu0 0.0
        %1935 = vmatpush1.xpose.msra.mxu0 0.0
        %1936 = vmatprep.subr.mxu0 0.0
        %1937 = vmatpush1.xpose.msra.mxu0 0.0
        %1938 = vmatprep.subr.mxu0 0.0
        %1939 = vmatpush1.xpose.msra.mxu0 0.0
        %1940 = vmatprep.subr.mxu0 0.0
        %1941 = vmatpush1.xpose.msra.mxu0 %v1908
        %1942 = vmatprep.subr.mxu0 0.0
        %1943 = vmatpush2.xpose.msra.mxu0 0.0
        %1944 = vmatprep.subr.mxu0 0.0
        %1945 = vmatpush2.xpose.msra.mxu0 0.0
        %1946 = vmatprep.subr.mxu0 0.0
        %1947 = vmatpush2.xpose.msra.mxu0 0.0
        %1948 = vmatprep.subr.mxu0 0.0
        %1949 = vmatpush2.xpose.msra.mxu0 0.0
        %1950 = vmatprep.subr.mxu0 0.0
        %1951 = vmatpush2.xpose.msra.mxu0 0.0
        %1952 = vmatprep.subr.mxu0 0.0
        %1953 = vmatpush2.xpose.msra.mxu0 0.0
        %1954 = vmatprep.subr.mxu0 0.0
        %1955 = vmatpush2.xpose.msra.mxu0 0.0
        %1956 = vmatprep.subr.mxu0 0.0
        %1957 = vmatpush2.xpose.msra.mxu0 0.0
        %1958 = vmatprep.subr.mxu0 0.0
        %1959 = vmatpush2.xpose.msra.mxu0 0.0
        %1960 = vmatprep.subr.mxu0 0.0
        %1961 = vmatpush2.xpose.msra.mxu0 0.0
        %1962 = vmatprep.subr.mxu0 0.0
        %1963 = vmatpush2.xpose.msra.mxu0 0.0
        %1964 = vmatprep.subr.mxu0 0.0
        %1965 = vmatpush2.xpose.msra.mxu0 0.0
        %1966 = vmatprep.subr.mxu0 0.0
        %1967 = vmatpush2.xpose.msra.mxu0 0.0
        %1968 = vmatprep.subr.mxu0 0.0
        %1969 = vmatpush2.xpose.msra.mxu0 0.0
        %1970 = vmatprep.subr.mxu0 0.0
        %1971 = vmatpush2.xpose.msra.mxu0 0.0
        %1972 = vmatprep.subr.mxu0 0.0
        %1973 = vmatpush2.xpose.msra.mxu0 0.0
        %1974 = vmatprep.mubr.f32.mxu0 0.0
        %1975 = vmatmul.mubr.f32.gmra.mxu0 %v1906
        %v1976 = vpop.f32.mrf.mxu0
        %v1977 = vadd.f32 %v383, %v1976
        %v1978 = vpop.f32.mrf.mxu0
        %1979 = vdwg.mxu0
        %1980 = vrot.lane.b32.xlu0 %v370, 104
        %v1981 = vpop.permute.xlu0 %1980
        %1982 = vrot.lane.b32.xlu0 %v370, 72
        %v1983 = vpop.permute.xlu0 %1982
        %v1984 = vsel %vm387, %v1981, 0
        %v1986 = vsel %vm387, %v1983, 0
        %1988 = vmatprep.subr.mxu0 0.0
        %1989 = vmatpush1.xpose.msra.mxu0 0.0
        %1990 = vmatprep.subr.mxu0 0.0
        %1991 = vmatpush1.xpose.msra.mxu0 0.0
        %1992 = vmatprep.subr.mxu0 0.0
        %1993 = vmatpush1.xpose.msra.mxu0 0.0
        %1994 = vmatprep.subr.mxu0 0.0
        %1995 = vmatpush1.xpose.msra.mxu0 0.0
        %1996 = vmatprep.subr.mxu0 0.0
        %1997 = vmatpush1.xpose.msra.mxu0 0.0
        %1998 = vmatprep.subr.mxu0 0.0
        %1999 = vmatpush1.xpose.msra.mxu0 0.0
        %2000 = vmatprep.subr.mxu0 0.0
        %2001 = vmatpush1.xpose.msra.mxu0 0.0
        %2002 = vmatprep.subr.mxu0 0.0
        %2003 = vmatpush1.xpose.msra.mxu0 0.0
        %2004 = vmatprep.subr.mxu0 0.0
        %2005 = vmatpush1.xpose.msra.mxu0 0.0
        %2006 = vmatprep.subr.mxu0 0.0
        %2007 = vmatpush1.xpose.msra.mxu0 0.0
        %2008 = vmatprep.subr.mxu0 0.0
        %2009 = vmatpush1.xpose.msra.mxu0 0.0
        %2010 = vmatprep.subr.mxu0 0.0
        %2011 = vmatpush1.xpose.msra.mxu0 0.0
        %2012 = vmatprep.subr.mxu0 0.0
        %2013 = vmatpush1.xpose.msra.mxu0 0.0
        %2014 = vmatprep.subr.mxu0 0.0
        %2015 = vmatpush1.xpose.msra.mxu0 0.0
        %2016 = vmatprep.subr.mxu0 0.0
        %2017 = vmatpush1.xpose.msra.mxu0 0.0
        %2018 = vmatprep.subr.mxu0 0.0
        %2019 = vmatpush1.xpose.msra.mxu0 %v1986
        %2020 = vmatprep.subr.mxu0 0.0
        %2021 = vmatpush2.xpose.msra.mxu0 0.0
        %2022 = vmatprep.subr.mxu0 0.0
        %2023 = vmatpush2.xpose.msra.mxu0 0.0
        %2024 = vmatprep.subr.mxu0 0.0
        %2025 = vmatpush2.xpose.msra.mxu0 0.0
        %2026 = vmatprep.subr.mxu0 0.0
        %2027 = vmatpush2.xpose.msra.mxu0 0.0
        %2028 = vmatprep.subr.mxu0 0.0
        %2029 = vmatpush2.xpose.msra.mxu0 0.0
        %2030 = vmatprep.subr.mxu0 0.0
        %2031 = vmatpush2.xpose.msra.mxu0 0.0
        %2032 = vmatprep.subr.mxu0 0.0
        %2033 = vmatpush2.xpose.msra.mxu0 0.0
        %2034 = vmatprep.subr.mxu0 0.0
        %2035 = vmatpush2.xpose.msra.mxu0 0.0
        %2036 = vmatprep.subr.mxu0 0.0
        %2037 = vmatpush2.xpose.msra.mxu0 0.0
        %2038 = vmatprep.subr.mxu0 0.0
        %2039 = vmatpush2.xpose.msra.mxu0 0.0
        %2040 = vmatprep.subr.mxu0 0.0
        %2041 = vmatpush2.xpose.msra.mxu0 0.0
        %2042 = vmatprep.subr.mxu0 0.0
        %2043 = vmatpush2.xpose.msra.mxu0 0.0
        %2044 = vmatprep.subr.mxu0 0.0
        %2045 = vmatpush2.xpose.msra.mxu0 0.0
        %2046 = vmatprep.subr.mxu0 0.0
        %2047 = vmatpush2.xpose.msra.mxu0 0.0
        %2048 = vmatprep.subr.mxu0 0.0
        %2049 = vmatpush2.xpose.msra.mxu0 0.0
        %2050 = vmatprep.subr.mxu0 0.0
        %2051 = vmatpush2.xpose.msra.mxu0 0.0
        %2052 = vmatprep.mubr.f32.mxu0 0.0
        %2053 = vmatmul.mubr.f32.gmra.mxu0 %v1984
        %v2054 = vpop.f32.mrf.mxu0
        %v2055 = vadd.f32 %v383, %v2054
        %v2056 = vpop.f32.mrf.mxu0
        %2057 = vdwg.mxu0
        %2058 = vrot.lane.b32.xlu0 %v375, 104
        %v2059 = vpop.permute.xlu0 %2058
        %2060 = vrot.lane.b32.xlu0 %v375, 72
        %v2061 = vpop.permute.xlu0 %2060
        %v2062 = vsel %vm387, %v2059, 0
        %v2064 = vsel %vm387, %v2061, 0
        %2066 = vmatprep.subr.mxu0 0.0
        %2067 = vmatpush1.xpose.msra.mxu0 0.0
        %2068 = vmatprep.subr.mxu0 0.0
        %2069 = vmatpush1.xpose.msra.mxu0 0.0
        %2070 = vmatprep.subr.mxu0 0.0
        %2071 = vmatpush1.xpose.msra.mxu0 0.0
        %2072 = vmatprep.subr.mxu0 0.0
        %2073 = vmatpush1.xpose.msra.mxu0 0.0
        %2074 = vmatprep.subr.mxu0 0.0
        %2075 = vmatpush1.xpose.msra.mxu0 0.0
        %2076 = vmatprep.subr.mxu0 0.0
        %2077 = vmatpush1.xpose.msra.mxu0 0.0
        %2078 = vmatprep.subr.mxu0 0.0
        %2079 = vmatpush1.xpose.msra.mxu0 0.0
        %2080 = vmatprep.subr.mxu0 0.0
        %2081 = vmatpush1.xpose.msra.mxu0 0.0
        %2082 = vmatprep.subr.mxu0 0.0
        %2083 = vmatpush1.xpose.msra.mxu0 0.0
        %2084 = vmatprep.subr.mxu0 0.0
        %2085 = vmatpush1.xpose.msra.mxu0 0.0
        %2086 = vmatprep.subr.mxu0 0.0
        %2087 = vmatpush1.xpose.msra.mxu0 0.0
        %2088 = vmatprep.subr.mxu0 0.0
        %2089 = vmatpush1.xpose.msra.mxu0 0.0
        %2090 = vmatprep.subr.mxu0 0.0
        %2091 = vmatpush1.xpose.msra.mxu0 0.0
        %2092 = vmatprep.subr.mxu0 0.0
        %2093 = vmatpush1.xpose.msra.mxu0 0.0
        %2094 = vmatprep.subr.mxu0 0.0
        %2095 = vmatpush1.xpose.msra.mxu0 0.0
        %2096 = vmatprep.subr.mxu0 0.0
        %2097 = vmatpush1.xpose.msra.mxu0 %v2064
        %2098 = vmatprep.subr.mxu0 0.0
        %2099 = vmatpush2.xpose.msra.mxu0 0.0
        %2100 = vmatprep.subr.mxu0 0.0
        %2101 = vmatpush2.xpose.msra.mxu0 0.0
        %2102 = vmatprep.subr.mxu0 0.0
        %2103 = vmatpush2.xpose.msra.mxu0 0.0
        %2104 = vmatprep.subr.mxu0 0.0
        %2105 = vmatpush2.xpose.msra.mxu0 0.0
        %2106 = vmatprep.subr.mxu0 0.0
        %2107 = vmatpush2.xpose.msra.mxu0 0.0
        %2108 = vmatprep.subr.mxu0 0.0
        %2109 = vmatpush2.xpose.msra.mxu0 0.0
        %2110 = vmatprep.subr.mxu0 0.0
        %2111 = vmatpush2.xpose.msra.mxu0 0.0
        %2112 = vmatprep.subr.mxu0 0.0
        %2113 = vmatpush2.xpose.msra.mxu0 0.0
        %2114 = vmatprep.subr.mxu0 0.0
        %2115 = vmatpush2.xpose.msra.mxu0 0.0
        %2116 = vmatprep.subr.mxu0 0.0
        %2117 = vmatpush2.xpose.msra.mxu0 0.0
        %2118 = vmatprep.subr.mxu0 0.0
        %2119 = vmatpush2.xpose.msra.mxu0 0.0
        %2120 = vmatprep.subr.mxu0 0.0
        %2121 = vmatpush2.xpose.msra.mxu0 0.0
        %2122 = vmatprep.subr.mxu0 0.0
        %2123 = vmatpush2.xpose.msra.mxu0 0.0
        %2124 = vmatprep.subr.mxu0 0.0
        %2125 = vmatpush2.xpose.msra.mxu0 0.0
        %2126 = vmatprep.subr.mxu0 0.0
        %2127 = vmatpush2.xpose.msra.mxu0 0.0
        %2128 = vmatprep.subr.mxu0 0.0
        %2129 = vmatpush2.xpose.msra.mxu0 0.0
        %2130 = vmatprep.mubr.f32.mxu0 0.0
        %2131 = vmatmul.mubr.f32.gmra.mxu0 %v2062
        %v2132 = vpop.f32.mrf.mxu0
        %v2133 = vadd.f32 %v383, %v2132
        %v2134 = vpop.f32.mrf.mxu0
        %2135 = vdwg.mxu0
        %v2136 = vsel %vm387, %v1977, -inf
        %2137 = vmax.xlane.f32.xlu0 %v2136
        %v2138 = vpop.xlane.xlu0 %2137
        %v2139 = vsel %vm387, %v2055, -inf
        %2140 = vmax.xlane.f32.xlu0 %v2139
        %v2141 = vpop.xlane.xlu0 %2140
        %v2142 = vsel %vm387, %v2133, -inf
        %2143 = vmax.xlane.f32.xlu0 %v2142
        %v2144 = vpop.xlane.xlu0 %2143
        %v2145 = vsub.f32 %v1977, %v2138
        %v2146 = vsub.f32 %v2055, %v2141
        %v2147 = vsub.f32 %v2133, %v2144
        %v2148 = vmul.f32 %v2145, 1.442695
        %v2149 = vpow.pop %v2148
        %v2150 = vmul.f32 %v2146, 1.442695
        %v2151 = vpow.pop %v2150
        %v2152 = vmul.f32 %v2147, 1.442695
        %v2153 = vpow.pop %v2152
        %v2154 = vsel %vm387, %v2149, 0.0
        %2155 = vadd.xlane.f32.xlu0 %v2154
        %v2156 = vpop.xlane.xlu0 %2155
        %v2157 = vsel %vm387, %v2151, 0.0
        %2158 = vadd.xlane.f32.xlu0 %v2157
        %v2159 = vpop.xlane.xlu0 %2158
        %v2160 = vsel %vm387, %v2153, 0.0
        %2161 = vadd.xlane.f32.xlu0 %v2160
        %v2162 = vpop.xlane.xlu0 %2161
        %2163 = vrot.lane.b32.xlu0 %v365, 40
        %v2164 = vpop.permute.xlu0 %2163
        %v2167 = vsel %vm387, %v2149, 0
        %2169 = vmatprep.subr.mxu0 0.0
        %2170 = vmatpush1.msra.mxu0 0.0
        %2171 = vmatprep.subr.mxu0 0.0
        %2172 = vmatpush1.msra.mxu0 0.0
        %2173 = vmatprep.subr.mxu0 0.0
        %2174 = vmatpush1.msra.mxu0 0.0
        %2175 = vmatprep.subr.mxu0 0.0
        %2176 = vmatpush1.msra.mxu0 0.0
        %2177 = vmatprep.subr.mxu0 0.0
        %2178 = vmatpush1.msra.mxu0 0.0
        %2179 = vmatprep.subr.mxu0 0.0
        %2180 = vmatpush1.msra.mxu0 0.0
        %2181 = vmatprep.subr.mxu0 0.0
        %2182 = vmatpush1.msra.mxu0 0.0
        %2183 = vmatprep.subr.mxu0 0.0
        %2184 = vmatpush1.msra.mxu0 0.0
        %2185 = vmatprep.subr.mxu0 0.0
        %2186 = vmatpush1.msra.mxu0 0.0
        %2187 = vmatprep.subr.mxu0 0.0
        %2188 = vmatpush1.msra.mxu0 0.0
        %2189 = vmatprep.subr.mxu0 0.0
        %2190 = vmatpush1.msra.mxu0 0.0
        %2191 = vmatprep.subr.mxu0 0.0
        %2192 = vmatpush1.msra.mxu0 0.0
        %2193 = vmatprep.subr.mxu0 0.0
        %2194 = vmatpush1.msra.mxu0 0.0
        %2195 = vmatprep.subr.mxu0 0.0
        %2196 = vmatpush1.msra.mxu0 0.0
        %2197 = vmatprep.subr.mxu0 0.0
        %2198 = vmatpush1.msra.mxu0 0.0
        %2199 = vmatprep.subr.mxu0 0.0
        %2200 = vmatpush1.msra.mxu0 %v2164
        %2201 = vmatprep.subr.mxu0 0.0
        %2202 = vmatpush2.msra.mxu0 0.0
        %2203 = vmatprep.subr.mxu0 0.0
        %2204 = vmatpush2.msra.mxu0 0.0
        %2205 = vmatprep.subr.mxu0 0.0
        %2206 = vmatpush2.msra.mxu0 0.0
        %2207 = vmatprep.subr.mxu0 0.0
        %2208 = vmatpush2.msra.mxu0 0.0
        %2209 = vmatprep.subr.mxu0 0.0
        %2210 = vmatpush2.msra.mxu0 0.0
        %2211 = vmatprep.subr.mxu0 0.0
        %2212 = vmatpush2.msra.mxu0 0.0
        %2213 = vmatprep.subr.mxu0 0.0
        %2214 = vmatpush2.msra.mxu0 0.0
        %2215 = vmatprep.subr.mxu0 0.0
        %2216 = vmatpush2.msra.mxu0 0.0
        %2217 = vmatprep.subr.mxu0 0.0
        %2218 = vmatpush2.msra.mxu0 0.0
        %2219 = vmatprep.subr.mxu0 0.0
        %2220 = vmatpush2.msra.mxu0 0.0
        %2221 = vmatprep.subr.mxu0 0.0
        %2222 = vmatpush2.msra.mxu0 0.0
        %2223 = vmatprep.subr.mxu0 0.0
        %2224 = vmatpush2.msra.mxu0 0.0
        %2225 = vmatprep.subr.mxu0 0.0
        %2226 = vmatpush2.msra.mxu0 0.0
        %2227 = vmatprep.subr.mxu0 0.0
        %2228 = vmatpush2.msra.mxu0 0.0
        %2229 = vmatprep.subr.mxu0 0.0
        %2230 = vmatpush2.msra.mxu0 0.0
        %2231 = vmatprep.subr.mxu0 0.0
        %2232 = vmatpush2.msra.mxu0 0.0
        %2233 = vmatprep.mubr.f32.mxu0 0.0
        %2234 = vmatmul.mubr.f32.gmra.mxu0 %v2167
        %v2235 = vpop.f32.mrf.mxu0
        %v2236 = vadd.f32 0.0, %v2235
        %v2237 = vpop.f32.mrf.mxu0
        %2238 = vdwg.mxu0
        %2239 = vrot.lane.b32.xlu0 %v370, 40
        %v2240 = vpop.permute.xlu0 %2239
        %v2243 = vsel %vm387, %v2151, 0
        %2245 = vmatprep.subr.mxu0 0.0
        %2246 = vmatpush1.msra.mxu0 0.0
        %2247 = vmatprep.subr.mxu0 0.0
        %2248 = vmatpush1.msra.mxu0 0.0
        %2249 = vmatprep.subr.mxu0 0.0
        %2250 = vmatpush1.msra.mxu0 0.0
        %2251 = vmatprep.subr.mxu0 0.0
        %2252 = vmatpush1.msra.mxu0 0.0
        %2253 = vmatprep.subr.mxu0 0.0
        %2254 = vmatpush1.msra.mxu0 0.0
        %2255 = vmatprep.subr.mxu0 0.0
        %2256 = vmatpush1.msra.mxu0 0.0
        %2257 = vmatprep.subr.mxu0 0.0
        %2258 = vmatpush1.msra.mxu0 0.0
        %2259 = vmatprep.subr.mxu0 0.0
        %2260 = vmatpush1.msra.mxu0 0.0
        %2261 = vmatprep.subr.mxu0 0.0
        %2262 = vmatpush1.msra.mxu0 0.0
        %2263 = vmatprep.subr.mxu0 0.0
        %2264 = vmatpush1.msra.mxu0 0.0
        %2265 = vmatprep.subr.mxu0 0.0
        %2266 = vmatpush1.msra.mxu0 0.0
        %2267 = vmatprep.subr.mxu0 0.0
        %2268 = vmatpush1.msra.mxu0 0.0
        %2269 = vmatprep.subr.mxu0 0.0
        %2270 = vmatpush1.msra.mxu0 0.0
        %2271 = vmatprep.subr.mxu0 0.0
        %2272 = vmatpush1.msra.mxu0 0.0
        %2273 = vmatprep.subr.mxu0 0.0
        %2274 = vmatpush1.msra.mxu0 0.0
        %2275 = vmatprep.subr.mxu0 0.0
        %2276 = vmatpush1.msra.mxu0 %v2240
        %2277 = vmatprep.subr.mxu0 0.0
        %2278 = vmatpush2.msra.mxu0 0.0
        %2279 = vmatprep.subr.mxu0 0.0
        %2280 = vmatpush2.msra.mxu0 0.0
        %2281 = vmatprep.subr.mxu0 0.0
        %2282 = vmatpush2.msra.mxu0 0.0
        %2283 = vmatprep.subr.mxu0 0.0
        %2284 = vmatpush2.msra.mxu0 0.0
        %2285 = vmatprep.subr.mxu0 0.0
        %2286 = vmatpush2.msra.mxu0 0.0
        %2287 = vmatprep.subr.mxu0 0.0
        %2288 = vmatpush2.msra.mxu0 0.0
        %2289 = vmatprep.subr.mxu0 0.0
        %2290 = vmatpush2.msra.mxu0 0.0
        %2291 = vmatprep.subr.mxu0 0.0
        %2292 = vmatpush2.msra.mxu0 0.0
        %2293 = vmatprep.subr.mxu0 0.0
        %2294 = vmatpush2.msra.mxu0 0.0
        %2295 = vmatprep.subr.mxu0 0.0
        %2296 = vmatpush2.msra.mxu0 0.0
        %2297 = vmatprep.subr.mxu0 0.0
        %2298 = vmatpush2.msra.mxu0 0.0
        %2299 = vmatprep.subr.mxu0 0.0
        %2300 = vmatpush2.msra.mxu0 0.0
        %2301 = vmatprep.subr.mxu0 0.0
        %2302 = vmatpush2.msra.mxu0 0.0
        %2303 = vmatprep.subr.mxu0 0.0
        %2304 = vmatpush2.msra.mxu0 0.0
        %2305 = vmatprep.subr.mxu0 0.0
        %2306 = vmatpush2.msra.mxu0 0.0
        %2307 = vmatprep.subr.mxu0 0.0
        %2308 = vmatpush2.msra.mxu0 0.0
        %2309 = vmatprep.mubr.f32.mxu0 0.0
        %2310 = vmatmul.mubr.f32.gmra.mxu0 %v2243
        %v2311 = vpop.f32.mrf.mxu0
        %v2312 = vadd.f32 0.0, %v2311
        %v2313 = vpop.f32.mrf.mxu0
        %2314 = vdwg.mxu0
        %2315 = vrot.lane.b32.xlu0 %v375, 40
        %v2316 = vpop.permute.xlu0 %2315
        %v2319 = vsel %vm387, %v2153, 0
        %2321 = vmatprep.subr.mxu0 0.0
        %2322 = vmatpush1.msra.mxu0 0.0
        %2323 = vmatprep.subr.mxu0 0.0
        %2324 = vmatpush1.msra.mxu0 0.0
        %2325 = vmatprep.subr.mxu0 0.0
        %2326 = vmatpush1.msra.mxu0 0.0
        %2327 = vmatprep.subr.mxu0 0.0
        %2328 = vmatpush1.msra.mxu0 0.0
        %2329 = vmatprep.subr.mxu0 0.0
        %2330 = vmatpush1.msra.mxu0 0.0
        %2331 = vmatprep.subr.mxu0 0.0
        %2332 = vmatpush1.msra.mxu0 0.0
        %2333 = vmatprep.subr.mxu0 0.0
        %2334 = vmatpush1.msra.mxu0 0.0
        %2335 = vmatprep.subr.mxu0 0.0
        %2336 = vmatpush1.msra.mxu0 0.0
        %2337 = vmatprep.subr.mxu0 0.0
        %2338 = vmatpush1.msra.mxu0 0.0
        %2339 = vmatprep.subr.mxu0 0.0
        %2340 = vmatpush1.msra.mxu0 0.0
        %2341 = vmatprep.subr.mxu0 0.0
        %2342 = vmatpush1.msra.mxu0 0.0
        %2343 = vmatprep.subr.mxu0 0.0
        %2344 = vmatpush1.msra.mxu0 0.0
        %2345 = vmatprep.subr.mxu0 0.0
        %2346 = vmatpush1.msra.mxu0 0.0
        %2347 = vmatprep.subr.mxu0 0.0
        %2348 = vmatpush1.msra.mxu0 0.0
        %2349 = vmatprep.subr.mxu0 0.0
        %2350 = vmatpush1.msra.mxu0 0.0
        %2351 = vmatprep.subr.mxu0 0.0
        %2352 = vmatpush1.msra.mxu0 %v2316
        %2353 = vmatprep.subr.mxu0 0.0
        %2354 = vmatpush2.msra.mxu0 0.0
        %2355 = vmatprep.subr.mxu0 0.0
        %2356 = vmatpush2.msra.mxu0 0.0
        %2357 = vmatprep.subr.mxu0 0.0
        %2358 = vmatpush2.msra.mxu0 0.0
        %2359 = vmatprep.subr.mxu0 0.0
        %2360 = vmatpush2.msra.mxu0 0.0
        %2361 = vmatprep.subr.mxu0 0.0
        %2362 = vmatpush2.msra.mxu0 0.0
        %2363 = vmatprep.subr.mxu0 0.0
        %2364 = vmatpush2.msra.mxu0 0.0
        %2365 = vmatprep.subr.mxu0 0.0
        %2366 = vmatpush2.msra.mxu0 0.0
        %2367 = vmatprep.subr.mxu0 0.0
        %2368 = vmatpush2.msra.mxu0 0.0
        %2369 = vmatprep.subr.mxu0 0.0
        %2370 = vmatpush2.msra.mxu0 0.0
        %2371 = vmatprep.subr.mxu0 0.0
        %2372 = vmatpush2.msra.mxu0 0.0
        %2373 = vmatprep.subr.mxu0 0.0
        %2374 = vmatpush2.msra.mxu0 0.0
        %2375 = vmatprep.subr.mxu0 0.0
        %2376 = vmatpush2.msra.mxu0 0.0
        %2377 = vmatprep.subr.mxu0 0.0
        %2378 = vmatpush2.msra.mxu0 0.0
        %2379 = vmatprep.subr.mxu0 0.0
        %2380 = vmatpush2.msra.mxu0 0.0
        %2381 = vmatprep.subr.mxu0 0.0
        %2382 = vmatpush2.msra.mxu0 0.0
        %2383 = vmatprep.subr.mxu0 0.0
        %2384 = vmatpush2.msra.mxu0 0.0
        %2385 = vmatprep.mubr.f32.mxu0 0.0
        %2386 = vmatmul.mubr.f32.gmra.mxu0 %v2319
        %v2387 = vpop.f32.mrf.mxu0
        %v2388 = vadd.f32 0.0, %v2387
        %v2389 = vpop.f32.mrf.mxu0
        %2390 = vdwg.mxu0
        %v2391 = vrcp.pop %v2156
        %v2392 = vrcp.pop %v2159
        %v2393 = vrcp.pop %v2162
        %v2394 = vmul.f32 %v2236, %v2391
        %v2395 = vmul.f32 %v2312, %v2392
        %v2396 = vmul.f32 %v2388, %v2393
        %2400 = vrot.lane.b32.xlu0 %v2394, 24
        %v2401 = vpop.permute.xlu0 %2400
        %2402 = vrot.lane.b32.xlu0 %v2395, 24
        %v2403 = vpop.permute.xlu0 %2402
        %2404 = vrot.lane.b32.xlu0 %v2396, 24
        %v2405 = vpop.permute.xlu0 %2404
        %vm2409 = vcmask 261312
        %2410 = vst.msk [vmem:[#allocation2] sm:$0xff] %vm2409, %v2401
        %2411 = vst.msk [vmem:[#allocation2 + $0x8] sm:$0xff] %vm2409, %v2403
        %2412 = vst.msk [vmem:[#allocation2 + $0x10] sm:$0xff] %vm2409, %v2405
        %v2413 = vld [vmem:[#allocation2] sm:$0xff]
        %v2414 = vld [vmem:[#allocation2 + $0x8] sm:$0xff]
        %v2415 = vld [vmem:[#allocation2 + $0x10] sm:$0xff]
        %v2416 = vld [vmem:[#allocation8] sm:$0xff]
        %v2417 = vld [vmem:[#allocation8 + $0x8] sm:$0xff]
        %v2418 = vld [vmem:[#allocation8 + $0x10] sm:$0xff]
        %v2419 = vld [vmem:[#allocation8 + $0x18] sm:$0xff]
        %v2420 = vld [vmem:[%s4] sm:$0x1]
        %v2422 = vlaneseq
        %v2423 = vshrl.u32 %v2422, 7
        %v2424 = vsub.s32 0, %v2423
        %v2425 = vrot.slane %v2420, %v2424
        %v2428 = vsel %vm288, %v2413, 0
        %v2431 = vsel %vm288, %v2414, 0
        %v2434 = vsel %vm288, %v2415, 0
        %2436 = vmatprep.subr.mxu0 0.0
        %2437 = vmatpush1.msra.mxu0 0.0
        %2438 = vmatprep.subr.mxu0 0.0
        %2439 = vmatpush1.msra.mxu0 0.0
        %2440 = vmatprep.subr.mxu0 0.0
        %2441 = vmatpush1.msra.mxu0 0.0
        %2442 = vmatprep.subr.mxu0 0.0
        %2443 = vmatpush1.msra.mxu0 0.0
        %2444 = vmatprep.subr.mxu0 0.0
        %2445 = vmatpush1.msra.mxu0 0.0
        %2446 = vmatprep.subr.mxu0 0.0
        %2447 = vmatpush1.msra.mxu0 0.0
        %2448 = vmatprep.subr.mxu0 0.0
        %2449 = vmatpush1.msra.mxu0 0.0
        %2450 = vmatprep.subr.mxu0 0.0
        %2451 = vmatpush1.msra.mxu0 0.0
        %2452 = vmatprep.subr.mxu0 0.0
        %2453 = vmatpush1.msra.mxu0 0.0
        %2454 = vmatprep.subr.mxu0 0.0
        %2455 = vmatpush1.msra.mxu0 0.0
        %2456 = vmatprep.subr.mxu0 0.0
        %2457 = vmatpush1.msra.mxu0 0.0
        %2458 = vmatprep.subr.mxu0 0.0
        %2459 = vmatpush1.msra.mxu0 0.0
        %2460 = vmatprep.subr.mxu0 0.0
        %2461 = vmatpush1.msra.mxu0 %v2419
        %2462 = vmatprep.subr.mxu0 0.0
        %2463 = vmatpush1.msra.mxu0 %v2418
        %2464 = vmatprep.subr.mxu0 0.0
        %2465 = vmatpush1.msra.mxu0 %v2417
        %2466 = vmatprep.subr.mxu0 0.0
        %2467 = vmatpush1.msra.mxu0 %v2416
        %2468 = vmatprep.subr.mxu0 0.0
        %2469 = vmatpush2.msra.mxu0 0.0
        %2470 = vmatprep.subr.mxu0 0.0
        %2471 = vmatpush2.msra.mxu0 0.0
        %2472 = vmatprep.subr.mxu0 0.0
        %2473 = vmatpush2.msra.mxu0 0.0
        %2474 = vmatprep.subr.mxu0 0.0
        %2475 = vmatpush2.msra.mxu0 0.0
        %2476 = vmatprep.subr.mxu0 0.0
        %2477 = vmatpush2.msra.mxu0 0.0
        %2478 = vmatprep.subr.mxu0 0.0
        %2479 = vmatpush2.msra.mxu0 0.0
        %2480 = vmatprep.subr.mxu0 0.0
        %2481 = vmatpush2.msra.mxu0 0.0
        %2482 = vmatprep.subr.mxu0 0.0
        %2483 = vmatpush2.msra.mxu0 0.0
        %2484 = vmatprep.subr.mxu0 0.0
        %2485 = vmatpush2.msra.mxu0 0.0
        %2486 = vmatprep.subr.mxu0 0.0
        %2487 = vmatpush2.msra.mxu0 0.0
        %2488 = vmatprep.subr.mxu0 0.0
        %2489 = vmatpush2.msra.mxu0 0.0
        %2490 = vmatprep.subr.mxu0 0.0
        %2491 = vmatpush2.msra.mxu0 0.0
        %2492 = vmatprep.subr.mxu0 0.0
        %2493 = vmatpush2.msra.mxu0 0.0
        %2494 = vmatprep.subr.mxu0 0.0
        %2495 = vmatpush2.msra.mxu0 0.0
        %2496 = vmatprep.subr.mxu0 0.0
        %2497 = vmatpush2.msra.mxu0 0.0
        %2498 = vmatprep.subr.mxu0 0.0
        %2499 = vmatpush2.msra.mxu0 0.0
        %2500 = vmatprep.mubr.f32.mxu0 0.0
        %2501 = vmatmul.mubr.f32.gmra.mxu0 %v2428
        %v2502 = vpop.f32.mrf.mxu0
        %v2503 = vadd.f32 %v2425, %v2502
        %v2504 = vpop.f32.mrf.mxu0
        %2505 = vmatprep.mubr.f32.mxu0 0.0
        %2506 = vmatmul.mubr.f32.gmra.mxu0 %v2431
        %v2507 = vpop.f32.mrf.mxu0
        %v2508 = vadd.f32 %v2425, %v2507
        %v2509 = vpop.f32.mrf.mxu0
        %2510 = vmatprep.mubr.f32.mxu0 0.0
        %2511 = vmatmul.mubr.f32.gmra.mxu0 %v2434
        %v2512 = vpop.f32.mrf.mxu0
        %v2513 = vadd.f32 %v2425, %v2512
        %v2514 = vpop.f32.mrf.mxu0
        %2515 = vdwg.mxu0
        %2516 = vst.msk [vmem:[%s271] sm:$0xff] %vm288, %v2503
        %2517 = vst.msk [vmem:[%s271 + $0x8] sm:$0xff] %vm288, %v2508
        %2518 = vst.msk [vmem:[%s271 + $0x10] sm:$0xff] %vm288, %v2513
        %s2519 = sand.u32 %s141, 1
        %s2520 = scalar_lea.sflag [#allocation5], %s2519
        %s2521 = sand.u32 %s141, 1
        %s2522 = smul.addr %s2521, 24
        %s2523 = scalar_lea.vmem [#allocation9], %s2522
        // Predicated region
        $region53: #{tpu_custom_call.1} parent=39 // pred_check
          %p2524 = pneg %p151
        $region54: #{tpu_custom_call.1} parent=39 // pred_check_branch
          %2526 = sbr.rel (%p2524) target = $region56
        $region55: #{tpu_custom_call.1} parent=39 // pred_region
          %s2527 = smul.u32 3, %s23
          %s2529 = ssub.s32 384, 384
          %2530 = vsyncadd %s2520, %s2529
          %s2531 = smul.addr %s2527, 128
          %s2532 = scalar_lea.hbm %s5, %s2531
          %s2533 = sshll.u32 %s2523, 4
          %s2534 = int_to_ptr.vmem [resolvable:$true] %s2533
          %2539 = dma.vmem_to_hbm [thread:$0]  %s2534, 384, %s2532, %s2520, 128, 128, 8
        $region56: #{tpu_custom_call.1} parent=39 // pred_fallthru
          _
      $region40: #{tpu_custom_call.1} parent=5 // pred_fallthru
        _
      %p2540 = scmp.le.s32.totalorder 2, %s18
      // Predicated region
      $region57: #{tpu_custom_call.1} parent=5 // pred_check
        %p2541 = pneg %p2540
      $region58: #{tpu_custom_call.1} parent=5 // pred_check_branch
        %2543 = sbr.rel (%p2541) target = $region60
      $region59: #{tpu_custom_call.1} parent=5 // pred_region
        %s2544 = ssub.s32 %s18, 2
        // Predicated region
        $region61: #{tpu_custom_call.1} parent=59 // pred_check
          %p2545 = pneg %p157
        $region62: #{tpu_custom_call.1} parent=59 // pred_check_branch
          %2547 = sbr.rel (%p2545) target = $region64
        $region63: #{tpu_custom_call.1} parent=59 // pred_region
          %s2548 = sand.u32 %s142, 1
          %s2549 = scalar_lea.sflag [#allocation5], %s2548
          %s2550 = sand.u32 %s142, 1
          %s2551 = smul.addr %s2550, 24
          %s2552 = scalar_lea.vmem [#allocation9], %s2551
          %2553 = dma.done %s2549, 384
        $region64: #{tpu_custom_call.1} parent=59 // pred_fallthru
          _
      $region60: #{tpu_custom_call.1} parent=5 // pred_fallthru
        _
    $region6: #{tpu_custom_call.1} parent=1 // loop_footer
      %s22 = sadd.s32 1, %s18
    $region7: #{tpu_custom_call.1} parent=1 // loop_footer_branch
      %17 = sbr.rel target = $region3
    $region8: #{tpu_custom_call.1} parent=1 // loop_exit
      _
    %2554 = vsyncpa [#allocation4], 1
    %s2555 = scalar_lea.sflag [#allocation4], 1
    %2556 = vsyncpa %s2555, 1
    %2557 = vsyncpa [#allocation7], 1
    %2558 = vsyncpa [#allocation5], 1
    %s2559 = scalar_lea.sflag [#allocation5], 1
    %2560 = vsyncpa %s2559, 1

// kernel: tpu_custom_call.1
$region0: #{tpu_custom_call.1}
  #allocation0 [shape = 'u32[]', space=smem, size = 0x4, offset = 0x4, fixed_abs, tag = 'smem constant byte address 0x4 - core index']
  #allocation1 [shape = 'u32[144,128]{1,0:T(1,128)}', space=vmem, size = 0x12000, scoped, tag = 'internal scratch']
  #allocation2 [shape = 'f32[24,32]{1,0:T(8,128)}', space=vmem, size = 0x3000, scoped, tag = 'scratch operand']
  %s0 = inlined_call_operand.hbm [shape: f32[6,8,32], index: 0, kind: input, shape index: {}]
  %s1 = inlined_call_operand.hbm [shape: f32[32,96], index: 1, kind: input, shape index: {}]
  %s2 = inlined_call_operand.vmem [shape: f32[1,96], index: 2, kind: input, shape index: {}]
  %s3 = inlined_call_operand.hbm [shape: f32[32,32], index: 3, kind: input, shape index: {}]
  %s4 = inlined_call_operand.vmem [shape: f32[1,32], index: 4, kind: input, shape index: {}]
  %s5 = inlined_call_operand.hbm [shape: f32[6,8,32], index: 5, kind: output, shape index: {}]
  %s6 = sld [smem:[#allocation0]]
  $region65: #{tpu_custom_call.1} parent=0
    _
  %s8 = ssub.s32 1, %s6
  %s9 = scalar_select 0, %s8, %s6
  $region1: #{tpu_custom_call.1} parent=0
    #allocation3 [shape = 'u8[24576]{0}', space=vmem, size = 0x6000, scoped, tag = 'input window, operand 0']
    #allocation4 [shape = 's32[2]{0}', space=sflag, size = 0x8, scoped, tag = 'scoped memory for tpu_custom_call.1']
    #allocation5 [shape = 's32[2]{0}', space=sflag, size = 0x8, scoped, tag = 'scoped memory for tpu_custom_call.1']
    #allocation6 [shape = 'u8[16384]{0}', space=vmem, size = 0x4000, scoped, tag = 'input window, operand 1, single buffered']
    #allocation7 [shape = 's32[1]{0}', space=sflag, size = 0x4, scoped, tag = 'scoped memory for tpu_custom_call.1']
    #allocation8 [shape = 'u8[16384]{0}', space=vmem, size = 0x4000, scoped, tag = 'input window, operand 3, single buffered']
    #allocation9 [shape = 'u8[24576]{0}', space=vmem, size = 0x6000, scoped, tag = 'output window, operand 0']
    %10 = vsyncpa [#allocation4], 0
    %s11 = scalar_lea.sflag [#allocation4], 1
    %12 = vsyncpa %s11, 0
    %13 = vsyncpa [#allocation7], 0
    %14 = vsyncpa [#allocation5], 0
    %s15 = scalar_lea.sflag [#allocation5], 1
    %16 = vsyncpa %s15, 0
    loop: start=0, step=1, limit=4
    $region2: #{tpu_custom_call.1} parent=1 // loop_pre_header
      _
    $region3: #{tpu_custom_call.1} parent=1 // loop_header
      %s18 = sphi 0, %s22
      %p19 = scmp.ge.s32.totalorder %s18, 4
      %s28 = sphi 0, %s30
      %s31 = sphi 0, %s28
      %s32 = sphi 0, %s31
      %s48 = sphi 0, %s32
      %s52 = sphi 0, %s52
      %s54 = sphi 0, %s52
      %s55 = sphi 0, %s54
      %s69 = sphi 0, %s55
      %s73 = sphi 0, %s73
      %s75 = sphi 0, %s73
      %s76 = sphi 0, %s75
      %s90 = sphi 0, %s76
      %s94 = sphi 0, %s94
      %s96 = sphi 0, %s94
      %s97 = sphi 0, %s96
      %s111 = sphi 0, %s97
      %s115 = sphi 0, %s115
      %s117 = sphi 0, %s115
      %s118 = sphi 0, %s117
      %s132 = sphi 0, %s118
      %s138 = sphi 0, %s140
      %s141 = sphi 0, %s138
      %s142 = sphi 0, %s141
      %s158 = sphi 0, %s142
    $region4: #{tpu_custom_call.1} parent=1 // loop_header_branch
      %21 = sbr.rel (%p19) target = $region8
    $region5: #{tpu_custom_call.1} parent=1 // loop_body
      %s23 = ssub.s32 %s18, 1
      %s24 = ssub.s32 %s18, 2
      %s25 = sadd.s32 %s18, 1
      %s26 = ssub.s32 %s18, %s25
      %p27 = scmp.eq.s32.totalorder %s26, 0
      %s29 = sadd.s32 %s28, 1
      %s30 = scalar_select %p27, %s28, %s29
      %p33 = pneg %p27
      %p34 = scmp.eq.s32.totalorder %s18, 1
      %p35 = por %p33, %p34
      %p36 = scmp.ne.s32.totalorder %s28, %s31
      %p37 = scmp.eq.s32.totalorder %s18, 0
      %p38 = por %p36, %p37
      %p39 = scmp.ne.s32.totalorder %s28, %s31
      %p40 = scmp.eq.s32.totalorder %s23, 1
      %p41 = por %p39, %p40
      %p42 = scmp.ne.s32.totalorder %s31, %s32
      %p43 = scmp.eq.s32.totalorder %s23, 0
      %p44 = por %p42, %p43
      %p45 = scmp.ne.s32.totalorder %s31, %s32
      %p46 = scmp.eq.s32.totalorder %s24, 1
      %p47 = por %p45, %p46
      %p49 = scmp.ne.s32.totalorder %s32, %s48
      %p50 = scmp.eq.s32.totalorder %s24, 0
      %p51 = por %p49, %p50
      %s53 = sadd.s32 %s52, 1
      %p56 = scmp.eq.s32.totalorder %s18, 1
      %p57 = scmp.ne.s32.totalorder %s52, %s54
      %p58 = scmp.eq.s32.totalorder %s18, 0
      %p59 = por %p57, %p58
      %p60 = scmp.ne.s32.totalorder %s52, %s54
      %p61 = scmp.eq.s32.totalorder %s23, 1
      %p62 = por %p60, %p61
      %p63 = scmp.ne.s32.totalorder %s54, %s55
      %p64 = scmp.eq.s32.totalorder %s23, 0
      %p65 = por %p63, %p64
      %p66 = scmp.ne.s32.totalorder %s54, %s55
      %p67 = scmp.eq.s32.totalorder %s24, 1
      %p68 = por %p66, %p67
      %p70 = scmp.ne.s32.totalorder %s55, %s69
      %p71 = scmp.eq.s32.totalorder %s24, 0
      %p72 = por %p70, %p71
      %s74 = sadd.s32 %s73, 1
      %p77 = scmp.eq.s32.totalorder %s18, 1
      %p78 = scmp.ne.s32.totalorder %s73, %s75
      %p79 = scmp.eq.s32.totalorder %s18, 0
      %p80 = por %p78, %p79
      %p81 = scmp.ne.s32.totalorder %s73, %s75
      %p82 = scmp.eq.s32.totalorder %s23, 1
      %p83 = por %p81, %p82
      %p84 = scmp.ne.s32.totalorder %s75, %s76
      %p85 = scmp.eq.s32.totalorder %s23, 0
      %p86 = por %p84, %p85
      %p87 = scmp.ne.s32.totalorder %s75, %s76
      %p88 = scmp.eq.s32.totalorder %s24, 1
      %p89 = por %p87, %p88
      %p91 = scmp.ne.s32.totalorder %s76, %s90
      %p92 = scmp.eq.s32.totalorder %s24, 0
      %p93 = por %p91, %p92
      %s95 = sadd.s32 %s94, 1
      %p98 = scmp.eq.s32.totalorder %s18, 1
      %p99 = scmp.ne.s32.totalorder %s94, %s96
      %p100 = scmp.eq.s32.totalorder %s18, 0
      %p101 = por %p99, %p100
      %p102 = scmp.ne.s32.totalorder %s94, %s96
      %p103 = scmp.eq.s32.totalorder %s23, 1
      %p104 = por %p102, %p103
      %p105 = scmp.ne.s32.totalorder %s96, %s97
      %p106 = scmp.eq.s32.totalorder %s23, 0
      %p107 = por %p105, %p106
      %p108 = scmp.ne.s32.totalorder %s96, %s97
      %p109 = scmp.eq.s32.totalorder %s24, 1
      %p110 = por %p108, %p109
      %p112 = scmp.ne.s32.totalorder %s97, %s111
      %p113 = scmp.eq.s32.totalorder %s24, 0
      %p114 = por %p112, %p113
      %s116 = sadd.s32 %s115, 1
      %p119 = scmp.eq.s32.totalorder %s18, 1
      %p120 = scmp.ne.s32.totalorder %s115, %s117
      %p121 = scmp.eq.s32.totalorder %s18, 0
      %p122 = por %p120, %p121
      %p123 = scmp.ne.s32.totalorder %s115, %s117
      %p124 = scmp.eq.s32.totalorder %s23, 1
      %p125 = por %p123, %p124
      %p126 = scmp.ne.s32.totalorder %s117, %s118
      %p127 = scmp.eq.s32.totalorder %s23, 0
      %p128 = por %p126, %p127
      %p129 = scmp.ne.s32.totalorder %s117, %s118
      %p130 = scmp.eq.s32.totalorder %s24, 1
      %p131 = por %p129, %p130
      %p133 = scmp.ne.s32.totalorder %s118, %s132
      %p134 = scmp.eq.s32.totalorder %s24, 0
      %p135 = por %p133, %p134
      %s136 = ssub.s32 %s18, %s25
      %p137 = scmp.eq.s32.totalorder %s136, 0
      %s139 = sadd.s32 %s138, 1
      %s140 = scalar_select %p137, %s138, %s139
      %p143 = pneg %p137
      %p144 = scmp.eq.s32.totalorder %s18, 1
      %p145 = por %p143, %p144
      %p146 = scmp.ne.s32.totalorder %s138, %s141
      %p147 = scmp.eq.s32.totalorder %s18, 0
      %p148 = por %p146, %p147
      %p149 = scmp.ne.s32.totalorder %s138, %s141
      %p150 = scmp.eq.s32.totalorder %s23, 1
      %p151 = por %p149, %p150
      %p152 = scmp.ne.s32.totalorder %s141, %s142
      %p153 = scmp.eq.s32.totalorder %s23, 0
      %p154 = por %p152, %p153
      %p155 = scmp.ne.s32.totalorder %s141, %s142
      %p156 = scmp.eq.s32.totalorder %s24, 1
      %p157 = por %p155, %p156
      %p159 = scmp.ne.s32.totalorder %s142, %s158
      %p160 = scmp.eq.s32.totalorder %s24, 0
      %p161 = por %p159, %p160
      %p162 = scmp.le.s32.totalorder 1, %s18
      %p163 = scmp.lt.s32.totalorder %s18, 3
      %p164 = pnand %p162, %p163
      %p165 = pneg %p164
      // Predicated region
      $region9: #{tpu_custom_call.1} parent=5 // pred_check
        _
      $region10: #{tpu_custom_call.1} parent=5 // pred_check_branch
        %167 = sbr.rel (%p164) target = $region12
      $region11: #{tpu_custom_call.1} parent=5 // pred_region
        %s168 = ssub.s32 %s18, 1
        // Predicated region
        $region13: #{tpu_custom_call.1} parent=11 // pred_check
          %p169 = pneg %p65
        $region14: #{tpu_custom_call.1} parent=11 // pred_check_branch
          %171 = sbr.rel (%p169) target = $region16
        $region15: #{tpu_custom_call.1} parent=11 // pred_region
          %s173 = ssub.s32 512, 512
          %174 = vsyncadd [#allocation7], %s173
          %s175 = sshll.u32 [#allocation6], 4
          %s176 = int_to_ptr.vmem [resolvable:$true] %s175
          %181 = dma.hbm_to_vmem [thread:$0]  %s1, 512, %s176, [#allocation7], 128, 128, 8
        $region16: #{tpu_custom_call.1} parent=11 // pred_fallthru
          _
        // Predicated region
        $region17: #{tpu_custom_call.1} parent=11 // pred_check
          %p182 = pneg %p86
        $region18: #{tpu_custom_call.1} parent=11 // pred_check_branch
          %184 = sbr.rel (%p182) target = $region20
        $region19: #{tpu_custom_call.1} parent=11 // pred_region
          _
        $region20: #{tpu_custom_call.1} parent=11 // pred_fallthru
          _
        // Predicated region
        $region21: #{tpu_custom_call.1} parent=11 // pred_check
          %p185 = pneg %p107
        $region22: #{tpu_custom_call.1} parent=11 // pred_check_branch
          %187 = sbr.rel (%p185) target = $region24
        $region23: #{tpu_custom_call.1} parent=11 // pred_region
          %s189 = ssub.s32 512, 512
          %190 = vsyncadd [#allocation7], %s189
          %s191 = sshll.u32 [#allocation8], 4
          %s192 = int_to_ptr.vmem [resolvable:$true] %s191
          %197 = dma.hbm_to_vmem [thread:$0]  %s3, 512, %s192, [#allocation7], 128, 128, 8
        $region24: #{tpu_custom_call.1} parent=11 // pred_fallthru
          _
        // Predicated region
        $region25: #{tpu_custom_call.1} parent=11 // pred_check
          %p198 = pneg %p128
        $region26: #{tpu_custom_call.1} parent=11 // pred_check_branch
          %200 = sbr.rel (%p198) target = $region28
        $region27: #{tpu_custom_call.1} parent=11 // pred_region
          _
        $region28: #{tpu_custom_call.1} parent=11 // pred_fallthru
          _
      $region12: #{tpu_custom_call.1} parent=5 // pred_fallthru
        _
      %p201 = scmp.lt.s32.totalorder %s18, 2
      // Predicated region
      $region29: #{tpu_custom_call.1} parent=5 // pred_check
        %p202 = pneg %p201
      $region30: #{tpu_custom_call.1} parent=5 // pred_check_branch
        %204 = sbr.rel (%p202) target = $region32
      $region31: #{tpu_custom_call.1} parent=5 // pred_region
        // Predicated region
        $region33: #{tpu_custom_call.1} parent=31 // pred_check
          %p205 = pneg %p38
        $region34: #{tpu_custom_call.1} parent=31 // pred_check_branch
          %207 = sbr.rel (%p205) target = $region36
        $region35: #{tpu_custom_call.1} parent=31 // pred_region
          %s208 = sand.u32 %s28, 1
          %s209 = scalar_lea.sflag [#allocation4], %s208
          %s210 = sand.u32 %s28, 1
          %s211 = smul.addr %s210, 24
          %s212 = scalar_lea.vmem [#allocation3], %s211
          %s213 = smul.u32 3, %s18
          %s215 = ssub.s32 384, 384
          %216 = vsyncadd %s209, %s215
          %s217 = smul.addr %s213, 128
          %s218 = scalar_lea.hbm %s0, %s217
          %s219 = sshll.u32 %s212, 4
          %s220 = int_to_ptr.vmem [resolvable:$true] %s219
          %225 = dma.hbm_to_vmem [thread:$0]  %s218, 384, %s220, %s209, 128, 128, 8
        $region36: #{tpu_custom_call.1} parent=31 // pred_fallthru
          _
      $region32: #{tpu_custom_call.1} parent=5 // pred_fallthru
        _
      %p226 = scmp.le.s32.totalorder 1, %s18
      %p227 = scmp.lt.s32.totalorder %s18, 3
      %p228 = pnand %p226, %p227
      %p229 = pneg %p228
      // Predicated region
      $region37: #{tpu_custom_call.1} parent=5 // pred_check
        _
      $region38: #{tpu_custom_call.1} parent=5 // pred_check_branch
        %231 = sbr.rel (%p228) target = $region40
      $region39: #{tpu_custom_call.1} parent=5 // pred_region
        %s232 = ssub.s32 %s18, 1
        %s233 = sand.u32 %s31, 1
        %s234 = scalar_lea.sflag [#allocation4], %s233
        %s235 = sand.u32 %s31, 1
        %s236 = smul.addr %s235, 24
        %s237 = scalar_lea.vmem [#allocation3], %s236
        // Predicated region
        $region41: #{tpu_custom_call.1} parent=39 // pred_check
          %p238 = pneg %p44
        $region42: #{tpu_custom_call.1} parent=39 // pred_check_branch
          %240 = sbr.rel (%p238) target = $region44
        $region43: #{tpu_custom_call.1} parent=39 // pred_region
          %241 = dma.done %s234, 384
        $region44: #{tpu_custom_call.1} parent=39 // pred_fallthru
          _
        // Predicated region
        $region45: #{tpu_custom_call.1} parent=39 // pred_check
          %p242 = pneg %p65
        $region46: #{tpu_custom_call.1} parent=39 // pred_check_branch
          %244 = sbr.rel (%p242) target = $region48
        $region47: #{tpu_custom_call.1} parent=39 // pred_region
          %245 = dma.done [#allocation7], 512
        $region48: #{tpu_custom_call.1} parent=39 // pred_fallthru
          _
        // Predicated region
        $region49: #{tpu_custom_call.1} parent=39 // pred_check
          %p246 = pneg %p107
        $region50: #{tpu_custom_call.1} parent=39 // pred_check_branch
          %248 = sbr.rel (%p246) target = $region52
        $region51: #{tpu_custom_call.1} parent=39 // pred_region
          %249 = dma.done [#allocation7], 512
        $region52: #{tpu_custom_call.1} parent=39 // pred_fallthru
          _
        %s250 = sand.u32 %s31, 1
        %s251 = scalar_lea.sflag [#allocation4], %s250
        %s252 = sand.u32 %s31, 1
        %s253 = smul.addr %s252, 24
        %s254 = scalar_lea.vmem [#allocation3], %s253
        %p255 = pneg %p44
        %p256 = pneg %p41
        %p257 = pneg %p65
        %p258 = pneg %p62
        %p259 = pneg %p86
        %p260 = pneg %p83
        %p261 = pneg %p107
        %p262 = pneg %p104
        %p263 = pneg %p128
        %p264 = pneg %p125
        %p265 = pneg %p154
        %p266 = pneg %p151
        %s267 = sand.u32 %s141, 1
        %s268 = scalar_lea.sflag [#allocation5], %s267
        %s269 = sand.u32 %s141, 1
        %s270 = smul.addr %s269, 24
        %s271 = scalar_lea.vmem [#allocation9], %s270
        %s272 = smul.u32 3, %s23
        %s273 = smul.u32 3, %s23
        %v274 = vld [vmem:[%s237] sm:$0xff]
        %v275 = vld [vmem:[%s237 + $0x8] sm:$0xff]
        %v276 = vld [vmem:[%s237 + $0x10] sm:$0xff]
        %v277 = vld [vmem:[#allocation6] sm:$0xff]
        %v278 = vld [vmem:[#allocation6 + $0x8] sm:$0xff]
        %v279 = vld [vmem:[#allocation6 + $0x10] sm:$0xff]
        %v280 = vld [vmem:[#allocation6 + $0x18] sm:$0xff]
        %v281 = vld [vmem:[%s2] sm:$0x1]
        %v283 = vlaneseq
        %v284 = vshrl.u32 %v283, 7
        %v285 = vsub.s32 0, %v284
        %v286 = vrot.slane %v281, %v285
        %vm288 = vcmask 261120
        %v290 = vsel %vm288, %v274, 0
        %v293 = vsel %vm288, %v275, 0
        %v296 = vsel %vm288, %v276, 0
        %298 = vmatprep.subr.mxu0 0.0
        %299 = vmatpush1.msra.mxu0 0.0
        %300 = vmatprep.subr.mxu0 0.0
        %301 = vmatpush1.msra.mxu0 0.0
        %302 = vmatprep.subr.mxu0 0.0
        %303 = vmatpush1.msra.mxu0 0.0
        %304 = vmatprep.subr.mxu0 0.0
        %305 = vmatpush1.msra.mxu0 0.0
        %306 = vmatprep.subr.mxu0 0.0
        %307 = vmatpush1.msra.mxu0 0.0
        %308 = vmatprep.subr.mxu0 0.0
        %309 = vmatpush1.msra.mxu0 0.0
        %310 = vmatprep.subr.mxu0 0.0
        %311 = vmatpush1.msra.mxu0 0.0
        %312 = vmatprep.subr.mxu0 0.0
        %313 = vmatpush1.msra.mxu0 0.0
        %314 = vmatprep.subr.mxu0 0.0
        %315 = vmatpush1.msra.mxu0 0.0
        %316 = vmatprep.subr.mxu0 0.0
        %317 = vmatpush1.msra.mxu0 0.0
        %318 = vmatprep.subr.mxu0 0.0
        %319 = vmatpush1.msra.mxu0 0.0
        %320 = vmatprep.subr.mxu0 0.0
        %321 = vmatpush1.msra.mxu0 0.0
        %322 = vmatprep.subr.mxu0 0.0
        %323 = vmatpush1.msra.mxu0 %v280
        %324 = vmatprep.subr.mxu0 0.0
        %325 = vmatpush1.msra.mxu0 %v279
        %326 = vmatprep.subr.mxu0 0.0
        %327 = vmatpush1.msra.mxu0 %v278
        %328 = vmatprep.subr.mxu0 0.0
        %329 = vmatpush1.msra.mxu0 %v277
        %330 = vmatprep.subr.mxu0 0.0
        %331 = vmatpush2.msra.mxu0 0.0
        %332 = vmatprep.subr.mxu0 0.0
        %333 = vmatpush2.msra.mxu0 0.0
        %334 = vmatprep.subr.mxu0 0.0
        %335 = vmatpush2.msra.mxu0 0.0
        %336 = vmatprep.subr.mxu0 0.0
        %337 = vmatpush2.msra.mxu0 0.0
        %338 = vmatprep.subr.mxu0 0.0
        %339 = vmatpush2.msra.mxu0 0.0
        %340 = vmatprep.subr.mxu0 0.0
        %341 = vmatpush2.msra.mxu0 0.0
        %342 = vmatprep.subr.mxu0 0.0
        %343 = vmatpush2.msra.mxu0 0.0
        %344 = vmatprep.subr.mxu0 0.0
        %345 = vmatpush2.msra.mxu0 0.0
        %346 = vmatprep.subr.mxu0 0.0
        %347 = vmatpush2.msra.mxu0 0.0
        %348 = vmatprep.subr.mxu0 0.0
        %349 = vmatpush2.msra.mxu0 0.0
        %350 = vmatprep.subr.mxu0 0.0
        %351 = vmatpush2.msra.mxu0 0.0
        %352 = vmatprep.subr.mxu0 0.0
        %353 = vmatpush2.msra.mxu0 0.0
        %354 = vmatprep.subr.mxu0 0.0
        %355 = vmatpush2.msra.mxu0 0.0
        %356 = vmatprep.subr.mxu0 0.0
        %357 = vmatpush2.msra.mxu0 0.0
        %358 = vmatprep.subr.mxu0 0.0
        %359 = vmatpush2.msra.mxu0 0.0
        %360 = vmatprep.subr.mxu0 0.0
        %361 = vmatpush2.msra.mxu0 0.0
        %362 = vmatprep.mubr.f32.mxu0 0.0
        %363 = vmatmul.mubr.f32.gmra.mxu0 %v290
        %v364 = vpop.f32.mrf.mxu0
        %v365 = vadd.f32 %v286, %v364
        %v366 = vpop.f32.mrf.mxu0
        %367 = vmatprep.mubr.f32.mxu0 0.0
        %368 = vmatmul.mubr.f32.gmra.mxu0 %v293
        %v369 = vpop.f32.mrf.mxu0
        %v370 = vadd.f32 %v286, %v369
        %v371 = vpop.f32.mrf.mxu0
        %372 = vmatprep.mubr.f32.mxu0 0.0
        %373 = vmatmul.mubr.f32.gmra.mxu0 %v296
        %v374 = vpop.f32.mrf.mxu0
        %v375 = vadd.f32 %v286, %v374
        %v376 = vpop.f32.mrf.mxu0
        %377 = vdwg.mxu0
        %v378 = vlaneseq
        %v379 = vshrl.u32 %v378, 7
        %v380 = vlaneseq
        %v381 = vand.u32 %v380, 127
        %vm382 = vcmp.le.s32.totalorder %v381, %v379
        %v383 = vsel %vm382, 0.0, -1e+30
        %385 = vrot.lane.b32.xlu0 %v365, 96
        %v386 = vpop.permute.xlu0 %385
        %vm387 = vcmask 64512
        %v388 = vsel %vm387, %v365, 0
        %v390 = vsel %vm387, %v386, 0
        %392 = vmatprep.subr.mxu0 0.0
        %393 = vmatpush1.xpose.msra.mxu0 0.0
        %394 = vmatprep.subr.mxu0 0.0
        %395 = vmatpush1.xpose.msra.mxu0 0.0
        %396 = vmatprep.subr.mxu0 0.0
        %397 = vmatpush1.xpose.msra.mxu0 0.0
        %398 = vmatprep.subr.mxu0 0.0
        %399 = vmatpush1.xpose.msra.mxu0 0.0
        %400 = vmatprep.subr.mxu0 0.0
        %401 = vmatpush1.xpose.msra.mxu0 0.0
        %402 = vmatprep.subr.mxu0 0.0
        %403 = vmatpush1.xpose.msra.mxu0 0.0
        %404 = vmatprep.subr.mxu0 0.0
        %405 = vmatpush1.xpose.msra.mxu0 0.0
        %406 = vmatprep.subr.mxu0 0.0
        %407 = vmatpush1.xpose.msra.mxu0 0.0
        %408 = vmatprep.subr.mxu0 0.0
        %409 = vmatpush1.xpose.msra.mxu0 0.0
        %410 = vmatprep.subr.mxu0 0.0
        %411 = vmatpush1.xpose.msra.mxu0 0.0
        %412 = vmatprep.subr.mxu0 0.0
        %413 = vmatpush1.xpose.msra.mxu0 0.0
        %414 = vmatprep.subr.mxu0 0.0
        %415 = vmatpush1.xpose.msra.mxu0 0.0
        %416 = vmatprep.subr.mxu0 0.0
        %417 = vmatpush1.xpose.msra.mxu0 0.0
        %418 = vmatprep.subr.mxu0 0.0
        %419 = vmatpush1.xpose.msra.mxu0 0.0
        %420 = vmatprep.subr.mxu0 0.0
        %421 = vmatpush1.xpose.msra.mxu0 0.0
        %422 = vmatprep.subr.mxu0 0.0
        %423 = vmatpush1.xpose.msra.mxu0 %v390
        %424 = vmatprep.subr.mxu0 0.0
        %425 = vmatpush2.xpose.msra.mxu0 0.0
        %426 = vmatprep.subr.mxu0 0.0
        %427 = vmatpush2.xpose.msra.mxu0 0.0
        %428 = vmatprep.subr.mxu0 0.0
        %429 = vmatpush2.xpose.msra.mxu0 0.0
        %430 = vmatprep.subr.mxu0 0.0
        %431 = vmatpush2.xpose.msra.mxu0 0.0
        %432 = vmatprep.subr.mxu0 0.0
        %433 = vmatpush2.xpose.msra.mxu0 0.0
        %434 = vmatprep.subr.mxu0 0.0
        %435 = vmatpush2.xpose.msra.mxu0 0.0
        %436 = vmatprep.subr.mxu0 0.0
        %437 = vmatpush2.xpose.msra.mxu0 0.0
        %438 = vmatprep.subr.mxu0 0.0
        %439 = vmatpush2.xpose.msra.mxu0 0.0
        %440 = vmatprep.subr.mxu0 0.0
        %441 = vmatpush2.xpose.msra.mxu0 0.0
        %442 = vmatprep.subr.mxu0 0.0
        %443 = vmatpush2.xpose.msra.mxu0 0.0
        %444 = vmatprep.subr.mxu0 0.0
        %445 = vmatpush2.xpose.msra.mxu0 0.0
        %446 = vmatprep.subr.mxu0 0.0
        %447 = vmatpush2.xpose.msra.mxu0 0.0
        %448 = vmatprep.subr.mxu0 0.0
        %449 = vmatpush2.xpose.msra.mxu0 0.0
        %450 = vmatprep.subr.mxu0 0.0
        %451 = vmatpush2.xpose.msra.mxu0 0.0
        %452 = vmatprep.subr.mxu0 0.0
        %453 = vmatpush2.xpose.msra.mxu0 0.0
        %454 = vmatprep.subr.mxu0 0.0
        %455 = vmatpush2.xpose.msra.mxu0 0.0
        %456 = vmatprep.mubr.f32.mxu0 0.0
        %457 = vmatmul.mubr.f32.gmra.mxu0 %v388
        %v458 = vpop.f32.mrf.mxu0
        %v459 = vadd.f32 %v383, %v458
        %v460 = vpop.f32.mrf.mxu0
        %461 = vdwg.mxu0
        %463 = vrot.lane.b32.xlu0 %v370, 96
        %v464 = vpop.permute.xlu0 %463
        %v465 = vsel %vm387, %v370, 0
        %v467 = vsel %vm387, %v464, 0
        %469 = vmatprep.subr.mxu0 0.0
        %470 = vmatpush1.xpose.msra.mxu0 0.0
        %471 = vmatprep.subr.mxu0 0.0
        %472 = vmatpush1.xpose.msra.mxu0 0.0
        %473 = vmatprep.subr.mxu0 0.0
        %474 = vmatpush1.xpose.msra.mxu0 0.0
        %475 = vmatprep.subr.mxu0 0.0
        %476 = vmatpush1.xpose.msra.mxu0 0.0
        %477 = vmatprep.subr.mxu0 0.0
        %478 = vmatpush1.xpose.msra.mxu0 0.0
        %479 = vmatprep.subr.mxu0 0.0
        %480 = vmatpush1.xpose.msra.mxu0 0.0
        %481 = vmatprep.subr.mxu0 0.0
        %482 = vmatpush1.xpose.msra.mxu0 0.0
        %483 = vmatprep.subr.mxu0 0.0
        %484 = vmatpush1.xpose.msra.mxu0 0.0
        %485 = vmatprep.subr.mxu0 0.0
        %486 = vmatpush1.xpose.msra.mxu0 0.0
        %487 = vmatprep.subr.mxu0 0.0
        %488 = vmatpush1.xpose.msra.mxu0 0.0
        %489 = vmatprep.subr.mxu0 0.0
        %490 = vmatpush1.xpose.msra.mxu0 0.0
        %491 = vmatprep.subr.mxu0 0.0
        %492 = vmatpush1.xpose.msra.mxu0 0.0
        %493 = vmatprep.subr.mxu0 0.0
        %494 = vmatpush1.xpose.msra.mxu0 0.0
        %495 = vmatprep.subr.mxu0 0.0
        %496 = vmatpush1.xpose.msra.mxu0 0.0
        %497 = vmatprep.subr.mxu0 0.0
        %498 = vmatpush1.xpose.msra.mxu0 0.0
        %499 = vmatprep.subr.mxu0 0.0
        %500 = vmatpush1.xpose.msra.mxu0 %v467
        %501 = vmatprep.subr.mxu0 0.0
        %502 = vmatpush2.xpose.msra.mxu0 0.0
        %503 = vmatprep.subr.mxu0 0.0
        %504 = vmatpush2.xpose.msra.mxu0 0.0
        %505 = vmatprep.subr.mxu0 0.0
        %506 = vmatpush2.xpose.msra.mxu0 0.0
        %507 = vmatprep.subr.mxu0 0.0
        %508 = vmatpush2.xpose.msra.mxu0 0.0
        %509 = vmatprep.subr.mxu0 0.0
        %510 = vmatpush2.xpose.msra.mxu0 0.0
        %511 = vmatprep.subr.mxu0 0.0
        %512 = vmatpush2.xpose.msra.mxu0 0.0
        %513 = vmatprep.subr.mxu0 0.0
        %514 = vmatpush2.xpose.msra.mxu0 0.0
        %515 = vmatprep.subr.mxu0 0.0
        %516 = vmatpush2.xpose.msra.mxu0 0.0
        %517 = vmatprep.subr.mxu0 0.0
        %518 = vmatpush2.xpose.msra.mxu0 0.0
        %519 = vmatprep.subr.mxu0 0.0
        %520 = vmatpush2.xpose.msra.mxu0 0.0
        %521 = vmatprep.subr.mxu0 0.0
        %522 = vmatpush2.xpose.msra.mxu0 0.0
        %523 = vmatprep.subr.mxu0 0.0
        %524 = vmatpush2.xpose.msra.mxu0 0.0
        %525 = vmatprep.subr.mxu0 0.0
        %526 = vmatpush2.xpose.msra.mxu0 0.0
        %527 = vmatprep.subr.mxu0 0.0
        %528 = vmatpush2.xpose.msra.mxu0 0.0
        %529 = vmatprep.subr.mxu0 0.0
        %530 = vmatpush2.xpose.msra.mxu0 0.0
        %531 = vmatprep.subr.mxu0 0.0
        %532 = vmatpush2.xpose.msra.mxu0 0.0
        %533 = vmatprep.mubr.f32.mxu0 0.0
        %534 = vmatmul.mubr.f32.gmra.mxu0 %v465
        %v535 = vpop.f32.mrf.mxu0
        %v536 = vadd.f32 %v383, %v535
        %v537 = vpop.f32.mrf.mxu0
        %538 = vdwg.mxu0
        %540 = vrot.lane.b32.xlu0 %v375, 96
        %v541 = vpop.permute.xlu0 %540
        %v542 = vsel %vm387, %v375, 0
        %v544 = vsel %vm387, %v541, 0
        %546 = vmatprep.subr.mxu0 0.0
        %547 = vmatpush1.xpose.msra.mxu0 0.0
        %548 = vmatprep.subr.mxu0 0.0
        %549 = vmatpush1.xpose.msra.mxu0 0.0
        %550 = vmatprep.subr.mxu0 0.0
        %551 = vmatpush1.xpose.msra.mxu0 0.0
        %552 = vmatprep.subr.mxu0 0.0
        %553 = vmatpush1.xpose.msra.mxu0 0.0
        %554 = vmatprep.subr.mxu0 0.0
        %555 = vmatpush1.xpose.msra.mxu0 0.0
        %556 = vmatprep.subr.mxu0 0.0
        %557 = vmatpush1.xpose.msra.mxu0 0.0
        %558 = vmatprep.subr.mxu0 0.0
        %559 = vmatpush1.xpose.msra.mxu0 0.0
        %560 = vmatprep.subr.mxu0 0.0
        %561 = vmatpush1.xpose.msra.mxu0 0.0
        %562 = vmatprep.subr.mxu0 0.0
        %563 = vmatpush1.xpose.msra.mxu0 0.0
        %564 = vmatprep.subr.mxu0 0.0
        %565 = vmatpush1.xpose.msra.mxu0 0.0
        %566 = vmatprep.subr.mxu0 0.0
        %567 = vmatpush1.xpose.msra.mxu0 0.0
        %568 = vmatprep.subr.mxu0 0.0
        %569 = vmatpush1.xpose.msra.mxu0 0.0
        %570 = vmatprep.subr.mxu0 0.0
        %571 = vmatpush1.xpose.msra.mxu0 0.0
        %572 = vmatprep.subr.mxu0 0.0
        %573 = vmatpush1.xpose.msra.mxu0 0.0
        %574 = vmatprep.subr.mxu0 0.0
        %575 = vmatpush1.xpose.msra.mxu0 0.0
        %576 = vmatprep.subr.mxu0 0.0
        %577 = vmatpush1.xpose.msra.mxu0 %v544
        %578 = vmatprep.subr.mxu0 0.0
        %579 = vmatpush2.xpose.msra.mxu0 0.0
        %580 = vmatprep.subr.mxu0 0.0
        %581 = vmatpush2.xpose.msra.mxu0 0.0
        %582 = vmatprep.subr.mxu0 0.0
        %583 = vmatpush2.xpose.msra.mxu0 0.0
        %584 = vmatprep.subr.mxu0 0.0
        %585 = vmatpush2.xpose.msra.mxu0 0.0
        %586 = vmatprep.subr.mxu0 0.0
        %587 = vmatpush2.xpose.msra.mxu0 0.0
        %588 = vmatprep.subr.mxu0 0.0
        %589 = vmatpush2.xpose.msra.mxu0 0.0
        %590 = vmatprep.subr.mxu0 0.0
        %591 = vmatpush2.xpose.msra.mxu0 0.0
        %592 = vmatprep.subr.mxu0 0.0
        %593 = vmatpush2.xpose.msra.mxu0 0.0
        %594 = vmatprep.subr.mxu0 0.0
        %595 = vmatpush2.xpose.msra.mxu0 0.0
        %596 = vmatprep.subr.mxu0 0.0
        %597 = vmatpush2.xpose.msra.mxu0 0.0
        %598 = vmatprep.subr.mxu0 0.0
        %599 = vmatpush2.xpose.msra.mxu0 0.0
        %600 = vmatprep.subr.mxu0 0.0
        %601 = vmatpush2.xpose.msra.mxu0 0.0
        %602 = vmatprep.subr.mxu0 0.0
        %603 = vmatpush2.xpose.msra.mxu0 0.0
        %604 = vmatprep.subr.mxu0 0.0
        %605 = vmatpush2.xpose.msra.mxu0 0.0
        %606 = vmatprep.subr.mxu0 0.0
        %607 = vmatpush2.xpose.msra.mxu0 0.0
        %608 = vmatprep.subr.mxu0 0.0
        %609 = vmatpush2.xpose.msra.mxu0 0.0
        %610 = vmatprep.mubr.f32.mxu0 0.0
        %611 = vmatmul.mubr.f32.gmra.mxu0 %v542
        %v612 = vpop.f32.mrf.mxu0
        %v613 = vadd.f32 %v383, %v612
        %v614 = vpop.f32.mrf.mxu0
        %615 = vdwg.mxu0
        %v616 = vsel %vm387, %v459, -inf
        %617 = vmax.xlane.f32.xlu0 %v616
        %v618 = vpop.xlane.xlu0 %617
        %v619 = vsel %vm387, %v536, -inf
        %620 = vmax.xlane.f32.xlu0 %v619
        %v621 = vpop.xlane.xlu0 %620
        %v622 = vsel %vm387, %v613, -inf
        %623 = vmax.xlane.f32.xlu0 %v622
        %v624 = vpop.xlane.xlu0 %623
        %v625 = vsub.f32 %v459, %v618
        %v626 = vsub.f32 %v536, %v621
        %v627 = vsub.f32 %v613, %v624
        %v628 = vmul.f32 %v625, 1.442695
        %v629 = vpow.pop %v628
        %v630 = vmul.f32 %v626, 1.442695
        %v631 = vpow.pop %v630
        %v632 = vmul.f32 %v627, 1.442695
        %v633 = vpow.pop %v632
        %v634 = vsel %vm387, %v629, 0.0
        %635 = vadd.xlane.f32.xlu0 %v634
        %v636 = vpop.xlane.xlu0 %635
        %v637 = vsel %vm387, %v631, 0.0
        %638 = vadd.xlane.f32.xlu0 %v637
        %v639 = vpop.xlane.xlu0 %638
        %v640 = vsel %vm387, %v633, 0.0
        %641 = vadd.xlane.f32.xlu0 %v640
        %v642 = vpop.xlane.xlu0 %641
        %643 = vrot.lane.b32.xlu0 %v365, 64
        %v644 = vpop.permute.xlu0 %643
        %v647 = vsel %vm387, %v629, 0
        %649 = vmatprep.subr.mxu0 0.0
        %650 = vmatpush1.msra.mxu0 0.0
        %651 = vmatprep.subr.mxu0 0.0
        %652 = vmatpush1.msra.mxu0 0.0
        %653 = vmatprep.subr.mxu0 0.0
        %654 = vmatpush1.msra.mxu0 0.0
        %655 = vmatprep.subr.mxu0 0.0
        %656 = vmatpush1.msra.mxu0 0.0
        %657 = vmatprep.subr.mxu0 0.0
        %658 = vmatpush1.msra.mxu0 0.0
        %659 = vmatprep.subr.mxu0 0.0
        %660 = vmatpush1.msra.mxu0 0.0
        %661 = vmatprep.subr.mxu0 0.0
        %662 = vmatpush1.msra.mxu0 0.0
        %663 = vmatprep.subr.mxu0 0.0
        %664 = vmatpush1.msra.mxu0 0.0
        %665 = vmatprep.subr.mxu0 0.0
        %666 = vmatpush1.msra.mxu0 0.0
        %667 = vmatprep.subr.mxu0 0.0
        %668 = vmatpush1.msra.mxu0 0.0
        %669 = vmatprep.subr.mxu0 0.0
        %670 = vmatpush1.msra.mxu0 0.0
        %671 = vmatprep.subr.mxu0 0.0
        %672 = vmatpush1.msra.mxu0 0.0
        %673 = vmatprep.subr.mxu0 0.0
        %674 = vmatpush1.msra.mxu0 0.0
        %675 = vmatprep.subr.mxu0 0.0
        %676 = vmatpush1.msra.mxu0 0.0
        %677 = vmatprep.subr.mxu0 0.0
        %678 = vmatpush1.msra.mxu0 0.0
        %679 = vmatprep.subr.mxu0 0.0
        %680 = vmatpush1.msra.mxu0 %v644
        %681 = vmatprep.subr.mxu0 0.0
        %682 = vmatpush2.msra.mxu0 0.0
        %683 = vmatprep.subr.mxu0 0.0
        %684 = vmatpush2.msra.mxu0 0.0
        %685 = vmatprep.subr.mxu0 0.0
        %686 = vmatpush2.msra.mxu0 0.0
        %687 = vmatprep.subr.mxu0 0.0
        %688 = vmatpush2.msra.mxu0 0.0
        %689 = vmatprep.subr.mxu0 0.0
        %690 = vmatpush2.msra.mxu0 0.0
        %691 = vmatprep.subr.mxu0 0.0
        %692 = vmatpush2.msra.mxu0 0.0
        %693 = vmatprep.subr.mxu0 0.0
        %694 = vmatpush2.msra.mxu0 0.0
        %695 = vmatprep.subr.mxu0 0.0
        %696 = vmatpush2.msra.mxu0 0.0
        %697 = vmatprep.subr.mxu0 0.0
        %698 = vmatpush2.msra.mxu0 0.0
        %699 = vmatprep.subr.mxu0 0.0
        %700 = vmatpush2.msra.mxu0 0.0
        %701 = vmatprep.subr.mxu0 0.0
        %702 = vmatpush2.msra.mxu0 0.0
        %703 = vmatprep.subr.mxu0 0.0
        %704 = vmatpush2.msra.mxu0 0.0
        %705 = vmatprep.subr.mxu0 0.0
        %706 = vmatpush2.msra.mxu0 0.0
        %707 = vmatprep.subr.mxu0 0.0
        %708 = vmatpush2.msra.mxu0 0.0
        %709 = vmatprep.subr.mxu0 0.0
        %710 = vmatpush2.msra.mxu0 0.0
        %711 = vmatprep.subr.mxu0 0.0
        %712 = vmatpush2.msra.mxu0 0.0
        %713 = vmatprep.mubr.f32.mxu0 0.0
        %714 = vmatmul.mubr.f32.gmra.mxu0 %v647
        %v715 = vpop.f32.mrf.mxu0
        %v716 = vadd.f32 0.0, %v715
        %v717 = vpop.f32.mrf.mxu0
        %718 = vdwg.mxu0
        %719 = vrot.lane.b32.xlu0 %v370, 64
        %v720 = vpop.permute.xlu0 %719
        %v723 = vsel %vm387, %v631, 0
        %725 = vmatprep.subr.mxu0 0.0
        %726 = vmatpush1.msra.mxu0 0.0
        %727 = vmatprep.subr.mxu0 0.0
        %728 = vmatpush1.msra.mxu0 0.0
        %729 = vmatprep.subr.mxu0 0.0
        %730 = vmatpush1.msra.mxu0 0.0
        %731 = vmatprep.subr.mxu0 0.0
        %732 = vmatpush1.msra.mxu0 0.0
        %733 = vmatprep.subr.mxu0 0.0
        %734 = vmatpush1.msra.mxu0 0.0
        %735 = vmatprep.subr.mxu0 0.0
        %736 = vmatpush1.msra.mxu0 0.0
        %737 = vmatprep.subr.mxu0 0.0
        %738 = vmatpush1.msra.mxu0 0.0
        %739 = vmatprep.subr.mxu0 0.0
        %740 = vmatpush1.msra.mxu0 0.0
        %741 = vmatprep.subr.mxu0 0.0
        %742 = vmatpush1.msra.mxu0 0.0
        %743 = vmatprep.subr.mxu0 0.0
        %744 = vmatpush1.msra.mxu0 0.0
        %745 = vmatprep.subr.mxu0 0.0
        %746 = vmatpush1.msra.mxu0 0.0
        %747 = vmatprep.subr.mxu0 0.0
        %748 = vmatpush1.msra.mxu0 0.0
        %749 = vmatprep.subr.mxu0 0.0
        %750 = vmatpush1.msra.mxu0 0.0
        %751 = vmatprep.subr.mxu0 0.0
        %752 = vmatpush1.msra.mxu0 0.0
        %753 = vmatprep.subr.mxu0 0.0
        %754 = vmatpush1.msra.mxu0 0.0
        %755 = vmatprep.subr.mxu0 0.0
        %756 = vmatpush1.msra.mxu0 %v720
        %757 = vmatprep.subr.mxu0 0.0
        %758 = vmatpush2.msra.mxu0 0.0
        %759 = vmatprep.subr.mxu0 0.0
        %760 = vmatpush2.msra.mxu0 0.0
        %761 = vmatprep.subr.mxu0 0.0
        %762 = vmatpush2.msra.mxu0 0.0
        %763 = vmatprep.subr.mxu0 0.0
        %764 = vmatpush2.msra.mxu0 0.0
        %765 = vmatprep.subr.mxu0 0.0
        %766 = vmatpush2.msra.mxu0 0.0
        %767 = vmatprep.subr.mxu0 0.0
        %768 = vmatpush2.msra.mxu0 0.0
        %769 = vmatprep.subr.mxu0 0.0
        %770 = vmatpush2.msra.mxu0 0.0
        %771 = vmatprep.subr.mxu0 0.0
        %772 = vmatpush2.msra.mxu0 0.0
        %773 = vmatprep.subr.mxu0 0.0
        %774 = vmatpush2.msra.mxu0 0.0
        %775 = vmatprep.subr.mxu0 0.0
        %776 = vmatpush2.msra.mxu0 0.0
        %777 = vmatprep.subr.mxu0 0.0
        %778 = vmatpush2.msra.mxu0 0.0
        %779 = vmatprep.subr.mxu0 0.0
        %780 = vmatpush2.msra.mxu0 0.0
        %781 = vmatprep.subr.mxu0 0.0
        %782 = vmatpush2.msra.mxu0 0.0
        %783 = vmatprep.subr.mxu0 0.0
        %784 = vmatpush2.msra.mxu0 0.0
        %785 = vmatprep.subr.mxu0 0.0
        %786 = vmatpush2.msra.mxu0 0.0
        %787 = vmatprep.subr.mxu0 0.0
        %788 = vmatpush2.msra.mxu0 0.0
        %789 = vmatprep.mubr.f32.mxu0 0.0
        %790 = vmatmul.mubr.f32.gmra.mxu0 %v723
        %v791 = vpop.f32.mrf.mxu0
        %v792 = vadd.f32 0.0, %v791
        %v793 = vpop.f32.mrf.mxu0
        %794 = vdwg.mxu0
        %795 = vrot.lane.b32.xlu0 %v375, 64
        %v796 = vpop.permute.xlu0 %795
        %v799 = vsel %vm387, %v633, 0
        %801 = vmatprep.subr.mxu0 0.0
        %802 = vmatpush1.msra.mxu0 0.0
        %803 = vmatprep.subr.mxu0 0.0
        %804 = vmatpush1.msra.mxu0 0.0
        %805 = vmatprep.subr.mxu0 0.0
        %806 = vmatpush1.msra.mxu0 0.0
        %807 = vmatprep.subr.mxu0 0.0
        %808 = vmatpush1.msra.mxu0 0.0
        %809 = vmatprep.subr.mxu0 0.0
        %810 = vmatpush1.msra.mxu0 0.0
        %811 = vmatprep.subr.mxu0 0.0
        %812 = vmatpush1.msra.mxu0 0.0
        %813 = vmatprep.subr.mxu0 0.0
        %814 = vmatpush1.msra.mxu0 0.0
        %815 = vmatprep.subr.mxu0 0.0
        %816 = vmatpush1.msra.mxu0 0.0
        %817 = vmatprep.subr.mxu0 0.0
        %818 = vmatpush1.msra.mxu0 0.0
        %819 = vmatprep.subr.mxu0 0.0
        %820 = vmatpush1.msra.mxu0 0.0
        %821 = vmatprep.subr.mxu0 0.0
        %822 = vmatpush1.msra.mxu0 0.0
        %823 = vmatprep.subr.mxu0 0.0
        %824 = vmatpush1.msra.mxu0 0.0
        %825 = vmatprep.subr.mxu0 0.0
        %826 = vmatpush1.msra.mxu0 0.0
        %827 = vmatprep.subr.mxu0 0.0
        %828 = vmatpush1.msra.mxu0 0.0
        %829 = vmatprep.subr.mxu0 0.0
        %830 = vmatpush1.msra.mxu0 0.0
        %831 = vmatprep.subr.mxu0 0.0
        %832 = vmatpush1.msra.mxu0 %v796
        %833 = vmatprep.subr.mxu0 0.0
        %834 = vmatpush2.msra.mxu0 0.0
        %835 = vmatprep.subr.mxu0 0.0
        %836 = vmatpush2.msra.mxu0 0.0
        %837 = vmatprep.subr.mxu0 0.0
        %838 = vmatpush2.msra.mxu0 0.0
        %839 = vmatprep.subr.mxu0 0.0
        %840 = vmatpush2.msra.mxu0 0.0
        %841 = vmatprep.subr.mxu0 0.0
        %842 = vmatpush2.msra.mxu0 0.0
        %843 = vmatprep.subr.mxu0 0.0
        %844 = vmatpush2.msra.mxu0 0.0
        %845 = vmatprep.subr.mxu0 0.0
        %846 = vmatpush2.msra.mxu0 0.0
        %847 = vmatprep.subr.mxu0 0.0
        %848 = vmatpush2.msra.mxu0 0.0
        %849 = vmatprep.subr.mxu0 0.0
        %850 = vmatpush2.msra.mxu0 0.0
        %851 = vmatprep.subr.mxu0 0.0
        %852 = vmatpush2.msra.mxu0 0.0
        %853 = vmatprep.subr.mxu0 0.0
        %854 = vmatpush2.msra.mxu0 0.0
        %855 = vmatprep.subr.mxu0 0.0
        %856 = vmatpush2.msra.mxu0 0.0
        %857 = vmatprep.subr.mxu0 0.0
        %858 = vmatpush2.msra.mxu0 0.0
        %859 = vmatprep.subr.mxu0 0.0
        %860 = vmatpush2.msra.mxu0 0.0
        %861 = vmatprep.subr.mxu0 0.0
        %862 = vmatpush2.msra.mxu0 0.0
        %863 = vmatprep.subr.mxu0 0.0
        %864 = vmatpush2.msra.mxu0 0.0
        %865 = vmatprep.mubr.f32.mxu0 0.0
        %866 = vmatmul.mubr.f32.gmra.mxu0 %v799
        %v867 = vpop.f32.mrf.mxu0
        %v868 = vadd.f32 0.0, %v867
        %v869 = vpop.f32.mrf.mxu0
        %870 = vdwg.mxu0
        %v871 = vrcp.pop %v636
        %v872 = vrcp.pop %v639
        %v873 = vrcp.pop %v642
        %v874 = vmul.f32 %v716, %v871
        %v875 = vmul.f32 %v792, %v872
        %v876 = vmul.f32 %v868, %v873
        %877 = vst.msk [vmem:[#allocation2] sm:$0xff] %vm387, %v874
        %878 = vst.msk [vmem:[#allocation2 + $0x8] sm:$0xff] %vm387, %v875
        %879 = vst.msk [vmem:[#allocation2 + $0x10] sm:$0xff] %vm387, %v876
        %880 = vrot.lane.b32.xlu0 %v365, 120
        %v881 = vpop.permute.xlu0 %880
        %882 = vrot.lane.b32.xlu0 %v365, 88
        %v883 = vpop.permute.xlu0 %882
        %v884 = vsel %vm387, %v881, 0
        %v886 = vsel %vm387, %v883, 0
        %888 = vmatprep.subr.mxu0 0.0
        %889 = vmatpush1.xpose.msra.mxu0 0.0
        %890 = vmatprep.subr.mxu0 0.0
        %891 = vmatpush1.xpose.msra.mxu0 0.0
        %892 = vmatprep.subr.mxu0 0.0
        %893 = vmatpush1.xpose.msra.mxu0 0.0
        %894 = vmatprep.subr.mxu0 0.0
        %895 = vmatpush1.xpose.msra.mxu0 0.0
        %896 = vmatprep.subr.mxu0 0.0
        %897 = vmatpush1.xpose.msra.mxu0 0.0
        %898 = vmatprep.subr.mxu0 0.0
        %899 = vmatpush1.xpose.msra.mxu0 0.0
        %900 = vmatprep.subr.mxu0 0.0
        %901 = vmatpush1.xpose.msra.mxu0 0.0
        %902 = vmatprep.subr.mxu0 0.0
        %903 = vmatpush1.xpose.msra.mxu0 0.0
        %904 = vmatprep.subr.mxu0 0.0
        %905 = vmatpush1.xpose.msra.mxu0 0.0
        %906 = vmatprep.subr.mxu0 0.0
        %907 = vmatpush1.xpose.msra.mxu0 0.0
        %908 = vmatprep.subr.mxu0 0.0
        %909 = vmatpush1.xpose.msra.mxu0 0.0
        %910 = vmatprep.subr.mxu0 0.0
        %911 = vmatpush1.xpose.msra.mxu0 0.0
        %912 = vmatprep.subr.mxu0 0.0
        %913 = vmatpush1.xpose.msra.mxu0 0.0
        %914 = vmatprep.subr.mxu0 0.0
        %915 = vmatpush1.xpose.msra.mxu0 0.0
        %916 = vmatprep.subr.mxu0 0.0
        %917 = vmatpush1.xpose.msra.mxu0 0.0
        %918 = vmatprep.subr.mxu0 0.0
        %919 = vmatpush1.xpose.msra.mxu0 %v886
        %920 = vmatprep.subr.mxu0 0.0
        %921 = vmatpush2.xpose.msra.mxu0 0.0
        %922 = vmatprep.subr.mxu0 0.0
        %923 = vmatpush2.xpose.msra.mxu0 0.0
        %924 = vmatprep.subr.mxu0 0.0
        %925 = vmatpush2.xpose.msra.mxu0 0.0
        %926 = vmatprep.subr.mxu0 0.0
        %927 = vmatpush2.xpose.msra.mxu0 0.0
        %928 = vmatprep.subr.mxu0 0.0
        %929 = vmatpush2.xpose.msra.mxu0 0.0
        %930 = vmatprep.subr.mxu0 0.0
        %931 = vmatpush2.xpose.msra.mxu0 0.0
        %932 = vmatprep.subr.mxu0 0.0
        %933 = vmatpush2.xpose.msra.mxu0 0.0
        %934 = vmatprep.subr.mxu0 0.0
        %935 = vmatpush2.xpose.msra.mxu0 0.0
        %936 = vmatprep.subr.mxu0 0.0
        %937 = vmatpush2.xpose.msra.mxu0 0.0
        %938 = vmatprep.subr.mxu0 0.0
        %939 = vmatpush2.xpose.msra.mxu0 0.0
        %940 = vmatprep.subr.mxu0 0.0
        %941 = vmatpush2.xpose.msra.mxu0 0.0
        %942 = vmatprep.subr.mxu0 0.0
        %943 = vmatpush2.xpose.msra.mxu0 0.0
        %944 = vmatprep.subr.mxu0 0.0
        %945 = vmatpush2.xpose.msra.mxu0 0.0
        %946 = vmatprep.subr.mxu0 0.0
        %947 = vmatpush2.xpose.msra.mxu0 0.0
        %948 = vmatprep.subr.mxu0 0.0
        %949 = vmatpush2.xpose.msra.mxu0 0.0
        %950 = vmatprep.subr.mxu0 0.0
        %951 = vmatpush2.xpose.msra.mxu0 0.0
        %952 = vmatprep.mubr.f32.mxu0 0.0
        %953 = vmatmul.mubr.f32.gmra.mxu0 %v884
        %v954 = vpop.f32.mrf.mxu0
        %v955 = vadd.f32 %v383, %v954
        %v956 = vpop.f32.mrf.mxu0
        %957 = vdwg.mxu0
        %958 = vrot.lane.b32.xlu0 %v370, 120
        %v959 = vpop.permute.xlu0 %958
        %960 = vrot.lane.b32.xlu0 %v370, 88
        %v961 = vpop.permute.xlu0 %960
        %v962 = vsel %vm387, %v959, 0
        %v964 = vsel %vm387, %v961, 0
        %966 = vmatprep.subr.mxu0 0.0
        %967 = vmatpush1.xpose.msra.mxu0 0.0
        %968 = vmatprep.subr.mxu0 0.0
        %969 = vmatpush1.xpose.msra.mxu0 0.0
        %970 = vmatprep.subr.mxu0 0.0
        %971 = vmatpush1.xpose.msra.mxu0 0.0
        %972 = vmatprep.subr.mxu0 0.0
        %973 = vmatpush1.xpose.msra.mxu0 0.0
        %974 = vmatprep.subr.mxu0 0.0
        %975 = vmatpush1.xpose.msra.mxu0 0.0
        %976 = vmatprep.subr.mxu0 0.0
        %977 = vmatpush1.xpose.msra.mxu0 0.0
        %978 = vmatprep.subr.mxu0 0.0
        %979 = vmatpush1.xpose.msra.mxu0 0.0
        %980 = vmatprep.subr.mxu0 0.0
        %981 = vmatpush1.xpose.msra.mxu0 0.0
        %982 = vmatprep.subr.mxu0 0.0
        %983 = vmatpush1.xpose.msra.mxu0 0.0
        %984 = vmatprep.subr.mxu0 0.0
        %985 = vmatpush1.xpose.msra.mxu0 0.0
        %986 = vmatprep.subr.mxu0 0.0
        %987 = vmatpush1.xpose.msra.mxu0 0.0
        %988 = vmatprep.subr.mxu0 0.0
        %989 = vmatpush1.xpose.msra.mxu0 0.0
        %990 = vmatprep.subr.mxu0 0.0
        %991 = vmatpush1.xpose.msra.mxu0 0.0
        %992 = vmatprep.subr.mxu0 0.0
        %993 = vmatpush1.xpose.msra.mxu0 0.0
        %994 = vmatprep.subr.mxu0 0.0
        %995 = vmatpush1.xpose.msra.mxu0 0.0
        %996 = vmatprep.subr.mxu0 0.0
        %997 = vmatpush1.xpose.msra.mxu0 %v964
        %998 = vmatprep.subr.mxu0 0.0
        %999 = vmatpush2.xpose.msra.mxu0 0.0
        %1000 = vmatprep.subr.mxu0 0.0
        %1001 = vmatpush2.xpose.msra.mxu0 0.0
        %1002 = vmatprep.subr.mxu0 0.0
        %1003 = vmatpush2.xpose.msra.mxu0 0.0
        %1004 = vmatprep.subr.mxu0 0.0
        %1005 = vmatpush2.xpose.msra.mxu0 0.0
        %1006 = vmatprep.subr.mxu0 0.0
        %1007 = vmatpush2.xpose.msra.mxu0 0.0
        %1008 = vmatprep.subr.mxu0 0.0
        %1009 = vmatpush2.xpose.msra.mxu0 0.0
        %1010 = vmatprep.subr.mxu0 0.0
        %1011 = vmatpush2.xpose.msra.mxu0 0.0
        %1012 = vmatprep.subr.mxu0 0.0
        %1013 = vmatpush2.xpose.msra.mxu0 0.0
        %1014 = vmatprep.subr.mxu0 0.0
        %1015 = vmatpush2.xpose.msra.mxu0 0.0
        %1016 = vmatprep.subr.mxu0 0.0
        %1017 = vmatpush2.xpose.msra.mxu0 0.0
        %1018 = vmatprep.subr.mxu0 0.0
        %1019 = vmatpush2.xpose.msra.mxu0 0.0
        %1020 = vmatprep.subr.mxu0 0.0
        %1021 = vmatpush2.xpose.msra.mxu0 0.0
        %1022 = vmatprep.subr.mxu0 0.0
        %1023 = vmatpush2.xpose.msra.mxu0 0.0
        %1024 = vmatprep.subr.mxu0 0.0
        %1025 = vmatpush2.xpose.msra.mxu0 0.0
        %1026 = vmatprep.subr.mxu0 0.0
        %1027 = vmatpush2.xpose.msra.mxu0 0.0
        %1028 = vmatprep.subr.mxu0 0.0
        %1029 = vmatpush2.xpose.msra.mxu0 0.0
        %1030 = vmatprep.mubr.f32.mxu0 0.0
        %1031 = vmatmul.mubr.f32.gmra.mxu0 %v962
        %v1032 = vpop.f32.mrf.mxu0
        %v1033 = vadd.f32 %v383, %v1032
        %v1034 = vpop.f32.mrf.mxu0
        %1035 = vdwg.mxu0
        %1036 = vrot.lane.b32.xlu0 %v375, 120
        %v1037 = vpop.permute.xlu0 %1036
        %1038 = vrot.lane.b32.xlu0 %v375, 88
        %v1039 = vpop.permute.xlu0 %1038
        %v1040 = vsel %vm387, %v1037, 0
        %v1042 = vsel %vm387, %v1039, 0
        %1044 = vmatprep.subr.mxu0 0.0
        %1045 = vmatpush1.xpose.msra.mxu0 0.0
        %1046 = vmatprep.subr.mxu0 0.0
        %1047 = vmatpush1.xpose.msra.mxu0 0.0
        %1048 = vmatprep.subr.mxu0 0.0
        %1049 = vmatpush1.xpose.msra.mxu0 0.0
        %1050 = vmatprep.subr.mxu0 0.0
        %1051 = vmatpush1.xpose.msra.mxu0 0.0
        %1052 = vmatprep.subr.mxu0 0.0
        %1053 = vmatpush1.xpose.msra.mxu0 0.0
        %1054 = vmatprep.subr.mxu0 0.0
        %1055 = vmatpush1.xpose.msra.mxu0 0.0
        %1056 = vmatprep.subr.mxu0 0.0
        %1057 = vmatpush1.xpose.msra.mxu0 0.0
        %1058 = vmatprep.subr.mxu0 0.0
        %1059 = vmatpush1.xpose.msra.mxu0 0.0
        %1060 = vmatprep.subr.mxu0 0.0
        %1061 = vmatpush1.xpose.msra.mxu0 0.0
        %1062 = vmatprep.subr.mxu0 0.0
        %1063 = vmatpush1.xpose.msra.mxu0 0.0
        %1064 = vmatprep.subr.mxu0 0.0
        %1065 = vmatpush1.xpose.msra.mxu0 0.0
        %1066 = vmatprep.subr.mxu0 0.0
        %1067 = vmatpush1.xpose.msra.mxu0 0.0
        %1068 = vmatprep.subr.mxu0 0.0
        %1069 = vmatpush1.xpose.msra.mxu0 0.0
        %1070 = vmatprep.subr.mxu0 0.0
        %1071 = vmatpush1.xpose.msra.mxu0 0.0
        %1072 = vmatprep.subr.mxu0 0.0
        %1073 = vmatpush1.xpose.msra.mxu0 0.0
        %1074 = vmatprep.subr.mxu0 0.0
        %1075 = vmatpush1.xpose.msra.mxu0 %v1042
        %1076 = vmatprep.subr.mxu0 0.0
        %1077 = vmatpush2.xpose.msra.mxu0 0.0
        %1078 = vmatprep.subr.mxu0 0.0
        %1079 = vmatpush2.xpose.msra.mxu0 0.0
        %1080 = vmatprep.subr.mxu0 0.0
        %1081 = vmatpush2.xpose.msra.mxu0 0.0
        %1082 = vmatprep.subr.mxu0 0.0
        %1083 = vmatpush2.xpose.msra.mxu0 0.0
        %1084 = vmatprep.subr.mxu0 0.0
        %1085 = vmatpush2.xpose.msra.mxu0 0.0
        %1086 = vmatprep.subr.mxu0 0.0
        %1087 = vmatpush2.xpose.msra.mxu0 0.0
        %1088 = vmatprep.subr.mxu0 0.0
        %1089 = vmatpush2.xpose.msra.mxu0 0.0
        %1090 = vmatprep.subr.mxu0 0.0
        %1091 = vmatpush2.xpose.msra.mxu0 0.0
        %1092 = vmatprep.subr.mxu0 0.0
        %1093 = vmatpush2.xpose.msra.mxu0 0.0
        %1094 = vmatprep.subr.mxu0 0.0
        %1095 = vmatpush2.xpose.msra.mxu0 0.0
        %1096 = vmatprep.subr.mxu0 0.0
        %1097 = vmatpush2.xpose.msra.mxu0 0.0
        %1098 = vmatprep.subr.mxu0 0.0
        %1099 = vmatpush2.xpose.msra.mxu0 0.0
        %1100 = vmatprep.subr.mxu0 0.0
        %1101 = vmatpush2.xpose.msra.mxu0 0.0
        %1102 = vmatprep.subr.mxu0 0.0
        %1103 = vmatpush2.xpose.msra.mxu0 0.0
        %1104 = vmatprep.subr.mxu0 0.0
        %1105 = vmatpush2.xpose.msra.mxu0 0.0
        %1106 = vmatprep.subr.mxu0 0.0
        %1107 = vmatpush2.xpose.msra.mxu0 0.0
        %1108 = vmatprep.mubr.f32.mxu0 0.0
        %1109 = vmatmul.mubr.f32.gmra.mxu0 %v1040
        %v1110 = vpop.f32.mrf.mxu0
        %v1111 = vadd.f32 %v383, %v1110
        %v1112 = vpop.f32.mrf.mxu0
        %1113 = vdwg.mxu0
        %v1114 = vsel %vm387, %v955, -inf
        %1115 = vmax.xlane.f32.xlu0 %v1114
        %v1116 = vpop.xlane.xlu0 %1115
        %v1117 = vsel %vm387, %v1033, -inf
        %1118 = vmax.xlane.f32.xlu0 %v1117
        %v1119 = vpop.xlane.xlu0 %1118
        %v1120 = vsel %vm387, %v1111, -inf
        %1121 = vmax.xlane.f32.xlu0 %v1120
        %v1122 = vpop.xlane.xlu0 %1121
        %v1123 = vsub.f32 %v955, %v1116
        %v1124 = vsub.f32 %v1033, %v1119
        %v1125 = vsub.f32 %v1111, %v1122
        %v1126 = vmul.f32 %v1123, 1.442695
        %v1127 = vpow.pop %v1126
        %v1128 = vmul.f32 %v1124, 1.442695
        %v1129 = vpow.pop %v1128
        %v1130 = vmul.f32 %v1125, 1.442695
        %v1131 = vpow.pop %v1130
        %v1132 = vsel %vm387, %v1127, 0.0
        %1133 = vadd.xlane.f32.xlu0 %v1132
        %v1134 = vpop.xlane.xlu0 %1133
        %v1135 = vsel %vm387, %v1129, 0.0
        %1136 = vadd.xlane.f32.xlu0 %v1135
        %v1137 = vpop.xlane.xlu0 %1136
        %v1138 = vsel %vm387, %v1131, 0.0
        %1139 = vadd.xlane.f32.xlu0 %v1138
        %v1140 = vpop.xlane.xlu0 %1139
        %1141 = vrot.lane.b32.xlu0 %v365, 56
        %v1142 = vpop.permute.xlu0 %1141
        %v1145 = vsel %vm387, %v1127, 0
        %1147 = vmatprep.subr.mxu0 0.0
        %1148 = vmatpush1.msra.mxu0 0.0
        %1149 = vmatprep.subr.mxu0 0.0
        %1150 = vmatpush1.msra.mxu0 0.0
        %1151 = vmatprep.subr.mxu0 0.0
        %1152 = vmatpush1.msra.mxu0 0.0
        %1153 = vmatprep.subr.mxu0 0.0
        %1154 = vmatpush1.msra.mxu0 0.0
        %1155 = vmatprep.subr.mxu0 0.0
        %1156 = vmatpush1.msra.mxu0 0.0
        %1157 = vmatprep.subr.mxu0 0.0
        %1158 = vmatpush1.msra.mxu0 0.0
        %1159 = vmatprep.subr.mxu0 0.0
        %1160 = vmatpush1.msra.mxu0 0.0
        %1161 = vmatprep.subr.mxu0 0.0
        %1162 = vmatpush1.msra.mxu0 0.0
        %1163 = vmatprep.subr.mxu0 0.0
        %1164 = vmatpush1.msra.mxu0 0.0
        %1165 = vmatprep.subr.mxu0 0.0
        %1166 = vmatpush1.msra.mxu0 0.0
        %1167 = vmatprep.subr.mxu0 0.0
        %1168 = vmatpush1.msra.mxu0 0.0
        %1169 = vmatprep.subr.mxu0 0.0
        %1170 = vmatpush1.msra.mxu0 0.0
        %1171 = vmatprep.subr.mxu0 0.0
        %1172 = vmatpush1.msra.mxu0 0.0
        %1173 = vmatprep.subr.mxu0 0.0
        %1174 = vmatpush1.msra.mxu0 0.0
        %1175 = vmatprep.subr.mxu0 0.0
        %1176 = vmatpush1.msra.mxu0 0.0
        %1177 = vmatprep.subr.mxu0 0.0
        %1178 = vmatpush1.msra.mxu0 %v1142
        %1179 = vmatprep.subr.mxu0 0.0
        %1180 = vmatpush2.msra.mxu0 0.0
        %1181 = vmatprep.subr.mxu0 0.0
        %1182 = vmatpush2.msra.mxu0 0.0
        %1183 = vmatprep.subr.mxu0 0.0
        %1184 = vmatpush2.msra.mxu0 0.0
        %1185 = vmatprep.subr.mxu0 0.0
        %1186 = vmatpush2.msra.mxu0 0.0
        %1187 = vmatprep.subr.mxu0 0.0
        %1188 = vmatpush2.msra.mxu0 0.0
        %1189 = vmatprep.subr.mxu0 0.0
        %1190 = vmatpush2.msra.mxu0 0.0
        %1191 = vmatprep.subr.mxu0 0.0
        %1192 = vmatpush2.msra.mxu0 0.0
        %1193 = vmatprep.subr.mxu0 0.0
        %1194 = vmatpush2.msra.mxu0 0.0
        %1195 = vmatprep.subr.mxu0 0.0
        %1196 = vmatpush2.msra.mxu0 0.0
        %1197 = vmatprep.subr.mxu0 0.0
        %1198 = vmatpush2.msra.mxu0 0.0
        %1199 = vmatprep.subr.mxu0 0.0
        %1200 = vmatpush2.msra.mxu0 0.0
        %1201 = vmatprep.subr.mxu0 0.0
        %1202 = vmatpush2.msra.mxu0 0.0
        %1203 = vmatprep.subr.mxu0 0.0
        %1204 = vmatpush2.msra.mxu0 0.0
        %1205 = vmatprep.subr.mxu0 0.0
        %1206 = vmatpush2.msra.mxu0 0.0
        %1207 = vmatprep.subr.mxu0 0.0
        %1208 = vmatpush2.msra.mxu0 0.0
        %1209 = vmatprep.subr.mxu0 0.0
        %1210 = vmatpush2.msra.mxu0 0.0
        %1211 = vmatprep.mubr.f32.mxu0 0.0
        %1212 = vmatmul.mubr.f32.gmra.mxu0 %v1145
        %v1213 = vpop.f32.mrf.mxu0
        %v1214 = vadd.f32 0.0, %v1213
        %v1215 = vpop.f32.mrf.mxu0
        %1216 = vdwg.mxu0
        %1217 = vrot.lane.b32.xlu0 %v370, 56
        %v1218 = vpop.permute.xlu0 %1217
        %v1221 = vsel %vm387, %v1129, 0
        %1223 = vmatprep.subr.mxu0 0.0
        %1224 = vmatpush1.msra.mxu0 0.0
        %1225 = vmatprep.subr.mxu0 0.0
        %1226 = vmatpush1.msra.mxu0 0.0
        %1227 = vmatprep.subr.mxu0 0.0
        %1228 = vmatpush1.msra.mxu0 0.0
        %1229 = vmatprep.subr.mxu0 0.0
        %1230 = vmatpush1.msra.mxu0 0.0
        %1231 = vmatprep.subr.mxu0 0.0
        %1232 = vmatpush1.msra.mxu0 0.0
        %1233 = vmatprep.subr.mxu0 0.0
        %1234 = vmatpush1.msra.mxu0 0.0
        %1235 = vmatprep.subr.mxu0 0.0
        %1236 = vmatpush1.msra.mxu0 0.0
        %1237 = vmatprep.subr.mxu0 0.0
        %1238 = vmatpush1.msra.mxu0 0.0
        %1239 = vmatprep.subr.mxu0 0.0
        %1240 = vmatpush1.msra.mxu0 0.0
        %1241 = vmatprep.subr.mxu0 0.0
        %1242 = vmatpush1.msra.mxu0 0.0
        %1243 = vmatprep.subr.mxu0 0.0
        %1244 = vmatpush1.msra.mxu0 0.0
        %1245 = vmatprep.subr.mxu0 0.0
        %1246 = vmatpush1.msra.mxu0 0.0
        %1247 = vmatprep.subr.mxu0 0.0
        %1248 = vmatpush1.msra.mxu0 0.0
        %1249 = vmatprep.subr.mxu0 0.0
        %1250 = vmatpush1.msra.mxu0 0.0
        %1251 = vmatprep.subr.mxu0 0.0
        %1252 = vmatpush1.msra.mxu0 0.0
        %1253 = vmatprep.subr.mxu0 0.0
        %1254 = vmatpush1.msra.mxu0 %v1218
        %1255 = vmatprep.subr.mxu0 0.0
        %1256 = vmatpush2.msra.mxu0 0.0
        %1257 = vmatprep.subr.mxu0 0.0
        %1258 = vmatpush2.msra.mxu0 0.0
        %1259 = vmatprep.subr.mxu0 0.0
        %1260 = vmatpush2.msra.mxu0 0.0
        %1261 = vmatprep.subr.mxu0 0.0
        %1262 = vmatpush2.msra.mxu0 0.0
        %1263 = vmatprep.subr.mxu0 0.0
        %1264 = vmatpush2.msra.mxu0 0.0
        %1265 = vmatprep.subr.mxu0 0.0
        %1266 = vmatpush2.msra.mxu0 0.0
        %1267 = vmatprep.subr.mxu0 0.0
        %1268 = vmatpush2.msra.mxu0 0.0
        %1269 = vmatprep.subr.mxu0 0.0
        %1270 = vmatpush2.msra.mxu0 0.0
        %1271 = vmatprep.subr.mxu0 0.0
        %1272 = vmatpush2.msra.mxu0 0.0
        %1273 = vmatprep.subr.mxu0 0.0
        %1274 = vmatpush2.msra.mxu0 0.0
        %1275 = vmatprep.subr.mxu0 0.0
        %1276 = vmatpush2.msra.mxu0 0.0
        %1277 = vmatprep.subr.mxu0 0.0
        %1278 = vmatpush2.msra.mxu0 0.0
        %1279 = vmatprep.subr.mxu0 0.0
        %1280 = vmatpush2.msra.mxu0 0.0
        %1281 = vmatprep.subr.mxu0 0.0
        %1282 = vmatpush2.msra.mxu0 0.0
        %1283 = vmatprep.subr.mxu0 0.0
        %1284 = vmatpush2.msra.mxu0 0.0
        %1285 = vmatprep.subr.mxu0 0.0
        %1286 = vmatpush2.msra.mxu0 0.0
        %1287 = vmatprep.mubr.f32.mxu0 0.0
        %1288 = vmatmul.mubr.f32.gmra.mxu0 %v1221
        %v1289 = vpop.f32.mrf.mxu0
        %v1290 = vadd.f32 0.0, %v1289
        %v1291 = vpop.f32.mrf.mxu0
        %1292 = vdwg.mxu0
        %1293 = vrot.lane.b32.xlu0 %v375, 56
        %v1294 = vpop.permute.xlu0 %1293
        %v1297 = vsel %vm387, %v1131, 0
        %1299 = vmatprep.subr.mxu0 0.0
        %1300 = vmatpush1.msra.mxu0 0.0
        %1301 = vmatprep.subr.mxu0 0.0
        %1302 = vmatpush1.msra.mxu0 0.0
        %1303 = vmatprep.subr.mxu0 0.0
        %1304 = vmatpush1.msra.mxu0 0.0
        %1305 = vmatprep.subr.mxu0 0.0
        %1306 = vmatpush1.msra.mxu0 0.0
        %1307 = vmatprep.subr.mxu0 0.0
        %1308 = vmatpush1.msra.mxu0 0.0
        %1309 = vmatprep.subr.mxu0 0.0
        %1310 = vmatpush1.msra.mxu0 0.0
        %1311 = vmatprep.subr.mxu0 0.0
        %1312 = vmatpush1.msra.mxu0 0.0
        %1313 = vmatprep.subr.mxu0 0.0
        %1314 = vmatpush1.msra.mxu0 0.0
        %1315 = vmatprep.subr.mxu0 0.0
        %1316 = vmatpush1.msra.mxu0 0.0
        %1317 = vmatprep.subr.mxu0 0.0
        %1318 = vmatpush1.msra.mxu0 0.0
        %1319 = vmatprep.subr.mxu0 0.0
        %1320 = vmatpush1.msra.mxu0 0.0
        %1321 = vmatprep.subr.mxu0 0.0
        %1322 = vmatpush1.msra.mxu0 0.0
        %1323 = vmatprep.subr.mxu0 0.0
        %1324 = vmatpush1.msra.mxu0 0.0
        %1325 = vmatprep.subr.mxu0 0.0
        %1326 = vmatpush1.msra.mxu0 0.0
        %1327 = vmatprep.subr.mxu0 0.0
        %1328 = vmatpush1.msra.mxu0 0.0
        %1329 = vmatprep.subr.mxu0 0.0
        %1330 = vmatpush1.msra.mxu0 %v1294
        %1331 = vmatprep.subr.mxu0 0.0
        %1332 = vmatpush2.msra.mxu0 0.0
        %1333 = vmatprep.subr.mxu0 0.0
        %1334 = vmatpush2.msra.mxu0 0.0
        %1335 = vmatprep.subr.mxu0 0.0
        %1336 = vmatpush2.msra.mxu0 0.0
        %1337 = vmatprep.subr.mxu0 0.0
        %1338 = vmatpush2.msra.mxu0 0.0
        %1339 = vmatprep.subr.mxu0 0.0
        %1340 = vmatpush2.msra.mxu0 0.0
        %1341 = vmatprep.subr.mxu0 0.0
        %1342 = vmatpush2.msra.mxu0 0.0
        %1343 = vmatprep.subr.mxu0 0.0
        %1344 = vmatpush2.msra.mxu0 0.0
        %1345 = vmatprep.subr.mxu0 0.0
        %1346 = vmatpush2.msra.mxu0 0.0
        %1347 = vmatprep.subr.mxu0 0.0
        %1348 = vmatpush2.msra.mxu0 0.0
        %1349 = vmatprep.subr.mxu0 0.0
        %1350 = vmatpush2.msra.mxu0 0.0
        %1351 = vmatprep.subr.mxu0 0.0
        %1352 = vmatpush2.msra.mxu0 0.0
        %1353 = vmatprep.subr.mxu0 0.0
        %1354 = vmatpush2.msra.mxu0 0.0
        %1355 = vmatprep.subr.mxu0 0.0
        %1356 = vmatpush2.msra.mxu0 0.0
        %1357 = vmatprep.subr.mxu0 0.0
        %1358 = vmatpush2.msra.mxu0 0.0
        %1359 = vmatprep.subr.mxu0 0.0
        %1360 = vmatpush2.msra.mxu0 0.0
        %1361 = vmatprep.subr.mxu0 0.0
        %1362 = vmatpush2.msra.mxu0 0.0
        %1363 = vmatprep.mubr.f32.mxu0 0.0
        %1364 = vmatmul.mubr.f32.gmra.mxu0 %v1297
        %v1365 = vpop.f32.mrf.mxu0
        %v1366 = vadd.f32 0.0, %v1365
        %v1367 = vpop.f32.mrf.mxu0
        %1368 = vdwg.mxu0
        %v1369 = vrcp.pop %v1134
        %v1370 = vrcp.pop %v1137
        %v1371 = vrcp.pop %v1140
        %v1372 = vmul.f32 %v1214, %v1369
        %v1373 = vmul.f32 %v1290, %v1370
        %v1374 = vmul.f32 %v1366, %v1371
        %1378 = vrot.lane.b32.xlu0 %v1372, 8
        %v1379 = vpop.permute.xlu0 %1378
        %1380 = vrot.lane.b32.xlu0 %v1373, 8
        %v1381 = vpop.permute.xlu0 %1380
        %1382 = vrot.lane.b32.xlu0 %v1374, 8
        %v1383 = vpop.permute.xlu0 %1382
        %vm1387 = vcmask 130112
        %1388 = vst.msk [vmem:[#allocation2] sm:$0xff] %vm1387, %v1379
        %1389 = vst.msk [vmem:[#allocation2 + $0x8] sm:$0xff] %vm1387, %v1381
        %1390 = vst.msk [vmem:[#allocation2 + $0x10] sm:$0xff] %vm1387, %v1383
        %1391 = vrot.lane.b32.xlu0 %v365, 112
        %v1392 = vpop.permute.xlu0 %1391
        %1393 = vrot.lane.b32.xlu0 %v365, 80
        %v1394 = vpop.permute.xlu0 %1393
        %v1395 = vsel %vm387, %v1392, 0
        %v1397 = vsel %vm387, %v1394, 0
        %1399 = vmatprep.subr.mxu0 0.0
        %1400 = vmatpush1.xpose.msra.mxu0 0.0
        %1401 = vmatprep.subr.mxu0 0.0
        %1402 = vmatpush1.xpose.msra.mxu0 0.0
        %1403 = vmatprep.subr.mxu0 0.0
        %1404 = vmatpush1.xpose.msra.mxu0 0.0
        %1405 = vmatprep.subr.mxu0 0.0
        %1406 = vmatpush1.xpose.msra.mxu0 0.0
        %1407 = vmatprep.subr.mxu0 0.0
        %1408 = vmatpush1.xpose.msra.mxu0 0.0
        %1409 = vmatprep.subr.mxu0 0.0
        %1410 = vmatpush1.xpose.msra.mxu0 0.0
        %1411 = vmatprep.subr.mxu0 0.0
        %1412 = vmatpush1.xpose.msra.mxu0 0.0
        %1413 = vmatprep.subr.mxu0 0.0
        %1414 = vmatpush1.xpose.msra.mxu0 0.0
        %1415 = vmatprep.subr.mxu0 0.0
        %1416 = vmatpush1.xpose.msra.mxu0 0.0
        %1417 = vmatprep.subr.mxu0 0.0
        %1418 = vmatpush1.xpose.msra.mxu0 0.0
        %1419 = vmatprep.subr.mxu0 0.0
        %1420 = vmatpush1.xpose.msra.mxu0 0.0
        %1421 = vmatprep.subr.mxu0 0.0
        %1422 = vmatpush1.xpose.msra.mxu0 0.0
        %1423 = vmatprep.subr.mxu0 0.0
        %1424 = vmatpush1.xpose.msra.mxu0 0.0
        %1425 = vmatprep.subr.mxu0 0.0
        %1426 = vmatpush1.xpose.msra.mxu0 0.0
        %1427 = vmatprep.subr.mxu0 0.0
        %1428 = vmatpush1.xpose.msra.mxu0 0.0
        %1429 = vmatprep.subr.mxu0 0.0
        %1430 = vmatpush1.xpose.msra.mxu0 %v1397
        %1431 = vmatprep.subr.mxu0 0.0
        %1432 = vmatpush2.xpose.msra.mxu0 0.0
        %1433 = vmatprep.subr.mxu0 0.0
        %1434 = vmatpush2.xpose.msra.mxu0 0.0
        %1435 = vmatprep.subr.mxu0 0.0
        %1436 = vmatpush2.xpose.msra.mxu0 0.0
        %1437 = vmatprep.subr.mxu0 0.0
        %1438 = vmatpush2.xpose.msra.mxu0 0.0
        %1439 = vmatprep.subr.mxu0 0.0
        %1440 = vmatpush2.xpose.msra.mxu0 0.0
        %1441 = vmatprep.subr.mxu0 0.0
        %1442 = vmatpush2.xpose.msra.mxu0 0.0
        %1443 = vmatprep.subr.mxu0 0.0
        %1444 = vmatpush2.xpose.msra.mxu0 0.0
        %1445 = vmatprep.subr.mxu0 0.0
        %1446 = vmatpush2.xpose.msra.mxu0 0.0
        %1447 = vmatprep.subr.mxu0 0.0
        %1448 = vmatpush2.xpose.msra.mxu0 0.0
        %1449 = vmatprep.subr.mxu0 0.0
        %1450 = vmatpush2.xpose.msra.mxu0 0.0
        %1451 = vmatprep.subr.mxu0 0.0
        %1452 = vmatpush2.xpose.msra.mxu0 0.0
        %1453 = vmatprep.subr.mxu0 0.0
        %1454 = vmatpush2.xpose.msra.mxu0 0.0
        %1455 = vmatprep.subr.mxu0 0.0
        %1456 = vmatpush2.xpose.msra.mxu0 0.0
        %1457 = vmatprep.subr.mxu0 0.0
        %1458 = vmatpush2.xpose.msra.mxu0 0.0
        %1459 = vmatprep.subr.mxu0 0.0
        %1460 = vmatpush2.xpose.msra.mxu0 0.0
        %1461 = vmatprep.subr.mxu0 0.0
        %1462 = vmatpush2.xpose.msra.mxu0 0.0
        %1463 = vmatprep.mubr.f32.mxu0 0.0
        %1464 = vmatmul.mubr.f32.gmra.mxu0 %v1395
        %v1465 = vpop.f32.mrf.mxu0
        %v1466 = vadd.f32 %v383, %v1465
        %v1467 = vpop.f32.mrf.mxu0
        %1468 = vdwg.mxu0
        %1469 = vrot.lane.b32.xlu0 %v370, 112
        %v1470 = vpop.permute.xlu0 %1469
        %1471 = vrot.lane.b32.xlu0 %v370, 80
        %v1472 = vpop.permute.xlu0 %1471
        %v1473 = vsel %vm387, %v1470, 0
        %v1475 = vsel %vm387, %v1472, 0
        %1477 = vmatprep.subr.mxu0 0.0
        %1478 = vmatpush1.xpose.msra.mxu0 0.0
        %1479 = vmatprep.subr.mxu0 0.0
        %1480 = vmatpush1.xpose.msra.mxu0 0.0
        %1481 = vmatprep.subr.mxu0 0.0
        %1482 = vmatpush1.xpose.msra.mxu0 0.0
        %1483 = vmatprep.subr.mxu0 0.0
        %1484 = vmatpush1.xpose.msra.mxu0 0.0
        %1485 = vmatprep.subr.mxu0 0.0
        %1486 = vmatpush1.xpose.msra.mxu0 0.0
        %1487 = vmatprep.subr.mxu0 0.0
        %1488 = vmatpush1.xpose.msra.mxu0 0.0
        %1489 = vmatprep.subr.mxu0 0.0
        %1490 = vmatpush1.xpose.msra.mxu0 0.0
        %1491 = vmatprep.subr.mxu0 0.0
        %1492 = vmatpush1.xpose.msra.mxu0 0.0
        %1493 = vmatprep.subr.mxu0 0.0
        %1494 = vmatpush1.xpose.msra.mxu0 0.0
        %1495 = vmatprep.subr.mxu0 0.0
        %1496 = vmatpush1.xpose.msra.mxu0 0.0
        %1497 = vmatprep.subr.mxu0 0.0
        %1498 = vmatpush1.xpose.msra.mxu0 0.0
        %1499 = vmatprep.subr.mxu0 0.0
        %1500 = vmatpush1.xpose.msra.mxu0 0.0
        %1501 = vmatprep.subr.mxu0 0.0
        %1502 = vmatpush1.xpose.msra.mxu0 0.0
        %1503 = vmatprep.subr.mxu0 0.0
        %1504 = vmatpush1.xpose.msra.mxu0 0.0
        %1505 = vmatprep.subr.mxu0 0.0
        %1506 = vmatpush1.xpose.msra.mxu0 0.0
        %1507 = vmatprep.subr.mxu0 0.0
        %1508 = vmatpush1.xpose.msra.mxu0 %v1475
        %1509 = vmatprep.subr.mxu0 0.0
        %1510 = vmatpush2.xpose.msra.mxu0 0.0
        %1511 = vmatprep.subr.mxu0 0.0
        %1512 = vmatpush2.xpose.msra.mxu0 0.0
        %1513 = vmatprep.subr.mxu0 0.0
        %1514 = vmatpush2.xpose.msra.mxu0 0.0
        %1515 = vmatprep.subr.mxu0 0.0
        %1516 = vmatpush2.xpose.msra.mxu0 0.0
        %1517 = vmatprep.subr.mxu0 0.0
        %1518 = vmatpush2.xpose.msra.mxu0 0.0
        %1519 = vmatprep.subr.mxu0 0.0
        %1520 = vmatpush2.xpose.msra.mxu0 0.0
        %1521 = vmatprep.subr.mxu0 0.0
        %1522 = vmatpush2.xpose.msra.mxu0 0.0
        %1523 = vmatprep.subr.mxu0 0.0
        %1524 = vmatpush2.xpose.msra.mxu0 0.0
        %1525 = vmatprep.subr.mxu0 0.0
        %1526 = vmatpush2.xpose.msra.mxu0 0.0
        %1527 = vmatprep.subr.mxu0 0.0
        %1528 = vmatpush2.xpose.msra.mxu0 0.0
        %1529 = vmatprep.subr.mxu0 0.0
        %1530 = vmatpush2.xpose.msra.mxu0 0.0
        %1531 = vmatprep.subr.mxu0 0.0
        %1532 = vmatpush2.xpose.msra.mxu0 0.0
        %1533 = vmatprep.subr.mxu0 0.0
        %1534 = vmatpush2.xpose.msra.mxu0 0.0
        %1535 = vmatprep.subr.mxu0 0.0
        %1536 = vmatpush2.xpose.msra.mxu0 0.0
        %1537 = vmatprep.subr.mxu0 0.0
        %1538 = vmatpush2.xpose.msra.mxu0 0.0
        %1539 = vmatprep.subr.mxu0 0.0
        %1540 = vmatpush2.xpose.msra.mxu0 0.0
        %1541 = vmatprep.mubr.f32.mxu0 0.0
        %1542 = vmatmul.mubr.f32.gmra.mxu0 %v1473
        %v1543 = vpop.f32.mrf.mxu0
        %v1544 = vadd.f32 %v383, %v1543
        %v1545 = vpop.f32.mrf.mxu0
        %1546 = vdwg.mxu0
        %1547 = vrot.lane.b32.xlu0 %v375, 112
        %v1548 = vpop.permute.xlu0 %1547
        %1549 = vrot.lane.b32.xlu0 %v375, 80
        %v1550 = vpop.permute.xlu0 %1549
        %v1551 = vsel %vm387, %v1548, 0
        %v1553 = vsel %vm387, %v1550, 0
        %1555 = vmatprep.subr.mxu0 0.0
        %1556 = vmatpush1.xpose.msra.mxu0 0.0
        %1557 = vmatprep.subr.mxu0 0.0
        %1558 = vmatpush1.xpose.msra.mxu0 0.0
        %1559 = vmatprep.subr.mxu0 0.0
        %1560 = vmatpush1.xpose.msra.mxu0 0.0
        %1561 = vmatprep.subr.mxu0 0.0
        %1562 = vmatpush1.xpose.msra.mxu0 0.0
        %1563 = vmatprep.subr.mxu0 0.0
        %1564 = vmatpush1.xpose.msra.mxu0 0.0
        %1565 = vmatprep.subr.mxu0 0.0
        %1566 = vmatpush1.xpose.msra.mxu0 0.0
        %1567 = vmatprep.subr.mxu0 0.0
        %1568 = vmatpush1.xpose.msra.mxu0 0.0
        %1569 = vmatprep.subr.mxu0 0.0
        %1570 = vmatpush1.xpose.msra.mxu0 0.0
        %1571 = vmatprep.subr.mxu0 0.0
        %1572 = vmatpush1.xpose.msra.mxu0 0.0
        %1573 = vmatprep.subr.mxu0 0.0
        %1574 = vmatpush1.xpose.msra.mxu0 0.0
        %1575 = vmatprep.subr.mxu0 0.0
        %1576 = vmatpush1.xpose.msra.mxu0 0.0
        %1577 = vmatprep.subr.mxu0 0.0
        %1578 = vmatpush1.xpose.msra.mxu0 0.0
        %1579 = vmatprep.subr.mxu0 0.0
        %1580 = vmatpush1.xpose.msra.mxu0 0.0
        %1581 = vmatprep.subr.mxu0 0.0
        %1582 = vmatpush1.xpose.msra.mxu0 0.0
        %1583 = vmatprep.subr.mxu0 0.0
        %1584 = vmatpush1.xpose.msra.mxu0 0.0
        %1585 = vmatprep.subr.mxu0 0.0
        %1586 = vmatpush1.xpose.msra.mxu0 %v1553
        %1587 = vmatprep.subr.mxu0 0.0
        %1588 = vmatpush2.xpose.msra.mxu0 0.0
        %1589 = vmatprep.subr.mxu0 0.0
        %1590 = vmatpush2.xpose.msra.mxu0 0.0
        %1591 = vmatprep.subr.mxu0 0.0
        %1592 = vmatpush2.xpose.msra.mxu0 0.0
        %1593 = vmatprep.subr.mxu0 0.0
        %1594 = vmatpush2.xpose.msra.mxu0 0.0
        %1595 = vmatprep.subr.mxu0 0.0
        %1596 = vmatpush2.xpose.msra.mxu0 0.0
        %1597 = vmatprep.subr.mxu0 0.0
        %1598 = vmatpush2.xpose.msra.mxu0 0.0
        %1599 = vmatprep.subr.mxu0 0.0
        %1600 = vmatpush2.xpose.msra.mxu0 0.0
        %1601 = vmatprep.subr.mxu0 0.0
        %1602 = vmatpush2.xpose.msra.mxu0 0.0
        %1603 = vmatprep.subr.mxu0 0.0
        %1604 = vmatpush2.xpose.msra.mxu0 0.0
        %1605 = vmatprep.subr.mxu0 0.0
        %1606 = vmatpush2.xpose.msra.mxu0 0.0
        %1607 = vmatprep.subr.mxu0 0.0
        %1608 = vmatpush2.xpose.msra.mxu0 0.0
        %1609 = vmatprep.subr.mxu0 0.0
        %1610 = vmatpush2.xpose.msra.mxu0 0.0
        %1611 = vmatprep.subr.mxu0 0.0
        %1612 = vmatpush2.xpose.msra.mxu0 0.0
        %1613 = vmatprep.subr.mxu0 0.0
        %1614 = vmatpush2.xpose.msra.mxu0 0.0
        %1615 = vmatprep.subr.mxu0 0.0
        %1616 = vmatpush2.xpose.msra.mxu0 0.0
        %1617 = vmatprep.subr.mxu0 0.0
        %1618 = vmatpush2.xpose.msra.mxu0 0.0
        %1619 = vmatprep.mubr.f32.mxu0 0.0
        %1620 = vmatmul.mubr.f32.gmra.mxu0 %v1551
        %v1621 = vpop.f32.mrf.mxu0
        %v1622 = vadd.f32 %v383, %v1621
        %v1623 = vpop.f32.mrf.mxu0
        %1624 = vdwg.mxu0
        %v1625 = vsel %vm387, %v1466, -inf
        %1626 = vmax.xlane.f32.xlu0 %v1625
        %v1627 = vpop.xlane.xlu0 %1626
        %v1628 = vsel %vm387, %v1544, -inf
        %1629 = vmax.xlane.f32.xlu0 %v1628
        %v1630 = vpop.xlane.xlu0 %1629
        %v1631 = vsel %vm387, %v1622, -inf
        %1632 = vmax.xlane.f32.xlu0 %v1631
        %v1633 = vpop.xlane.xlu0 %1632
        %v1634 = vsub.f32 %v1466, %v1627
        %v1635 = vsub.f32 %v1544, %v1630
        %v1636 = vsub.f32 %v1622, %v1633
        %v1637 = vmul.f32 %v1634, 1.442695
        %v1638 = vpow.pop %v1637
        %v1639 = vmul.f32 %v1635, 1.442695
        %v1640 = vpow.pop %v1639
        %v1641 = vmul.f32 %v1636, 1.442695
        %v1642 = vpow.pop %v1641
        %v1643 = vsel %vm387, %v1638, 0.0
        %1644 = vadd.xlane.f32.xlu0 %v1643
        %v1645 = vpop.xlane.xlu0 %1644
        %v1646 = vsel %vm387, %v1640, 0.0
        %1647 = vadd.xlane.f32.xlu0 %v1646
        %v1648 = vpop.xlane.xlu0 %1647
        %v1649 = vsel %vm387, %v1642, 0.0
        %1650 = vadd.xlane.f32.xlu0 %v1649
        %v1651 = vpop.xlane.xlu0 %1650
        %1652 = vrot.lane.b32.xlu0 %v365, 48
        %v1653 = vpop.permute.xlu0 %1652
        %v1656 = vsel %vm387, %v1638, 0
        %1658 = vmatprep.subr.mxu0 0.0
        %1659 = vmatpush1.msra.mxu0 0.0
        %1660 = vmatprep.subr.mxu0 0.0
        %1661 = vmatpush1.msra.mxu0 0.0
        %1662 = vmatprep.subr.mxu0 0.0
        %1663 = vmatpush1.msra.mxu0 0.0
        %1664 = vmatprep.subr.mxu0 0.0
        %1665 = vmatpush1.msra.mxu0 0.0
        %1666 = vmatprep.subr.mxu0 0.0
        %1667 = vmatpush1.msra.mxu0 0.0
        %1668 = vmatprep.subr.mxu0 0.0
        %1669 = vmatpush1.msra.mxu0 0.0
        %1670 = vmatprep.subr.mxu0 0.0
        %1671 = vmatpush1.msra.mxu0 0.0
        %1672 = vmatprep.subr.mxu0 0.0
        %1673 = vmatpush1.msra.mxu0 0.0
        %1674 = vmatprep.subr.mxu0 0.0
        %1675 = vmatpush1.msra.mxu0 0.0
        %1676 = vmatprep.subr.mxu0 0.0
        %1677 = vmatpush1.msra.mxu0 0.0
        %1678 = vmatprep.subr.mxu0 0.0
        %1679 = vmatpush1.msra.mxu0 0.0
        %1680 = vmatprep.subr.mxu0 0.0
        %1681 = vmatpush1.msra.mxu0 0.0
        %1682 = vmatprep.subr.mxu0 0.0
        %1683 = vmatpush1.msra.mxu0 0.0
        %1684 = vmatprep.subr.mxu0 0.0
        %1685 = vmatpush1.msra.mxu0 0.0
        %1686 = vmatprep.subr.mxu0 0.0
        %1687 = vmatpush1.msra.mxu0 0.0
        %1688 = vmatprep.subr.mxu0 0.0
        %1689 = vmatpush1.msra.mxu0 %v1653
        %1690 = vmatprep.subr.mxu0 0.0
        %1691 = vmatpush2.msra.mxu0 0.0
        %1692 = vmatprep.subr.mxu0 0.0
        %1693 = vmatpush2.msra.mxu0 0.0
        %1694 = vmatprep.subr.mxu0 0.0
        %1695 = vmatpush2.msra.mxu0 0.0
        %1696 = vmatprep.subr.mxu0 0.0
        %1697 = vmatpush2.msra.mxu0 0.0
        %1698 = vmatprep.subr.mxu0 0.0
        %1699 = vmatpush2.msra.mxu0 0.0
        %1700 = vmatprep.subr.mxu0 0.0
        %1701 = vmatpush2.msra.mxu0 0.0
        %1702 = vmatprep.subr.mxu0 0.0
        %1703 = vmatpush2.msra.mxu0 0.0
        %1704 = vmatprep.subr.mxu0 0.0
        %1705 = vmatpush2.msra.mxu0 0.0
        %1706 = vmatprep.subr.mxu0 0.0
        %1707 = vmatpush2.msra.mxu0 0.0
        %1708 = vmatprep.subr.mxu0 0.0
        %1709 = vmatpush2.msra.mxu0 0.0
        %1710 = vmatprep.subr.mxu0 0.0
        %1711 = vmatpush2.msra.mxu0 0.0
        %1712 = vmatprep.subr.mxu0 0.0
        %1713 = vmatpush2.msra.mxu0 0.0
        %1714 = vmatprep.subr.mxu0 0.0
        %1715 = vmatpush2.msra.mxu0 0.0
        %1716 = vmatprep.subr.mxu0 0.0
        %1717 = vmatpush2.msra.mxu0 0.0
        %1718 = vmatprep.subr.mxu0 0.0
        %1719 = vmatpush2.msra.mxu0 0.0
        %1720 = vmatprep.subr.mxu0 0.0
        %1721 = vmatpush2.msra.mxu0 0.0
        %1722 = vmatprep.mubr.f32.mxu0 0.0
        %1723 = vmatmul.mubr.f32.gmra.mxu0 %v1656
        %v1724 = vpop.f32.mrf.mxu0
        %v1725 = vadd.f32 0.0, %v1724
        %v1726 = vpop.f32.mrf.mxu0
        %1727 = vdwg.mxu0
        %1728 = vrot.lane.b32.xlu0 %v370, 48
        %v1729 = vpop.permute.xlu0 %1728
        %v1732 = vsel %vm387, %v1640, 0
        %1734 = vmatprep.subr.mxu0 0.0
        %1735 = vmatpush1.msra.mxu0 0.0
        %1736 = vmatprep.subr.mxu0 0.0
        %1737 = vmatpush1.msra.mxu0 0.0
        %1738 = vmatprep.subr.mxu0 0.0
        %1739 = vmatpush1.msra.mxu0 0.0
        %1740 = vmatprep.subr.mxu0 0.0
        %1741 = vmatpush1.msra.mxu0 0.0
        %1742 = vmatprep.subr.mxu0 0.0
        %1743 = vmatpush1.msra.mxu0 0.0
        %1744 = vmatprep.subr.mxu0 0.0
        %1745 = vmatpush1.msra.mxu0 0.0
        %1746 = vmatprep.subr.mxu0 0.0
        %1747 = vmatpush1.msra.mxu0 0.0
        %1748 = vmatprep.subr.mxu0 0.0
        %1749 = vmatpush1.msra.mxu0 0.0
        %1750 = vmatprep.subr.mxu0 0.0
        %1751 = vmatpush1.msra.mxu0 0.0
        %1752 = vmatprep.subr.mxu0 0.0
        %1753 = vmatpush1.msra.mxu0 0.0
        %1754 = vmatprep.subr.mxu0 0.0
        %1755 = vmatpush1.msra.mxu0 0.0
        %1756 = vmatprep.subr.mxu0 0.0
        %1757 = vmatpush1.msra.mxu0 0.0
        %1758 = vmatprep.subr.mxu0 0.0
        %1759 = vmatpush1.msra.mxu0 0.0
        %1760 = vmatprep.subr.mxu0 0.0
        %1761 = vmatpush1.msra.mxu0 0.0
        %1762 = vmatprep.subr.mxu0 0.0
        %1763 = vmatpush1.msra.mxu0 0.0
        %1764 = vmatprep.subr.mxu0 0.0
        %1765 = vmatpush1.msra.mxu0 %v1729
        %1766 = vmatprep.subr.mxu0 0.0
        %1767 = vmatpush2.msra.mxu0 0.0
        %1768 = vmatprep.subr.mxu0 0.0
        %1769 = vmatpush2.msra.mxu0 0.0
        %1770 = vmatprep.subr.mxu0 0.0
        %1771 = vmatpush2.msra.mxu0 0.0
        %1772 = vmatprep.subr.mxu0 0.0
        %1773 = vmatpush2.msra.mxu0 0.0
        %1774 = vmatprep.subr.mxu0 0.0
        %1775 = vmatpush2.msra.mxu0 0.0
        %1776 = vmatprep.subr.mxu0 0.0
        %1777 = vmatpush2.msra.mxu0 0.0
        %1778 = vmatprep.subr.mxu0 0.0
        %1779 = vmatpush2.msra.mxu0 0.0
        %1780 = vmatprep.subr.mxu0 0.0
        %1781 = vmatpush2.msra.mxu0 0.0
        %1782 = vmatprep.subr.mxu0 0.0
        %1783 = vmatpush2.msra.mxu0 0.0
        %1784 = vmatprep.subr.mxu0 0.0
        %1785 = vmatpush2.msra.mxu0 0.0
        %1786 = vmatprep.subr.mxu0 0.0
        %1787 = vmatpush2.msra.mxu0 0.0
        %1788 = vmatprep.subr.mxu0 0.0
        %1789 = vmatpush2.msra.mxu0 0.0
        %1790 = vmatprep.subr.mxu0 0.0
        %1791 = vmatpush2.msra.mxu0 0.0
        %1792 = vmatprep.subr.mxu0 0.0
        %1793 = vmatpush2.msra.mxu0 0.0
        %1794 = vmatprep.subr.mxu0 0.0
        %1795 = vmatpush2.msra.mxu0 0.0
        %1796 = vmatprep.subr.mxu0 0.0
        %1797 = vmatpush2.msra.mxu0 0.0
        %1798 = vmatprep.mubr.f32.mxu0 0.0
        %1799 = vmatmul.mubr.f32.gmra.mxu0 %v1732
        %v1800 = vpop.f32.mrf.mxu0
        %v1801 = vadd.f32 0.0, %v1800
        %v1802 = vpop.f32.mrf.mxu0
        %1803 = vdwg.mxu0
        %1804 = vrot.lane.b32.xlu0 %v375, 48
        %v1805 = vpop.permute.xlu0 %1804
        %v1808 = vsel %vm387, %v1642, 0
        %1810 = vmatprep.subr.mxu0 0.0
        %1811 = vmatpush1.msra.mxu0 0.0
        %1812 = vmatprep.subr.mxu0 0.0
        %1813 = vmatpush1.msra.mxu0 0.0
        %1814 = vmatprep.subr.mxu0 0.0
        %1815 = vmatpush1.msra.mxu0 0.0
        %1816 = vmatprep.subr.mxu0 0.0
        %1817 = vmatpush1.msra.mxu0 0.0
        %1818 = vmatprep.subr.mxu0 0.0
        %1819 = vmatpush1.msra.mxu0 0.0
        %1820 = vmatprep.subr.mxu0 0.0
        %1821 = vmatpush1.msra.mxu0 0.0
        %1822 = vmatprep.subr.mxu0 0.0
        %1823 = vmatpush1.msra.mxu0 0.0
        %1824 = vmatprep.subr.mxu0 0.0
        %1825 = vmatpush1.msra.mxu0 0.0
        %1826 = vmatprep.subr.mxu0 0.0
        %1827 = vmatpush1.msra.mxu0 0.0
        %1828 = vmatprep.subr.mxu0 0.0
        %1829 = vmatpush1.msra.mxu0 0.0
        %1830 = vmatprep.subr.mxu0 0.0
        %1831 = vmatpush1.msra.mxu0 0.0
        %1832 = vmatprep.subr.mxu0 0.0
        %1833 = vmatpush1.msra.mxu0 0.0
        %1834 = vmatprep.subr.mxu0 0.0
        %1835 = vmatpush1.msra.mxu0 0.0
        %1836 = vmatprep.subr.mxu0 0.0
        %1837 = vmatpush1.msra.mxu0 0.0
        %1838 = vmatprep.subr.mxu0 0.0
        %1839 = vmatpush1.msra.mxu0 0.0
        %1840 = vmatprep.subr.mxu0 0.0
        %1841 = vmatpush1.msra.mxu0 %v1805
        %1842 = vmatprep.subr.mxu0 0.0
        %1843 = vmatpush2.msra.mxu0 0.0
        %1844 = vmatprep.subr.mxu0 0.0
        %1845 = vmatpush2.msra.mxu0 0.0
        %1846 = vmatprep.subr.mxu0 0.0
        %1847 = vmatpush2.msra.mxu0 0.0
        %1848 = vmatprep.subr.mxu0 0.0
        %1849 = vmatpush2.msra.mxu0 0.0
        %1850 = vmatprep.subr.mxu0 0.0
        %1851 = vmatpush2.msra.mxu0 0.0
        %1852 = vmatprep.subr.mxu0 0.0
        %1853 = vmatpush2.msra.mxu0 0.0
        %1854 = vmatprep.subr.mxu0 0.0
        %1855 = vmatpush2.msra.mxu0 0.0
        %1856 = vmatprep.subr.mxu0 0.0
        %1857 = vmatpush2.msra.mxu0 0.0
        %1858 = vmatprep.subr.mxu0 0.0
        %1859 = vmatpush2.msra.mxu0 0.0
        %1860 = vmatprep.subr.mxu0 0.0
        %1861 = vmatpush2.msra.mxu0 0.0
        %1862 = vmatprep.subr.mxu0 0.0
        %1863 = vmatpush2.msra.mxu0 0.0
        %1864 = vmatprep.subr.mxu0 0.0
        %1865 = vmatpush2.msra.mxu0 0.0
        %1866 = vmatprep.subr.mxu0 0.0
        %1867 = vmatpush2.msra.mxu0 0.0
        %1868 = vmatprep.subr.mxu0 0.0
        %1869 = vmatpush2.msra.mxu0 0.0
        %1870 = vmatprep.subr.mxu0 0.0
        %1871 = vmatpush2.msra.mxu0 0.0
        %1872 = vmatprep.subr.mxu0 0.0
        %1873 = vmatpush2.msra.mxu0 0.0
        %1874 = vmatprep.mubr.f32.mxu0 0.0
        %1875 = vmatmul.mubr.f32.gmra.mxu0 %v1808
        %v1876 = vpop.f32.mrf.mxu0
        %v1877 = vadd.f32 0.0, %v1876
        %v1878 = vpop.f32.mrf.mxu0
        %1879 = vdwg.mxu0
        %v1880 = vrcp.pop %v1645
        %v1881 = vrcp.pop %v1648
        %v1882 = vrcp.pop %v1651
        %v1883 = vmul.f32 %v1725, %v1880
        %v1884 = vmul.f32 %v1801, %v1881
        %v1885 = vmul.f32 %v1877, %v1882
        %1889 = vrot.lane.b32.xlu0 %v1883, 16
        %v1890 = vpop.permute.xlu0 %1889
        %1891 = vrot.lane.b32.xlu0 %v1884, 16
        %v1892 = vpop.permute.xlu0 %1891
        %1893 = vrot.lane.b32.xlu0 %v1885, 16
        %v1894 = vpop.permute.xlu0 %1893
        %vm1898 = vcmask 195712
        %1899 = vst.msk [vmem:[#allocation2] sm:$0xff] %vm1898, %v1890
        %1900 = vst.msk [vmem:[#allocation2 + $0x8] sm:$0xff] %vm1898, %v1892
        %1901 = vst.msk [vmem:[#allocation2 + $0x10] sm:$0xff] %vm1898, %v1894
        %1902 = vrot.lane.b32.xlu0 %v365, 104
        %v1903 = vpop.permute.xlu0 %1902
        %1904 = vrot.lane.b32.xlu0 %v365, 72
        %v1905 = vpop.permute.xlu0 %1904
        %v1906 = vsel %vm387, %v1903, 0
        %v1908 = vsel %vm387, %v1905, 0
        %1910 = vmatprep.subr.mxu0 0.0
        %1911 = vmatpush1.xpose.msra.mxu0 0.0
        %1912 = vmatprep.subr.mxu0 0.0
        %1913 = vmatpush1.xpose.msra.mxu0 0.0
        %1914 = vmatprep.subr.mxu0 0.0
        %1915 = vmatpush1.xpose.msra.mxu0 0.0
        %1916 = vmatprep.subr.mxu0 0.0
        %1917 = vmatpush1.xpose.msra.mxu0 0.0
        %1918 = vmatprep.subr.mxu0 0.0
        %1919 = vmatpush1.xpose.msra.mxu0 0.0
        %1920 = vmatprep.subr.mxu0 0.0
        %1921 = vmatpush1.xpose.msra.mxu0 0.0
        %1922 = vmatprep.subr.mxu0 0.0
        %1923 = vmatpush1.xpose.msra.mxu0 0.0
        %1924 = vmatprep.subr.mxu0 0.0
        %1925 = vmatpush1.xpose.msra.mxu0 0.0
        %1926 = vmatprep.subr.mxu0 0.0
        %1927 = vmatpush1.xpose.msra.mxu0 0.0
        %1928 = vmatprep.subr.mxu0 0.0
        %1929 = vmatpush1.xpose.msra.mxu0 0.0
        %1930 = vmatprep.subr.mxu0 0.0
        %1931 = vmatpush1.xpose.msra.mxu0 0.0
        %1932 = vmatprep.subr.mxu0 0.0
        %1933 = vmatpush1.xpose.msra.mxu0 0.0
        %1934 = vmatprep.subr.mxu0 0.0
        %1935 = vmatpush1.xpose.msra.mxu0 0.0
        %1936 = vmatprep.subr.mxu0 0.0
        %1937 = vmatpush1.xpose.msra.mxu0 0.0
        %1938 = vmatprep.subr.mxu0 0.0
        %1939 = vmatpush1.xpose.msra.mxu0 0.0
        %1940 = vmatprep.subr.mxu0 0.0
        %1941 = vmatpush1.xpose.msra.mxu0 %v1908
        %1942 = vmatprep.subr.mxu0 0.0
        %1943 = vmatpush2.xpose.msra.mxu0 0.0
        %1944 = vmatprep.subr.mxu0 0.0
        %1945 = vmatpush2.xpose.msra.mxu0 0.0
        %1946 = vmatprep.subr.mxu0 0.0
        %1947 = vmatpush2.xpose.msra.mxu0 0.0
        %1948 = vmatprep.subr.mxu0 0.0
        %1949 = vmatpush2.xpose.msra.mxu0 0.0
        %1950 = vmatprep.subr.mxu0 0.0
        %1951 = vmatpush2.xpose.msra.mxu0 0.0
        %1952 = vmatprep.subr.mxu0 0.0
        %1953 = vmatpush2.xpose.msra.mxu0 0.0
        %1954 = vmatprep.subr.mxu0 0.0
        %1955 = vmatpush2.xpose.msra.mxu0 0.0
        %1956 = vmatprep.subr.mxu0 0.0
        %1957 = vmatpush2.xpose.msra.mxu0 0.0
        %1958 = vmatprep.subr.mxu0 0.0
        %1959 = vmatpush2.xpose.msra.mxu0 0.0
        %1960 = vmatprep.subr.mxu0 0.0
        %1961 = vmatpush2.xpose.msra.mxu0 0.0
        %1962 = vmatprep.subr.mxu0 0.0
        %1963 = vmatpush2.xpose.msra.mxu0 0.0
        %1964 = vmatprep.subr.mxu0 0.0
        %1965 = vmatpush2.xpose.msra.mxu0 0.0
        %1966 = vmatprep.subr.mxu0 0.0
        %1967 = vmatpush2.xpose.msra.mxu0 0.0
        %1968 = vmatprep.subr.mxu0 0.0
        %1969 = vmatpush2.xpose.msra.mxu0 0.0
        %1970 = vmatprep.subr.mxu0 0.0
        %1971 = vmatpush2.xpose.msra.mxu0 0.0
        %1972 = vmatprep.subr.mxu0 0.0
        %1973 = vmatpush2.xpose.msra.mxu0 0.0
        %1974 = vmatprep.mubr.f32.mxu0 0.0
        %1975 = vmatmul.mubr.f32.gmra.mxu0 %v1906
        %v1976 = vpop.f32.mrf.mxu0
        %v1977 = vadd.f32 %v383, %v1976
        %v1978 = vpop.f32.mrf.mxu0
        %1979 = vdwg.mxu0
        %1980 = vrot.lane.b32.xlu0 %v370, 104
        %v1981 = vpop.permute.xlu0 %1980
        %1982 = vrot.lane.b32.xlu0 %v370, 72
        %v1983 = vpop.permute.xlu0 %1982
        %v1984 = vsel %vm387, %v1981, 0
        %v1986 = vsel %vm387, %v1983, 0
        %1988 = vmatprep.subr.mxu0 0.0
        %1989 = vmatpush1.xpose.msra.mxu0 0.0
        %1990 = vmatprep.subr.mxu0 0.0
        %1991 = vmatpush1.xpose.msra.mxu0 0.0
        %1992 = vmatprep.subr.mxu0 0.0
        %1993 = vmatpush1.xpose.msra.mxu0 0.0
        %1994 = vmatprep.subr.mxu0 0.0
        %1995 = vmatpush1.xpose.msra.mxu0 0.0
        %1996 = vmatprep.subr.mxu0 0.0
        %1997 = vmatpush1.xpose.msra.mxu0 0.0
        %1998 = vmatprep.subr.mxu0 0.0
        %1999 = vmatpush1.xpose.msra.mxu0 0.0
        %2000 = vmatprep.subr.mxu0 0.0
        %2001 = vmatpush1.xpose.msra.mxu0 0.0
        %2002 = vmatprep.subr.mxu0 0.0
        %2003 = vmatpush1.xpose.msra.mxu0 0.0
        %2004 = vmatprep.subr.mxu0 0.0
        %2005 = vmatpush1.xpose.msra.mxu0 0.0
        %2006 = vmatprep.subr.mxu0 0.0
        %2007 = vmatpush1.xpose.msra.mxu0 0.0
        %2008 = vmatprep.subr.mxu0 0.0
        %2009 = vmatpush1.xpose.msra.mxu0 0.0
        %2010 = vmatprep.subr.mxu0 0.0
        %2011 = vmatpush1.xpose.msra.mxu0 0.0
        %2012 = vmatprep.subr.mxu0 0.0
        %2013 = vmatpush1.xpose.msra.mxu0 0.0
        %2014 = vmatprep.subr.mxu0 0.0
        %2015 = vmatpush1.xpose.msra.mxu0 0.0
        %2016 = vmatprep.subr.mxu0 0.0
        %2017 = vmatpush1.xpose.msra.mxu0 0.0
        %2018 = vmatprep.subr.mxu0 0.0
        %2019 = vmatpush1.xpose.msra.mxu0 %v1986
        %2020 = vmatprep.subr.mxu0 0.0
        %2021 = vmatpush2.xpose.msra.mxu0 0.0
        %2022 = vmatprep.subr.mxu0 0.0
        %2023 = vmatpush2.xpose.msra.mxu0 0.0
        %2024 = vmatprep.subr.mxu0 0.0
        %2025 = vmatpush2.xpose.msra.mxu0 0.0
        %2026 = vmatprep.subr.mxu0 0.0
        %2027 = vmatpush2.xpose.msra.mxu0 0.0
        %2028 = vmatprep.subr.mxu0 0.0
        %2029 = vmatpush2.xpose.msra.mxu0 0.0
        %2030 = vmatprep.subr.mxu0 0.0
        %2031 = vmatpush2.xpose.msra.mxu0 0.0
        %2032 = vmatprep.subr.mxu0 0.0
        %2033 = vmatpush2.xpose.msra.mxu0 0.0
        %2034 = vmatprep.subr.mxu0 0.0
        %2035 = vmatpush2.xpose.msra.mxu0 0.0
        %2036 = vmatprep.subr.mxu0 0.0
        %2037 = vmatpush2.xpose.msra.mxu0 0.0
        %2038 = vmatprep.subr.mxu0 0.0
        %2039 = vmatpush2.xpose.msra.mxu0 0.0
        %2040 = vmatprep.subr.mxu0 0.0
        %2041 = vmatpush2.xpose.msra.mxu0 0.0
        %2042 = vmatprep.subr.mxu0 0.0
        %2043 = vmatpush2.xpose.msra.mxu0 0.0
        %2044 = vmatprep.subr.mxu0 0.0
        %2045 = vmatpush2.xpose.msra.mxu0 0.0
        %2046 = vmatprep.subr.mxu0 0.0
        %2047 = vmatpush2.xpose.msra.mxu0 0.0
        %2048 = vmatprep.subr.mxu0 0.0
        %2049 = vmatpush2.xpose.msra.mxu0 0.0
        %2050 = vmatprep.subr.mxu0 0.0
        %2051 = vmatpush2.xpose.msra.mxu0 0.0
        %2052 = vmatprep.mubr.f32.mxu0 0.0
        %2053 = vmatmul.mubr.f32.gmra.mxu0 %v1984
        %v2054 = vpop.f32.mrf.mxu0
        %v2055 = vadd.f32 %v383, %v2054
        %v2056 = vpop.f32.mrf.mxu0
        %2057 = vdwg.mxu0
        %2058 = vrot.lane.b32.xlu0 %v375, 104
        %v2059 = vpop.permute.xlu0 %2058
        %2060 = vrot.lane.b32.xlu0 %v375, 72
        %v2061 = vpop.permute.xlu0 %2060
        %v2062 = vsel %vm387, %v2059, 0
        %v2064 = vsel %vm387, %v2061, 0
        %2066 = vmatprep.subr.mxu0 0.0
        %2067 = vmatpush1.xpose.msra.mxu0 0.0
        %2068 = vmatprep.subr.mxu0 0.0
        %2069 = vmatpush1.xpose.msra.mxu0 0.0
        %2070 = vmatprep.subr.mxu0 0.0
        %2071 = vmatpush1.xpose.msra.mxu0 0.0
        %2072 = vmatprep.subr.mxu0 0.0
        %2073 = vmatpush1.xpose.msra.mxu0 0.0
        %2074 = vmatprep.subr.mxu0 0.0
        %2075 = vmatpush1.xpose.msra.mxu0 0.0
        %2076 = vmatprep.subr.mxu0 0.0
        %2077 = vmatpush1.xpose.msra.mxu0 0.0
        %2078 = vmatprep.subr.mxu0 0.0
        %2079 = vmatpush1.xpose.msra.mxu0 0.0
        %2080 = vmatprep.subr.mxu0 0.0
        %2081 = vmatpush1.xpose.msra.mxu0 0.0
        %2082 = vmatprep.subr.mxu0 0.0
        %2083 = vmatpush1.xpose.msra.mxu0 0.0
        %2084 = vmatprep.subr.mxu0 0.0
        %2085 = vmatpush1.xpose.msra.mxu0 0.0
        %2086 = vmatprep.subr.mxu0 0.0
        %2087 = vmatpush1.xpose.msra.mxu0 0.0
        %2088 = vmatprep.subr.mxu0 0.0
        %2089 = vmatpush1.xpose.msra.mxu0 0.0
        %2090 = vmatprep.subr.mxu0 0.0
        %2091 = vmatpush1.xpose.msra.mxu0 0.0
        %2092 = vmatprep.subr.mxu0 0.0
        %2093 = vmatpush1.xpose.msra.mxu0 0.0
        %2094 = vmatprep.subr.mxu0 0.0
        %2095 = vmatpush1.xpose.msra.mxu0 0.0
        %2096 = vmatprep.subr.mxu0 0.0
        %2097 = vmatpush1.xpose.msra.mxu0 %v2064
        %2098 = vmatprep.subr.mxu0 0.0
        %2099 = vmatpush2.xpose.msra.mxu0 0.0
        %2100 = vmatprep.subr.mxu0 0.0
        %2101 = vmatpush2.xpose.msra.mxu0 0.0
        %2102 = vmatprep.subr.mxu0 0.0
        %2103 = vmatpush2.xpose.msra.mxu0 0.0
        %2104 = vmatprep.subr.mxu0 0.0
        %2105 = vmatpush2.xpose.msra.mxu0 0.0
        %2106 = vmatprep.subr.mxu0 0.0
        %2107 = vmatpush2.xpose.msra.mxu0 0.0
        %2108 = vmatprep.subr.mxu0 0.0
        %2109 = vmatpush2.xpose.msra.mxu0 0.0
        %2110 = vmatprep.subr.mxu0 0.0
        %2111 = vmatpush2.xpose.msra.mxu0 0.0
        %2112 = vmatprep.subr.mxu0 0.0
        %2113 = vmatpush2.xpose.msra.mxu0 0.0
        %2114 = vmatprep.subr.mxu0 0.0
        %2115 = vmatpush2.xpose.msra.mxu0 0.0
        %2116 = vmatprep.subr.mxu0 0.0
        %2117 = vmatpush2.xpose.msra.mxu0 0.0
        %2118 = vmatprep.subr.mxu0 0.0
        %2119 = vmatpush2.xpose.msra.mxu0 0.0
        %2120 = vmatprep.subr.mxu0 0.0
        %2121 = vmatpush2.xpose.msra.mxu0 0.0
        %2122 = vmatprep.subr.mxu0 0.0
        %2123 = vmatpush2.xpose.msra.mxu0 0.0
        %2124 = vmatprep.subr.mxu0 0.0
        %2125 = vmatpush2.xpose.msra.mxu0 0.0
        %2126 = vmatprep.subr.mxu0 0.0
        %2127 = vmatpush2.xpose.msra.mxu0 0.0
        %2128 = vmatprep.subr.mxu0 0.0
        %2129 = vmatpush2.xpose.msra.mxu0 0.0
        %2130 = vmatprep.mubr.f32.mxu0 0.0
        %2131 = vmatmul.mubr.f32.gmra.mxu0 %v2062
        %v2132 = vpop.f32.mrf.mxu0
        %v2133 = vadd.f32 %v383, %v2132
        %v2134 = vpop.f32.mrf.mxu0
        %2135 = vdwg.mxu0
        %v2136 = vsel %vm387, %v1977, -inf
        %2137 = vmax.xlane.f32.xlu0 %v2136
        %v2138 = vpop.xlane.xlu0 %2137
        %v2139 = vsel %vm387, %v2055, -inf
        %2140 = vmax.xlane.f32.xlu0 %v2139
        %v2141 = vpop.xlane.xlu0 %2140
        %v2142 = vsel %vm387, %v2133, -inf
        %2143 = vmax.xlane.f32.xlu0 %v2142
        %v2144 = vpop.xlane.xlu0 %2143
        %v2145 = vsub.f32 %v1977, %v2138
        %v2146 = vsub.f32 %v2055, %v2141
        %v2147 = vsub.f32 %v2133, %v2144
        %v2148 = vmul.f32 %v2145, 1.442695
        %v2149 = vpow.pop %v2148
        %v2150 = vmul.f32 %v2146, 1.442695
        %v2151 = vpow.pop %v2150
        %v2152 = vmul.f32 %v2147, 1.442695
        %v2153 = vpow.pop %v2152
        %v2154 = vsel %vm387, %v2149, 0.0
        %2155 = vadd.xlane.f32.xlu0 %v2154
        %v2156 = vpop.xlane.xlu0 %2155
        %v2157 = vsel %vm387, %v2151, 0.0
        %2158 = vadd.xlane.f32.xlu0 %v2157
        %v2159 = vpop.xlane.xlu0 %2158
        %v2160 = vsel %vm387, %v2153, 0.0
        %2161 = vadd.xlane.f32.xlu0 %v2160
        %v2162 = vpop.xlane.xlu0 %2161
        %2163 = vrot.lane.b32.xlu0 %v365, 40
        %v2164 = vpop.permute.xlu0 %2163
        %v2167 = vsel %vm387, %v2149, 0
        %2169 = vmatprep.subr.mxu0 0.0
        %2170 = vmatpush1.msra.mxu0 0.0
        %2171 = vmatprep.subr.mxu0 0.0
        %2172 = vmatpush1.msra.mxu0 0.0
        %2173 = vmatprep.subr.mxu0 0.0
        %2174 = vmatpush1.msra.mxu0 0.0
        %2175 = vmatprep.subr.mxu0 0.0
        %2176 = vmatpush1.msra.mxu0 0.0
        %2177 = vmatprep.subr.mxu0 0.0
        %2178 = vmatpush1.msra.mxu0 0.0
        %2179 = vmatprep.subr.mxu0 0.0
        %2180 = vmatpush1.msra.mxu0 0.0
        %2181 = vmatprep.subr.mxu0 0.0
        %2182 = vmatpush1.msra.mxu0 0.0
        %2183 = vmatprep.subr.mxu0 0.0
        %2184 = vmatpush1.msra.mxu0 0.0
        %2185 = vmatprep.subr.mxu0 0.0
        %2186 = vmatpush1.msra.mxu0 0.0
        %2187 = vmatprep.subr.mxu0 0.0
        %2188 = vmatpush1.msra.mxu0 0.0
        %2189 = vmatprep.subr.mxu0 0.0
        %2190 = vmatpush1.msra.mxu0 0.0
        %2191 = vmatprep.subr.mxu0 0.0
        %2192 = vmatpush1.msra.mxu0 0.0
        %2193 = vmatprep.subr.mxu0 0.0
        %2194 = vmatpush1.msra.mxu0 0.0
        %2195 = vmatprep.subr.mxu0 0.0
        %2196 = vmatpush1.msra.mxu0 0.0
        %2197 = vmatprep.subr.mxu0 0.0
        %2198 = vmatpush1.msra.mxu0 0.0
        %2199 = vmatprep.subr.mxu0 0.0
        %2200 = vmatpush1.msra.mxu0 %v2164
        %2201 = vmatprep.subr.mxu0 0.0
        %2202 = vmatpush2.msra.mxu0 0.0
        %2203 = vmatprep.subr.mxu0 0.0
        %2204 = vmatpush2.msra.mxu0 0.0
        %2205 = vmatprep.subr.mxu0 0.0
        %2206 = vmatpush2.msra.mxu0 0.0
        %2207 = vmatprep.subr.mxu0 0.0
        %2208 = vmatpush2.msra.mxu0 0.0
        %2209 = vmatprep.subr.mxu0 0.0
        %2210 = vmatpush2.msra.mxu0 0.0
        %2211 = vmatprep.subr.mxu0 0.0
        %2212 = vmatpush2.msra.mxu0 0.0
        %2213 = vmatprep.subr.mxu0 0.0
        %2214 = vmatpush2.msra.mxu0 0.0
        %2215 = vmatprep.subr.mxu0 0.0
        %2216 = vmatpush2.msra.mxu0 0.0
        %2217 = vmatprep.subr.mxu0 0.0
        %2218 = vmatpush2.msra.mxu0 0.0
        %2219 = vmatprep.subr.mxu0 0.0
        %2220 = vmatpush2.msra.mxu0 0.0
        %2221 = vmatprep.subr.mxu0 0.0
        %2222 = vmatpush2.msra.mxu0 0.0
        %2223 = vmatprep.subr.mxu0 0.0
        %2224 = vmatpush2.msra.mxu0 0.0
        %2225 = vmatprep.subr.mxu0 0.0
        %2226 = vmatpush2.msra.mxu0 0.0
        %2227 = vmatprep.subr.mxu0 0.0
        %2228 = vmatpush2.msra.mxu0 0.0
        %2229 = vmatprep.subr.mxu0 0.0
        %2230 = vmatpush2.msra.mxu0 0.0
        %2231 = vmatprep.subr.mxu0 0.0
        %2232 = vmatpush2.msra.mxu0 0.0
        %2233 = vmatprep.mubr.f32.mxu0 0.0
        %2234 = vmatmul.mubr.f32.gmra.mxu0 %v2167
        %v2235 = vpop.f32.mrf.mxu0
        %v2236 = vadd.f32 0.0, %v2235
        %v2237 = vpop.f32.mrf.mxu0
        %2238 = vdwg.mxu0
        %2239 = vrot.lane.b32.xlu0 %v370, 40
        %v2240 = vpop.permute.xlu0 %2239
        %v2243 = vsel %vm387, %v2151, 0
        %2245 = vmatprep.subr.mxu0 0.0
        %2246 = vmatpush1.msra.mxu0 0.0
        %2247 = vmatprep.subr.mxu0 0.0
        %2248 = vmatpush1.msra.mxu0 0.0
        %2249 = vmatprep.subr.mxu0 0.0
        %2250 = vmatpush1.msra.mxu0 0.0
        %2251 = vmatprep.subr.mxu0 0.0
        %2252 = vmatpush1.msra.mxu0 0.0
        %2253 = vmatprep.subr.mxu0 0.0
        %2254 = vmatpush1.msra.mxu0 0.0
        %2255 = vmatprep.subr.mxu0 0.0
        %2256 = vmatpush1.msra.mxu0 0.0
        %2257 = vmatprep.subr.mxu0 0.0
        %2258 = vmatpush1.msra.mxu0 0.0
        %2259 = vmatprep.subr.mxu0 0.0
        %2260 = vmatpush1.msra.mxu0 0.0
        %2261 = vmatprep.subr.mxu0 0.0
        %2262 = vmatpush1.msra.mxu0 0.0
        %2263 = vmatprep.subr.mxu0 0.0
        %2264 = vmatpush1.msra.mxu0 0.0
        %2265 = vmatprep.subr.mxu0 0.0
        %2266 = vmatpush1.msra.mxu0 0.0
        %2267 = vmatprep.subr.mxu0 0.0
        %2268 = vmatpush1.msra.mxu0 0.0
        %2269 = vmatprep.subr.mxu0 0.0
        %2270 = vmatpush1.msra.mxu0 0.0
        %2271 = vmatprep.subr.mxu0 0.0
        %2272 = vmatpush1.msra.mxu0 0.0
        %2273 = vmatprep.subr.mxu0 0.0
        %2274 = vmatpush1.msra.mxu0 0.0
        %2275 = vmatprep.subr.mxu0 0.0
        %2276 = vmatpush1.msra.mxu0 %v2240
        %2277 = vmatprep.subr.mxu0 0.0
        %2278 = vmatpush2.msra.mxu0 0.0
        %2279 = vmatprep.subr.mxu0 0.0
        %2280 = vmatpush2.msra.mxu0 0.0
        %2281 = vmatprep.subr.mxu0 0.0
        %2282 = vmatpush2.msra.mxu0 0.0
        %2283 = vmatprep.subr.mxu0 0.0
        %2284 = vmatpush2.msra.mxu0 0.0
        %2285 = vmatprep.subr.mxu0 0.0
        %2286 = vmatpush2.msra.mxu0 0.0
        %2287 = vmatprep.subr.mxu0 0.0
        %2288 = vmatpush2.msra.mxu0 0.0
        %2289 = vmatprep.subr.mxu0 0.0
        %2290 = vmatpush2.msra.mxu0 0.0
        %2291 = vmatprep.subr.mxu0 0.0
        %2292 = vmatpush2.msra.mxu0 0.0
        %2293 = vmatprep.subr.mxu0 0.0
        %2294 = vmatpush2.msra.mxu0 0.0
        %2295 = vmatprep.subr.mxu0 0.0
        %2296 = vmatpush2.msra.mxu0 0.0
        %2297 = vmatprep.subr.mxu0 0.0
        %2298 = vmatpush2.msra.mxu0 0.0
        %2299 = vmatprep.subr.mxu0 0.0
        %2300 = vmatpush2.msra.mxu0 0.0
        %2301 = vmatprep.subr.mxu0 0.0
        %2302 = vmatpush2.msra.mxu0 0.0
        %2303 = vmatprep.subr.mxu0 0.0
        %2304 = vmatpush2.msra.mxu0 0.0
        %2305 = vmatprep.subr.mxu0 0.0
        %2306 = vmatpush2.msra.mxu0 0.0
        %2307 = vmatprep.subr.mxu0 0.0
        %2308 = vmatpush2.msra.mxu0 0.0
        %2309 = vmatprep.mubr.f32.mxu0 0.0
        %2310 = vmatmul.mubr.f32.gmra.mxu0 %v2243
        %v2311 = vpop.f32.mrf.mxu0
        %v2312 = vadd.f32 0.0, %v2311
        %v2313 = vpop.f32.mrf.mxu0
        %2314 = vdwg.mxu0
        %2315 = vrot.lane.b32.xlu0 %v375, 40
        %v2316 = vpop.permute.xlu0 %2315
        %v2319 = vsel %vm387, %v2153, 0
        %2321 = vmatprep.subr.mxu0 0.0
        %2322 = vmatpush1.msra.mxu0 0.0
        %2323 = vmatprep.subr.mxu0 0.0
        %2324 = vmatpush1.msra.mxu0 0.0
        %2325 = vmatprep.subr.mxu0 0.0
        %2326 = vmatpush1.msra.mxu0 0.0
        %2327 = vmatprep.subr.mxu0 0.0
        %2328 = vmatpush1.msra.mxu0 0.0
        %2329 = vmatprep.subr.mxu0 0.0
        %2330 = vmatpush1.msra.mxu0 0.0
        %2331 = vmatprep.subr.mxu0 0.0
        %2332 = vmatpush1.msra.mxu0 0.0
        %2333 = vmatprep.subr.mxu0 0.0
        %2334 = vmatpush1.msra.mxu0 0.0
        %2335 = vmatprep.subr.mxu0 0.0
        %2336 = vmatpush1.msra.mxu0 0.0
        %2337 = vmatprep.subr.mxu0 0.0
        %2338 = vmatpush1.msra.mxu0 0.0
        %2339 = vmatprep.subr.mxu0 0.0
        %2340 = vmatpush1.msra.mxu0 0.0
        %2341 = vmatprep.subr.mxu0 0.0
        %2342 = vmatpush1.msra.mxu0 0.0
        %2343 = vmatprep.subr.mxu0 0.0
        %2344 = vmatpush1.msra.mxu0 0.0
        %2345 = vmatprep.subr.mxu0 0.0
        %2346 = vmatpush1.msra.mxu0 0.0
        %2347 = vmatprep.subr.mxu0 0.0
        %2348 = vmatpush1.msra.mxu0 0.0
        %2349 = vmatprep.subr.mxu0 0.0
        %2350 = vmatpush1.msra.mxu0 0.0
        %2351 = vmatprep.subr.mxu0 0.0
        %2352 = vmatpush1.msra.mxu0 %v2316
        %2353 = vmatprep.subr.mxu0 0.0
        %2354 = vmatpush2.msra.mxu0 0.0
        %2355 = vmatprep.subr.mxu0 0.0
        %2356 = vmatpush2.msra.mxu0 0.0
        %2357 = vmatprep.subr.mxu0 0.0
        %2358 = vmatpush2.msra.mxu0 0.0
        %2359 = vmatprep.subr.mxu0 0.0
        %2360 = vmatpush2.msra.mxu0 0.0
        %2361 = vmatprep.subr.mxu0 0.0
        %2362 = vmatpush2.msra.mxu0 0.0
        %2363 = vmatprep.subr.mxu0 0.0
        %2364 = vmatpush2.msra.mxu0 0.0
        %2365 = vmatprep.subr.mxu0 0.0
        %2366 = vmatpush2.msra.mxu0 0.0
        %2367 = vmatprep.subr.mxu0 0.0
        %2368 = vmatpush2.msra.mxu0 0.0
        %2369 = vmatprep.subr.mxu0 0.0
        %2370 = vmatpush2.msra.mxu0 0.0
        %2371 = vmatprep.subr.mxu0 0.0
        %2372 = vmatpush2.msra.mxu0 0.0
        %2373 = vmatprep.subr.mxu0 0.0
        %2374 = vmatpush2.msra.mxu0 0.0
        %2375 = vmatprep.subr.mxu0 0.0
        %2376 = vmatpush2.msra.mxu0 0.0
        %2377 = vmatprep.subr.mxu0 0.0
        %2378 = vmatpush2.msra.mxu0 0.0
        %2379 = vmatprep.subr.mxu0 0.0
        %2380 = vmatpush2.msra.mxu0 0.0
        %2381 = vmatprep.subr.mxu0 0.0
        %2382 = vmatpush2.msra.mxu0 0.0
        %2383 = vmatprep.subr.mxu0 0.0
        %2384 = vmatpush2.msra.mxu0 0.0
        %2385 = vmatprep.mubr.f32.mxu0 0.0
        %2386 = vmatmul.mubr.f32.gmra.mxu0 %v2319
        %v2387 = vpop.f32.mrf.mxu0
        %v2388 = vadd.f32 0.0, %v2387
        %v2389 = vpop.f32.mrf.mxu0
        %2390 = vdwg.mxu0
        %v2391 = vrcp.pop %v2156
        %v2392 = vrcp.pop %v2159
        %v2393 = vrcp.pop %v2162
        %v2394 = vmul.f32 %v2236, %v2391
        %v2395 = vmul.f32 %v2312, %v2392
        %v2396 = vmul.f32 %v2388, %v2393
        %2400 = vrot.lane.b32.xlu0 %v2394, 24
        %v2401 = vpop.permute.xlu0 %2400
        %2402 = vrot.lane.b32.xlu0 %v2395, 24
        %v2403 = vpop.permute.xlu0 %2402
        %2404 = vrot.lane.b32.xlu0 %v2396, 24
        %v2405 = vpop.permute.xlu0 %2404
        %vm2409 = vcmask 261312
        %2410 = vst.msk [vmem:[#allocation2] sm:$0xff] %vm2409, %v2401
        %2411 = vst.msk [vmem:[#allocation2 + $0x8] sm:$0xff] %vm2409, %v2403
        %2412 = vst.msk [vmem:[#allocation2 + $0x10] sm:$0xff] %vm2409, %v2405
        %v2413 = vld [vmem:[#allocation2] sm:$0xff]
        %v2414 = vld [vmem:[#allocation2 + $0x8] sm:$0xff]
        %v2415 = vld [vmem:[#allocation2 + $0x10] sm:$0xff]
        %v2416 = vld [vmem:[#allocation8] sm:$0xff]
        %v2417 = vld [vmem:[#allocation8 + $0x8] sm:$0xff]
        %v2418 = vld [vmem:[#allocation8 + $0x10] sm:$0xff]
        %v2419 = vld [vmem:[#allocation8 + $0x18] sm:$0xff]
        %v2420 = vld [vmem:[%s4] sm:$0x1]
        %v2422 = vlaneseq
        %v2423 = vshrl.u32 %v2422, 7
        %v2424 = vsub.s32 0, %v2423
        %v2425 = vrot.slane %v2420, %v2424
        %v2428 = vsel %vm288, %v2413, 0
        %v2431 = vsel %vm288, %v2414, 0
        %v2434 = vsel %vm288, %v2415, 0
        %2436 = vmatprep.subr.mxu0 0.0
        %2437 = vmatpush1.msra.mxu0 0.0
        %2438 = vmatprep.subr.mxu0 0.0
        %2439 = vmatpush1.msra.mxu0 0.0
        %2440 = vmatprep.subr.mxu0 0.0
        %2441 = vmatpush1.msra.mxu0 0.0
        %2442 = vmatprep.subr.mxu0 0.0
        %2443 = vmatpush1.msra.mxu0 0.0
        %2444 = vmatprep.subr.mxu0 0.0
        %2445 = vmatpush1.msra.mxu0 0.0
        %2446 = vmatprep.subr.mxu0 0.0
        %2447 = vmatpush1.msra.mxu0 0.0
        %2448 = vmatprep.subr.mxu0 0.0
        %2449 = vmatpush1.msra.mxu0 0.0
        %2450 = vmatprep.subr.mxu0 0.0
        %2451 = vmatpush1.msra.mxu0 0.0
        %2452 = vmatprep.subr.mxu0 0.0
        %2453 = vmatpush1.msra.mxu0 0.0
        %2454 = vmatprep.subr.mxu0 0.0
        %2455 = vmatpush1.msra.mxu0 0.0
        %2456 = vmatprep.subr.mxu0 0.0
        %2457 = vmatpush1.msra.mxu0 0.0
        %2458 = vmatprep.subr.mxu0 0.0
        %2459 = vmatpush1.msra.mxu0 0.0
        %2460 = vmatprep.subr.mxu0 0.0
        %2461 = vmatpush1.msra.mxu0 %v2419
        %2462 = vmatprep.subr.mxu0 0.0
        %2463 = vmatpush1.msra.mxu0 %v2418
        %2464 = vmatprep.subr.mxu0 0.0
        %2465 = vmatpush1.msra.mxu0 %v2417
        %2466 = vmatprep.subr.mxu0 0.0
        %2467 = vmatpush1.msra.mxu0 %v2416
        %2468 = vmatprep.subr.mxu0 0.0
        %2469 = vmatpush2.msra.mxu0 0.0
        %2470 = vmatprep.subr.mxu0 0.0
        %2471 = vmatpush2.msra.mxu0 0.0
        %2472 = vmatprep.subr.mxu0 0.0
        %2473 = vmatpush2.msra.mxu0 0.0
        %2474 = vmatprep.subr.mxu0 0.0
        %2475 = vmatpush2.msra.mxu0 0.0
        %2476 = vmatprep.subr.mxu0 0.0
        %2477 = vmatpush2.msra.mxu0 0.0
        %2478 = vmatprep.subr.mxu0 0.0
        %2479 = vmatpush2.msra.mxu0 0.0
        %2480 = vmatprep.subr.mxu0 0.0
        %2481 = vmatpush2.msra.mxu0 0.0
        %2482 = vmatprep.subr.mxu0 0.0
        %2483 = vmatpush2.msra.mxu0 0.0
        %2484 = vmatprep.subr.mxu0 0.0
        %2485 = vmatpush2.msra.mxu0 0.0
        %2486 = vmatprep.subr.mxu0 0.0
        %2487 = vmatpush2.msra.mxu0 0.0
        %2488 = vmatprep.subr.mxu0 0.0
        %2489 = vmatpush2.msra.mxu0 0.0
        %2490 = vmatprep.subr.mxu0 0.0
        %2491 = vmatpush2.msra.mxu0 0.0
        %2492 = vmatprep.subr.mxu0 0.0
        %2493 = vmatpush2.msra.mxu0 0.0
        %2494 = vmatprep.subr.mxu0 0.0
        %2495 = vmatpush2.msra.mxu0 0.0
        %2496 = vmatprep.subr.mxu0 0.0
        %2497 = vmatpush2.msra.mxu0 0.0
        %2498 = vmatprep.subr.mxu0 0.0
        %2499 = vmatpush2.msra.mxu0 0.0
        %2500 = vmatprep.mubr.f32.mxu0 0.0
        %2501 = vmatmul.mubr.f32.gmra.mxu0 %v2428
        %v2502 = vpop.f32.mrf.mxu0
        %v2503 = vadd.f32 %v2425, %v2502
        %v2504 = vpop.f32.mrf.mxu0
        %2505 = vmatprep.mubr.f32.mxu0 0.0
        %2506 = vmatmul.mubr.f32.gmra.mxu0 %v2431
        %v2507 = vpop.f32.mrf.mxu0
        %v2508 = vadd.f32 %v2425, %v2507
        %v2509 = vpop.f32.mrf.mxu0
        %2510 = vmatprep.mubr.f32.mxu0 0.0
        %2511 = vmatmul.mubr.f32.gmra.mxu0 %v2434
        %v2512 = vpop.f32.mrf.mxu0
        %v2513 = vadd.f32 %v2425, %v2512
        %v2514 = vpop.f32.mrf.mxu0
        %2515 = vdwg.mxu0
        %2516 = vst.msk [vmem:[%s271] sm:$0xff] %vm288, %v2503
        %2517 = vst.msk [vmem:[%s271 + $0x8] sm:$0xff] %vm288, %v2508
        %2518 = vst.msk [vmem:[%s271 + $0x10] sm:$0xff] %vm288, %v2513
        %s2519 = sand.u32 %s141, 1
        %s2520 = scalar_lea.sflag [#allocation5], %s2519
        %s2521 = sand.u32 %s141, 1
        %s2522 = smul.addr %s2521, 24
        %s2523 = scalar_lea.vmem [#allocation9], %s2522
        // Predicated region
        $region53: #{tpu_custom_call.1} parent=39 // pred_check
          %p2524 = pneg %p151
        $region54: #{tpu_custom_call.1} parent=39 // pred_check_branch
          %2526 = sbr.rel (%p2524) target = $region56
        $region55: #{tpu_custom_call.1} parent=39 // pred_region
          %s2527 = smul.u32 3, %s23
          %s2529 = ssub.s32 384, 384
          %2530 = vsyncadd %s2520, %s2529
          %s2531 = smul.addr %s2527, 128
          %s2532 = scalar_lea.hbm %s5, %s2531
          %s2533 = sshll.u32 %s2523, 4
          %s2534 = int_to_ptr.vmem [resolvable:$true] %s2533
          %2539 = dma.vmem_to_hbm [thread:$0]  %s2534, 384, %s2532, %s2520, 128, 128, 8
        $region56: #{tpu_custom_call.1} parent=39 // pred_fallthru
          _
      $region40: #{tpu_custom_call.1} parent=5 // pred_fallthru
        _
      %p2540 = scmp.le.s32.totalorder 2, %s18
      // Predicated region
      $region57: #{tpu_custom_call.1} parent=5 // pred_check
        %p2541 = pneg %p2540
      $region58: #{tpu_custom_call.1} parent=5 // pred_check_branch
        %2543 = sbr.rel (%p2541) target = $region60
      $region59: #{tpu_custom_call.1} parent=5 // pred_region
        %s2544 = ssub.s32 %s18, 2
        // Predicated region
        $region61: #{tpu_custom_call.1} parent=59 // pred_check
          %p2545 = pneg %p157
        $region62: #{tpu_custom_call.1} parent=59 // pred_check_branch
          %2547 = sbr.rel (%p2545) target = $region64
        $region63: #{tpu_custom_call.1} parent=59 // pred_region
          %s2548 = sand.u32 %s142, 1
          %s2549 = scalar_lea.sflag [#allocation5], %s2548
          %s2550 = sand.u32 %s142, 1
          %s2551 = smul.addr %s2550, 24
          %s2552 = scalar_lea.vmem [#allocation9], %s2551
          %2553 = dma.done %s2549, 384
        $region64: #{tpu_custom_call.1} parent=59 // pred_fallthru
          _
      $region60: #{tpu_custom_call.1} parent=5 // pred_fallthru
        _
    $region6: #{tpu_custom_call.1} parent=1 // loop_footer
      %s22 = sadd.s32 1, %s18
    $region7: #{tpu_custom_call.1} parent=1 // loop_footer_branch
      %17 = sbr.rel target = $region3
    $region8: #{tpu_custom_call.1} parent=1 // loop_exit
      _
    %2554 = vsyncpa [#allocation4], 1
    %s2555 = scalar_lea.sflag [#allocation4], 1
    %2556 = vsyncpa %s2555, 1
    %2557 = vsyncpa [#allocation7], 1
    %2558 = vsyncpa [#allocation5], 1
    %s2559 = scalar_lea.sflag [#allocation5], 1
    %2560 = vsyncpa %s2559, 1

</llo_original>
